<compile_context>
chip_gen: v5e
topology: v5e:2x2
jax: 0.10.0
libtpu: 0.0.40
codegen_flags: <defaults>
</compile_context>

<pallas_src>
import functools

import jax
import jax.numpy as jnp
from jax import lax
from jax.experimental import pallas as pl
from jax.experimental.pallas import tpu as pltpu

LANE = 128          # padded output-channel / feature width (lane-dense)
C1P = 16            # conv1 output channels padded 10 -> 16
K1 = 25             # conv1 im2col depth (5*5*1)
K2 = 256            # conv2 im2col depth padded 250 -> 256
R2 = 16             # pooled spatial positions after conv2 (4*4)
NUM_CLASSES = 10


@functools.lru_cache(maxsize=None)
def _vmem_budget_bytes():
    """Generation-aware VMEM budget (v5e/v6e: 128 MiB physical, v7x: 64 MiB)."""
    try:
        cap = int(pltpu.get_tpu_info().vmem_capacity_bytes)
    except Exception:
        cap = 64 * 1024 * 1024              # conservative default (v7x physical)
    return min((cap * 3) // 4, 96 * 1024 * 1024)


# -----------------------------------------------------------------------------
# Kernel 1: conv1 (im2col matmul) + bias + 2x2 max-pool + relu, 16-lane output.
#   p_ref: (4, TN, 25) bf16   w_ref: (25, 16) bf16   b_ref: (1, 16) f32
#   o_ref: (TN, 16) bf16
# relu(maxpool(conv(x)+b)) == relu(max_q(p_q @ W) + b)  (bias const over window,
# relu/max monotone).  Running max over quadrants keeps the f32 live set small.
# -----------------------------------------------------------------------------
def conv1_pool_relu_kernel(p_ref, w_ref, b_ref, o_ref):
    w = w_ref[...]
    acc = jnp.dot(p_ref[0], w, preferred_element_type=jnp.float32)
    for q in range(1, p_ref.shape[0]):
        acc = jnp.maximum(acc, jnp.dot(p_ref[q], w, preferred_element_type=jnp.float32))
    o_ref[...] = jnp.maximum(acc + b_ref[...], 0.0).astype(o_ref.dtype)


def conv1_pool_relu(patches, w_pad, b_pad, rows_per_image, batch):
    q, n, k = patches.shape
    cout = w_pad.shape[1]
    budget = _vmem_budget_bytes()
    # whole images per block; bigger tiles where VMEM allows (rows_per_image=144,
    # a multiple of 16, so TN stays bf16-sublane aligned); clamp to the batch.
    imgs_per_blk = min(batch, 112 if budget >= (80 << 20) else 56)
    tn = imgs_per_blk * rows_per_image
    grid = (pl.cdiv(n, tn),)
    cost = pl.CostEstimate(
        flops=2 * q * n * k * cout,
        transcendentals=0,
        bytes_accessed=patches.size * 2 + w_pad.size * 2 + b_pad.size * 4 + n * cout * 2)
    return pl.pallas_call(
        conv1_pool_relu_kernel,
        out_shape=jax.ShapeDtypeStruct((n, cout), jnp.bfloat16),
        grid_spec=pltpu.PrefetchScalarGridSpec(
            num_scalar_prefetch=0,
            grid=grid,
            in_specs=[
                pl.BlockSpec((q, tn, k), lambda i: (0, i, 0)),
                pl.BlockSpec((k, cout), lambda i: (0, 0)),   # VMEM-resident weights
                pl.BlockSpec((1, cout), lambda i: (0, 0)),
            ],
            out_specs=pl.BlockSpec((tn, cout), lambda i: (i, 0)),
        ),
        compiler_params=pltpu.CompilerParams(
            dimension_semantics=("parallel",),
            vmem_limit_bytes=budget,
        ),
        cost_estimate=cost,
    )(patches, w_pad, b_pad)


# -----------------------------------------------------------------------------
# Kernel 2: FUSED conv2 + bias + 2x2 max-pool + relu + fc1 + relu + fc2 + relu
#           + masked log_softmax.
#   p_ref : (4, 16, TB, 256) bf16  -- quadrant, pooled position r=h*4+w, image, K
#   wc_ref: (256, 128) bf16, bc_ref: (1, 128) f32      (conv2, K & Cout padded)
#   w1_ref: (16, 128, 128) bf16, b1_ref: (1, 128) f32  (fc1 repacked per position)
#   w2_ref: (128, 128) bf16, b2_ref: (1, 128) f32      (fc2 padded)
#   o_ref : (TB, 128) f32                              (lane-dense log-probs)
# -----------------------------------------------------------------------------
def conv2_mlp_kernel(p_ref, wc_ref, bc_ref, w1_ref, b1_ref, w2_ref, b2_ref, o_ref):
    q, r, tb, k = p_ref.shape
    n = r * tb
    wc = wc_ref[...]
    # conv2: one matmul per pool quadrant, folded into a running max (weight-stationary)
    acc = jnp.dot(p_ref[0].reshape(n, k), wc, preferred_element_type=jnp.float32)
    for qq in range(1, q):
        acc = jnp.maximum(acc, jnp.dot(p_ref[qq].reshape(n, k), wc,
                                       preferred_element_type=jnp.float32))
    y2 = jnp.maximum(acc + bc_ref[...], 0.0).astype(jnp.bfloat16)      # (16*TB, 128)
    # fc1: flatten is free -- one (TB,128)@(128,128) dot per pooled position, accumulated
    h = jnp.dot(y2[0:tb], w1_ref[0], preferred_element_type=jnp.float32)
    for rr in range(1, r):
        h = h + jnp.dot(y2[rr * tb:(rr + 1) * tb], w1_ref[rr],
                        preferred_element_type=jnp.float32)
    h = jnp.maximum(h + b1_ref[...], 0.0).astype(jnp.bfloat16)         # (TB, 128)
    # fc2 + relu + masked log_softmax (padded logit lanes forced to -1e30)
    y = jnp.dot(h, w2_ref[...], preferred_element_type=jnp.float32)
    y = jnp.maximum(y + b2_ref[...], 0.0)
    col = lax.broadcasted_iota(jnp.int32, y.shape, 1)
    y = jnp.where(col < NUM_CLASSES, y, -1e30)
    m = jnp.max(y, axis=-1, keepdims=True)
    z = y - m
    lse = jnp.log(jnp.sum(jnp.exp(z), axis=-1, keepdims=True))
    o_ref[...] = z - lse


def conv2_mlp(p2, wc, bc, w1, b1, w2, b2):
    q, r, bp, k = p2.shape                      # bp is the padded batch (multiple of 16)
    budget = _vmem_budget_bytes()
    tb = min(bp, 512 if budget >= (80 << 20) else 256)   # images per block
    grid = (pl.cdiv(bp, tb),)
    cost = pl.CostEstimate(
        flops=2 * bp * (q * r * k * LANE + r * LANE * LANE + LANE * LANE),
        transcendentals=bp * (LANE + 1),
        bytes_accessed=(p2.size * 2 + wc.size * 2 + w1.size * 2 + w2.size * 2
                        + (bc.size + b1.size + b2.size) * 4 + bp * LANE * 4))
    return pl.pallas_call(
        conv2_mlp_kernel,
        out_shape=jax.ShapeDtypeStruct((bp, LANE), jnp.float32),
        grid_spec=pltpu.PrefetchScalarGridSpec(
            num_scalar_prefetch=0,
            grid=grid,
            in_specs=[
                pl.BlockSpec((q, r, tb, k), lambda i: (0, 0, i, 0)),
                pl.BlockSpec((k, LANE), lambda i: (0, 0)),          # conv2 weights
                pl.BlockSpec((1, LANE), lambda i: (0, 0)),
                pl.BlockSpec((r, LANE, LANE), lambda i: (0, 0, 0)),  # fc1 (~0.5 MiB)
                pl.BlockSpec((1, LANE), lambda i: (0, 0)),
                pl.BlockSpec((LANE, LANE), lambda i: (0, 0)),        # fc2
                pl.BlockSpec((1, LANE), lambda i: (0, 0)),
            ],
            out_specs=pl.BlockSpec((tb, LANE), lambda i: (i, 0)),
        ),
        compiler_params=pltpu.CompilerParams(
            dimension_semantics=("parallel",),   # v7x: consider CORE_PARALLEL once compute-bound
            vmem_limit_bytes=budget,
        ),
        cost_estimate=cost,
    )(p2, wc, bc, w1, b1, w2, b2)


# -----------------------------------------------------------------------------
# Plain-JAX glue: im2col with 2x2-pool quadrant grouping (bf16 throughout).
# -----------------------------------------------------------------------------
def im2col_quadrants_s1(x_nhwc, k=5):
    """(B,28,28,1) bf16 -> (4, B*144, 25); quadrant q=2*di+dj, row=b*144+hp*12+wp,
    K ordering ki*5+kj (Cin=1) matching conv1_w.transpose(2,3,1,0).reshape(25,10)."""
    b, h, w, _ = x_nhwc.shape
    hc, wc = h - k + 1, w - k + 1
    cols = jnp.stack([x_nhwc[:, ki:ki + hc, kj:kj + wc, 0]
                      for ki in range(k) for kj in range(k)], axis=-1)   # (B,24,24,25)
    hp, wp = hc // 2, wc // 2
    quads = [cols[:, di::2, dj::2, :].reshape(b * hp * wp, k * k)
             for di in (0, 1) for dj in (0, 1)]
    return jnp.stack(quads, axis=0), (hp, wp)


def im2col_quadrants_s2(y1, k=5, cin=10):
    """(Bp,12,12,16) bf16 -> (4, 16, Bp, 256); live channels sliced to 10,
    K = (ki*5+kj)*10 + ci zero-padded 250 -> 256, pooled position r = hp*4+wp."""
    b, h, w, _ = y1.shape
    hc, wc = h - k + 1, w - k + 1
    cols = jnp.stack([y1[:, ki:ki + hc, kj:kj + wc, :cin]
                      for ki in range(k) for kj in range(k)], axis=3)    # (B,8,8,25,10)
    cols = cols.reshape(b, hc, wc, k * k * cin)
    cols = jnp.pad(cols, ((0, 0), (0, 0), (0, 0), (0, K2 - k * k * cin)))
    hp, wp = hc // 2, wc // 2
    quads = jnp.stack([cols[:, di::2, dj::2, :] for di in (0, 1) for dj in (0, 1)],
                      axis=0)                                            # (4,B,4,4,256)
    return quads.transpose(0, 2, 3, 1, 4).reshape(4, hp * wp, b, K2)


# -----------------------------------------------------------------------------
# Parameters (PyTorch-native layouts) + one-time repack for the kernels.
# -----------------------------------------------------------------------------
def init_params(key):
    ks = jax.random.split(key, 8)
    def rnd(k, shape, scale):
        return (scale * jax.random.normal(k, shape)).astype(jnp.float32)
    return {
        "conv1_w": rnd(ks[0], (10, 1, 5, 5), 0.2),   # (Cout, Cin, kh, kw)
        "conv1_b": rnd(ks[1], (10,), 0.1),
        "conv2_w": rnd(ks[2], (20, 10, 5, 5), 0.1),
        "conv2_b": rnd(ks[3], (20,), 0.1),
        "fc1_w": rnd(ks[4], (320, 50), 0.05),        # (in, out), NCHW-flat rows
        "fc1_b": rnd(ks[5], (50,), 0.05),
        "fc2_w": rnd(ks[6], (50, 10), 0.1),
        "fc2_b": rnd(ks[7], (10,), 0.05),
    }


def prepare_params(p):
    """One-time repack: channel-last K ordering, padded output dims, bf16 MXU
    operands, f32 biases."""
    def pad_bias(bvec, n):
        return jnp.pad(bvec, (0, n - bvec.shape[0])).reshape(1, n).astype(jnp.float32)

    # conv1: (10,1,5,5) -> (5,5,1,10) -> (25,10), Cout padded to 16
    w1 = p["conv1_w"].transpose(2, 3, 1, 0).reshape(K1, 10)
    w1 = jnp.pad(w1, ((0, 0), (0, C1P - 10)))
    # conv2: (20,10,5,5) -> (5,5,10,20) -> (250,20), K padded to 256, Cout to 128
    w2 = p["conv2_w"].transpose(2, 3, 1, 0).reshape(250, 20)
    w2 = jnp.pad(w2, ((0, K2 - 250), (0, LANE - 20)))
    # fc1 rows are NCHW-flat (c*16 + r); repack to (r, c, f) with c,f padded to 128
    fc1 = p["fc1_w"].reshape(20, R2, 50).transpose(1, 0, 2)              # (16,20,50)
    fc1 = jnp.pad(fc1, ((0, 0), (0, LANE - 20), (0, LANE - 50)))
    fc2 = jnp.pad(p["fc2_w"], ((0, LANE - 50), (0, LANE - 10)))

    return {
        "conv1_w": w1.astype(jnp.bfloat16), "conv1_b": pad_bias(p["conv1_b"], C1P),
        "conv2_w": w2.astype(jnp.bfloat16), "conv2_b": pad_bias(p["conv2_b"], LANE),
        "fc1_w": fc1.astype(jnp.bfloat16), "fc1_b": pad_bias(p["fc1_b"], LANE),
        "fc2_w": fc2.astype(jnp.bfloat16), "fc2_b": pad_bias(p["fc2_b"], LANE),
    }


# -----------------------------------------------------------------------------
# Full forward pass (inference / eval: both dropout layers are identity).
# -----------------------------------------------------------------------------
@jax.jit
def net_forward(x, pp):
    b = x.shape[0]
    x_nhwc = jnp.transpose(x, (0, 2, 3, 1)).astype(jnp.bfloat16)     # early bf16 cast

    # stage 1: conv1 + maxpool2 + relu, 16-lane output (no 128-lane writeback waste)
    p1, (h1, w1) = im2col_quadrants_s1(x_nhwc)                       # (4, B*144, 25)
    y1 = conv1_pool_relu(p1, pp["conv1_w"], pp["conv1_b"], h1 * w1, b)  # (B*144, 16)
    y1 = y1.reshape(b, h1, w1, C1P)

    # pad batch to a multiple of 16 so stage-2 tiles stay sublane/bf16-pack aligned
    bp = ((b + 15) // 16) * 16
    if bp != b:
        y1 = jnp.pad(y1, ((0, bp - b), (0, 0), (0, 0), (0, 0)))

    # stage 2 (fully fused): conv2 + dropout2d(identity) + maxpool2 + relu
    #   + flatten(free) + fc1 + relu + dropout(identity) + fc2 + relu + log_softmax
    p2 = im2col_quadrants_s2(y1)                                     # (4,16,Bp,256)
    out = conv2_mlp(p2, pp["conv2_w"], pp["conv2_b"], pp["fc1_w"], pp["fc1_b"],
                    pp["fc2_w"], pp["fc2_b"])                        # (Bp,128) f32
    return out[:b, :NUM_CLASSES]                                     # (B,10) log-probs


# -----------------------------------------------------------------------------
# Pure-JAX f32 reference (PyTorch semantics) for a correctness check.
# -----------------------------------------------------------------------------
def reference_forward(x, p):
    def conv(x, w, b):
        y = lax.conv_general_dilated(x, w, (1, 1), "VALID",
                                     dimension_numbers=("NCHW", "OIHW", "NCHW"))
        return y + b[None, :, None, None]
    def maxpool2(x):
        n, c, h, w = x.shape
        return x.reshape(n, c, h // 2, 2, w // 2, 2).max(axis=(3, 5))
    y = jax.nn.relu(maxpool2(conv(x, p["conv1_w"], p["conv1_b"])))
    y = jax.nn.relu(maxpool2(conv(y, p["conv2_w"], p["conv2_b"])))
    y = y.reshape(y.shape[0], -1)                                    # NCHW flatten -> 320
    y = jax.nn.relu(y @ p["fc1_w"] + p["fc1_b"])
    y = jax.nn.relu(y @ p["fc2_w"] + p["fc2_b"])
    return jax.nn.log_softmax(y, axis=-1)


if __name__ == "__main__":
    key = jax.random.PRNGKey(0)
    k_x, k_p = jax.random.split(key)
    # MNIST-shaped input (fc1=320 implies 1x28x28); small batch for the test.
    x = jax.random.normal(k_x, (2, 1, 28, 28), dtype=jnp.float32)
    params = init_params(k_p)
    prepared = prepare_params(params)

    out = jax.block_until_ready(net_forward(x, prepared))

    assert out.shape == (2, 10)
    # log_softmax rows must sum (in prob space) to ~1
    assert bool(jnp.all(jnp.abs(jnp.sum(jnp.exp(out), axis=-1) - 1.0) < 1e-3))
    # bf16 MXU operands vs f32 reference -> small, bounded drift
    ref = reference_forward(x, params)
    err = float(jnp.max(jnp.abs(out - ref)))
    assert err < 0.15, f"max |out - ref| = {err}"
    print("KERNEL_OK")
</pallas_src>

<mosaic_0001>
module attributes {stable_mosaic.version = 11 : i64} {
  func.func @conv1_pool_relu_kernel(%arg0: i32, %arg1: memref<4x288x25xbf16, #tpu.memory_space<vmem>>, %arg2: memref<25x16xbf16, #tpu.memory_space<vmem>>, %arg3: memref<1x16xf32, #tpu.memory_space<vmem>>, %arg4: memref<288x16xbf16, #tpu.memory_space<vmem>>) attributes {dimension_semantics = [#tpu.dimension_semantics<parallel>], iteration_bounds = array<i64: 1>, scalar_prefetch = 0 : i64, scratch_operands = 0 : i64, tpu.core_type = #tpu.core_type<tc>, window_params = [{transform_indices = @transform_0, window_bounds = array<i64: 4, 288, 25>}, {pipeline_mode = #tpu.pipeline_mode<synchronous>, transform_indices = @transform_1, window_bounds = array<i64: 25, 16>}, {pipeline_mode = #tpu.pipeline_mode<synchronous>, transform_indices = @transform_2, window_bounds = array<i64: 1, 16>}, {transform_indices = @transform_3, window_bounds = array<i64: 288, 16>}]} {
    %c0 = arith.constant 0 : index
    %c0_0 = arith.constant 0 : index
    %0 = vector.load %arg2[%c0, %c0_0] : memref<25x16xbf16, #tpu.memory_space<vmem>>, vector<25x16xbf16>
    %c0_1 = arith.constant 0 : index
    %c0_2 = arith.constant 0 : index
    %c0_3 = arith.constant 0 : index
    %1 = vector.load %arg1[%c0_1, %c0_2, %c0_3] : memref<4x288x25xbf16, #tpu.memory_space<vmem>>, vector<1x288x25xbf16>
    %2 = vector.shape_cast %1 : vector<1x288x25xbf16> to vector<288x25xbf16>
    %cst = arith.constant dense<0.000000e+00> : vector<288x16xf32>
    %3 = tpu.matmul %2, %0, %cst {dimension_numbers = #tpu.dot_dimension_numbers<[1], [0], [0], [1], [0, 0, 1, 1], [], []>} : vector<288x25xbf16>, vector<25x16xbf16>, vector<288x16xf32> -> vector<288x16xf32>
    %c1 = arith.constant 1 : index
    %c0_4 = arith.constant 0 : index
    %c0_5 = arith.constant 0 : index
    %4 = vector.load %arg1[%c1, %c0_4, %c0_5] : memref<4x288x25xbf16, #tpu.memory_space<vmem>>, vector<1x288x25xbf16>
    %5 = vector.shape_cast %4 : vector<1x288x25xbf16> to vector<288x25xbf16>
    %cst_6 = arith.constant dense<0.000000e+00> : vector<288x16xf32>
    %6 = tpu.matmul %5, %0, %cst_6 {dimension_numbers = #tpu.dot_dimension_numbers<[1], [0], [0], [1], [0, 0, 1, 1], [], []>} : vector<288x25xbf16>, vector<25x16xbf16>, vector<288x16xf32> -> vector<288x16xf32>
    %7 = arith.maximumf %3, %6 : vector<288x16xf32>
    %c2 = arith.constant 2 : index
    %c0_7 = arith.constant 0 : index
    %c0_8 = arith.constant 0 : index
    %8 = vector.load %arg1[%c2, %c0_7, %c0_8] : memref<4x288x25xbf16, #tpu.memory_space<vmem>>, vector<1x288x25xbf16>
    %9 = vector.shape_cast %8 : vector<1x288x25xbf16> to vector<288x25xbf16>
    %cst_9 = arith.constant dense<0.000000e+00> : vector<288x16xf32>
    %10 = tpu.matmul %9, %0, %cst_9 {dimension_numbers = #tpu.dot_dimension_numbers<[1], [0], [0], [1], [0, 0, 1, 1], [], []>} : vector<288x25xbf16>, vector<25x16xbf16>, vector<288x16xf32> -> vector<288x16xf32>
    %11 = arith.maximumf %7, %10 : vector<288x16xf32>
    %c3 = arith.constant 3 : index
    %c0_10 = arith.constant 0 : index
    %c0_11 = arith.constant 0 : index
    %12 = vector.load %arg1[%c3, %c0_10, %c0_11] : memref<4x288x25xbf16, #tpu.memory_space<vmem>>, vector<1x288x25xbf16>
    %13 = vector.shape_cast %12 : vector<1x288x25xbf16> to vector<288x25xbf16>
    %cst_12 = arith.constant dense<0.000000e+00> : vector<288x16xf32>
    %14 = tpu.matmul %13, %0, %cst_12 {dimension_numbers = #tpu.dot_dimension_numbers<[1], [0], [0], [1], [0, 0, 1, 1], [], []>} : vector<288x25xbf16>, vector<25x16xbf16>, vector<288x16xf32> -> vector<288x16xf32>
    %15 = arith.maximumf %11, %14 : vector<288x16xf32>
    %c0_13 = arith.constant 0 : index
    %c0_14 = arith.constant 0 : index
    %16 = vector.load %arg3[%c0_13, %c0_14] : memref<1x16xf32, #tpu.memory_space<vmem>>, vector<1x16xf32>
    %17 = vector.broadcast %16 : vector<1x16xf32> to vector<288x16xf32>
    %18 = arith.addf %15, %17 : vector<288x16xf32>
    %cst_15 = arith.constant 0.000000e+00 : f32
    %19 = vector.broadcast %cst_15 : f32 to vector<288x16xf32>
    %20 = arith.maximumf %18, %19 : vector<288x16xf32>
    %21 = arith.truncf %20 : vector<288x16xf32> to vector<288x16xbf16>
    %c0_16 = arith.constant 0 : index
    %c0_17 = arith.constant 0 : index
    %22 = vector.load %arg4[%c0_16, %c0_17] : memref<288x16xbf16, #tpu.memory_space<vmem>>, vector<288x16xbf16>
    tpu.vector_store %arg4[%c0_16, %c0_17], %21 {strides = array<i32>} : memref<288x16xbf16, #tpu.memory_space<vmem>>, vector<288x16xbf16>,
    return
  }
  func.func @transform_0(%arg0: i32) -> (i32, i32, i32) {
    %c0_i32 = arith.constant 0 : i32
    %c0_i32_0 = arith.constant 0 : i32
    %c0_i32_1 = arith.constant 0 : i32
    return %c0_i32, %arg0, %c0_i32_0 : i32, i32, i32
  }
  func.func @transform_1(%arg0: i32) -> (i32, i32) {
    %c0_i32 = arith.constant 0 : i32
    %c0_i32_0 = arith.constant 0 : i32
    %c0_i32_1 = arith.constant 0 : i32
    return %c0_i32, %c0_i32_0 : i32, i32
  }
  func.func @transform_2(%arg0: i32) -> (i32, i32) {
    %c0_i32 = arith.constant 0 : i32
    %c0_i32_0 = arith.constant 0 : i32
    %c0_i32_1 = arith.constant 0 : i32
    return %c0_i32, %c0_i32_0 : i32, i32
  }
  func.func @transform_3(%arg0: i32) -> (i32, i32) {
    %c0_i32 = arith.constant 0 : i32
    %c0_i32_0 = arith.constant 0 : i32
    return %arg0, %c0_i32 : i32, i32
  }
}

module attributes {stable_mosaic.version = 11 : i64} {
  func.func @conv2_mlp_kernel(%arg0: i32, %arg1: memref<4x16x16x256xbf16, #tpu.memory_space<vmem>>, %arg2: memref<256x128xbf16, #tpu.memory_space<vmem>>, %arg3: memref<1x128xf32, #tpu.memory_space<vmem>>, %arg4: memref<16x128x128xbf16, #tpu.memory_space<vmem>>, %arg5: memref<1x128xf32, #tpu.memory_space<vmem>>, %arg6: memref<128x128xbf16, #tpu.memory_space<vmem>>, %arg7: memref<1x128xf32, #tpu.memory_space<vmem>>, %arg8: memref<16x128xf32, #tpu.memory_space<vmem>>) attributes {dimension_semantics = [#tpu.dimension_semantics<parallel>], iteration_bounds = array<i64: 1>, scalar_prefetch = 0 : i64, scratch_operands = 0 : i64, tpu.core_type = #tpu.core_type<tc>, window_params = [{transform_indices = @transform_0, window_bounds = array<i64: 4, 16, 16, 256>}, {pipeline_mode = #tpu.pipeline_mode<synchronous>, transform_indices = @transform_1, window_bounds = array<i64: 256, 128>}, {pipeline_mode = #tpu.pipeline_mode<synchronous>, transform_indices = @transform_2, window_bounds = array<i64: 1, 128>}, {pipeline_mode = #tpu.pipeline_mode<synchronous>, transform_indices = @transform_3, window_bounds = array<i64: 16, 128, 128>}, {pipeline_mode = #tpu.pipeline_mode<synchronous>, transform_indices = @transform_4, window_bounds = array<i64: 1, 128>}, {pipeline_mode = #tpu.pipeline_mode<synchronous>, transform_indices = @transform_5, window_bounds = array<i64: 128, 128>}, {pipeline_mode = #tpu.pipeline_mode<synchronous>, transform_indices = @transform_6, window_bounds = array<i64: 1, 128>}, {transform_indices = @transform_7, window_bounds = array<i64: 16, 128>}]} {
    %c0 = arith.constant 0 : index
    %c0_0 = arith.constant 0 : index
    %0 = vector.load %arg2[%c0, %c0_0] : memref<256x128xbf16, #tpu.memory_space<vmem>>, vector<256x128xbf16>
    %c0_1 = arith.constant 0 : index
    %c0_2 = arith.constant 0 : index
    %c0_3 = arith.constant 0 : index
    %c0_4 = arith.constant 0 : index
    %1 = vector.load %arg1[%c0_1, %c0_2, %c0_3, %c0_4] : memref<4x16x16x256xbf16, #tpu.memory_space<vmem>>, vector<1x16x16x256xbf16>
    %2 = vector.shape_cast %1 : vector<1x16x16x256xbf16> to vector<16x16x256xbf16>
    %3 = vector.shape_cast %2 : vector<16x16x256xbf16> to vector<256x256xbf16>
    %cst = arith.constant dense<0.000000e+00> : vector<256x128xf32>
    %4 = tpu.matmul %3, %0, %cst {dimension_numbers = #tpu.dot_dimension_numbers<[1], [0], [0], [1], [0, 0, 1, 1], [], []>} : vector<256x256xbf16>, vector<256x128xbf16>, vector<256x128xf32> -> vector<256x128xf32>
    %c1 = arith.constant 1 : index
    %c0_5 = arith.constant 0 : index
    %c0_6 = arith.constant 0 : index
    %c0_7 = arith.constant 0 : index
    %5 = vector.load %arg1[%c1, %c0_5, %c0_6, %c0_7] : memref<4x16x16x256xbf16, #tpu.memory_space<vmem>>, vector<1x16x16x256xbf16>
    %6 = vector.shape_cast %5 : vector<1x16x16x256xbf16> to vector<16x16x256xbf16>
    %7 = vector.shape_cast %6 : vector<16x16x256xbf16> to vector<256x256xbf16>
    %cst_8 = arith.constant dense<0.000000e+00> : vector<256x128xf32>
    %8 = tpu.matmul %7, %0, %cst_8 {dimension_numbers = #tpu.dot_dimension_numbers<[1], [0], [0], [1], [0, 0, 1, 1], [], []>} : vector<256x256xbf16>, vector<256x128xbf16>, vector<256x128xf32> -> vector<256x128xf32>
    %9 = arith.maximumf %4, %8 : vector<256x128xf32>
    %c2 = arith.constant 2 : index
    %c0_9 = arith.constant 0 : index
    %c0_10 = arith.constant 0 : index
    %c0_11 = arith.constant 0 : index
    %10 = vector.load %arg1[%c2, %c0_9, %c0_10, %c0_11] : memref<4x16x16x256xbf16, #tpu.memory_space<vmem>>, vector<1x16x16x256xbf16>
    %11 = vector.shape_cast %10 : vector<1x16x16x256xbf16> to vector<16x16x256xbf16>
    %12 = vector.shape_cast %11 : vector<16x16x256xbf16> to vector<256x256xbf16>
    %cst_12 = arith.constant dense<0.000000e+00> : vector<256x128xf32>
    %13 = tpu.matmul %12, %0, %cst_12 {dimension_numbers = #tpu.dot_dimension_numbers<[1], [0], [0], [1], [0, 0, 1, 1], [], []>} : vector<256x256xbf16>, vector<256x128xbf16>, vector<256x128xf32> -> vector<256x128xf32>
    %14 = arith.maximumf %9, %13 : vector<256x128xf32>
    %c3 = arith.constant 3 : index
    %c0_13 = arith.constant 0 : index
    %c0_14 = arith.constant 0 : index
    %c0_15 = arith.constant 0 : index
    %15 = vector.load %arg1[%c3, %c0_13, %c0_14, %c0_15] : memref<4x16x16x256xbf16, #tpu.memory_space<vmem>>, vector<1x16x16x256xbf16>
    %16 = vector.shape_cast %15 : vector<1x16x16x256xbf16> to vector<16x16x256xbf16>
    %17 = vector.shape_cast %16 : vector<16x16x256xbf16> to vector<256x256xbf16>
    %cst_16 = arith.constant dense<0.000000e+00> : vector<256x128xf32>
    %18 = tpu.matmul %17, %0, %cst_16 {dimension_numbers = #tpu.dot_dimension_numbers<[1], [0], [0], [1], [0, 0, 1, 1], [], []>} : vector<256x256xbf16>, vector<256x128xbf16>, vector<256x128xf32> -> vector<256x128xf32>
    %19 = arith.maximumf %14, %18 : vector<256x128xf32>
    %c0_17 = arith.constant 0 : index
    %c0_18 = arith.constant 0 : index
    %20 = vector.load %arg3[%c0_17, %c0_18] : memref<1x128xf32, #tpu.memory_space<vmem>>, vector<1x128xf32>
    %21 = vector.broadcast %20 : vector<1x128xf32> to vector<256x128xf32>
    %22 = arith.addf %19, %21 : vector<256x128xf32>
    %cst_19 = arith.constant 0.000000e+00 : f32
    %23 = vector.broadcast %cst_19 : f32 to vector<256x128xf32>
    %24 = arith.maximumf %22, %23 : vector<256x128xf32>
    %25 = arith.truncf %24 : vector<256x128xf32> to vector<256x128xbf16>
    %26 = vector.extract_strided_slice %25 {offsets = [0, 0], sizes = [16, 128], strides = [1, 1]} : vector<256x128xbf16> to vector<16x128xbf16>
    %c0_20 = arith.constant 0 : index
    %c0_21 = arith.constant 0 : index
    %c0_22 = arith.constant 0 : index
    %27 = vector.load %arg4[%c0_20, %c0_21, %c0_22] : memref<16x128x128xbf16, #tpu.memory_space<vmem>>, vector<1x128x128xbf16>
    %28 = vector.shape_cast %27 : vector<1x128x128xbf16> to vector<128x128xbf16>
    %cst_23 = arith.constant dense<0.000000e+00> : vector<16x128xf32>
    %29 = tpu.matmul %26, %28, %cst_23 {dimension_numbers = #tpu.dot_dimension_numbers<[1], [0], [0], [1], [0, 0, 1, 1], [], []>} : vector<16x128xbf16>, vector<128x128xbf16>, vector<16x128xf32> -> vector<16x128xf32>
    %30 = vector.extract_strided_slice %25 {offsets = [16, 0], sizes = [16, 128], strides = [1, 1]} : vector<256x128xbf16> to vector<16x128xbf16>
    %c1_24 = arith.constant 1 : index
    %c0_25 = arith.constant 0 : index
    %c0_26 = arith.constant 0 : index
    %31 = vector.load %arg4[%c1_24, %c0_25, %c0_26] : memref<16x128x128xbf16, #tpu.memory_space<vmem>>, vector<1x128x128xbf16>
    %32 = vector.shape_cast %31 : vector<1x128x128xbf16> to vector<128x128xbf16>
    %cst_27 = arith.constant dense<0.000000e+00> : vector<16x128xf32>
    %33 = tpu.matmul %30, %32, %cst_27 {dimension_numbers = #tpu.dot_dimension_numbers<[1], [0], [0], [1], [0, 0, 1, 1], [], []>} : vector<16x128xbf16>, vector<128x128xbf16>, vector<16x128xf32> -> vector<16x128xf32>
    %34 = arith.addf %29, %33 : vector<16x128xf32>
    %35 = vector.extract_strided_slice %25 {offsets = [32, 0], sizes = [16, 128], strides = [1, 1]} : vector<256x128xbf16> to vector<16x128xbf16>
    %c2_28 = arith.constant 2 : index
    %c0_29 = arith.constant 0 : index
    %c0_30 = arith.constant 0 : index
    %36 = vector.load %arg4[%c2_28, %c0_29, %c0_30] : memref<16x128x128xbf16, #tpu.memory_space<vmem>>, vector<1x128x128xbf16>
    %37 = vector.shape_cast %36 : vector<1x128x128xbf16> to vector<128x128xbf16>
    %cst_31 = arith.constant dense<0.000000e+00> : vector<16x128xf32>
    %38 = tpu.matmul %35, %37, %cst_31 {dimension_numbers = #tpu.dot_dimension_numbers<[1], [0], [0], [1], [0, 0, 1, 1], [], []>} : vector<16x128xbf16>, vector<128x128xbf16>, vector<16x128xf32> -> vector<16x128xf32>
    %39 = arith.addf %34, %38 : vector<16x128xf32>
    %40 = vector.extract_strided_slice %25 {offsets = [48, 0], sizes = [16, 128], strides = [1, 1]} : vector<256x128xbf16> to vector<16x128xbf16>
    %c3_32 = arith.constant 3 : index
    %c0_33 = arith.constant 0 : index
    %c0_34 = arith.constant 0 : index
    %41 = vector.load %arg4[%c3_32, %c0_33, %c0_34] : memref<16x128x128xbf16, #tpu.memory_space<vmem>>, vector<1x128x128xbf16>
    %42 = vector.shape_cast %41 : vector<1x128x128xbf16> to vector<128x128xbf16>
    %cst_35 = arith.constant dense<0.000000e+00> : vector<16x128xf32>
    %43 = tpu.matmul %40, %42, %cst_35 {dimension_numbers = #tpu.dot_dimension_numbers<[1], [0], [0], [1], [0, 0, 1, 1], [], []>} : vector<16x128xbf16>, vector<128x128xbf16>, vector<16x128xf32> -> vector<16x128xf32>
    %44 = arith.addf %39, %43 : vector<16x128xf32>
    %45 = vector.extract_strided_slice %25 {offsets = [64, 0], sizes = [16, 128], strides = [1, 1]} : vector<256x128xbf16> to vector<16x128xbf16>
    %c4 = arith.constant 4 : index
    %c0_36 = arith.constant 0 : index
    %c0_37 = arith.constant 0 : index
    %46 = vector.load %arg4[%c4, %c0_36, %c0_37] : memref<16x128x128xbf16, #tpu.memory_space<vmem>>, vector<1x128x128xbf16>
    %47 = vector.shape_cast %46 : vector<1x128x128xbf16> to vector<128x128xbf16>
    %cst_38 = arith.constant dense<0.000000e+00> : vector<16x128xf32>
    %48 = tpu.matmul %45, %47, %cst_38 {dimension_numbers = #tpu.dot_dimension_numbers<[1], [0], [0], [1], [0, 0, 1, 1], [], []>} : vector<16x128xbf16>, vector<128x128xbf16>, vector<16x128xf32> -> vector<16x128xf32>
    %49 = arith.addf %44, %48 : vector<16x128xf32>
    %50 = vector.extract_strided_slice %25 {offsets = [80, 0], sizes = [16, 128], strides = [1, 1]} : vector<256x128xbf16> to vector<16x128xbf16>
    %c5 = arith.constant 5 : index
    %c0_39 = arith.constant 0 : index
    %c0_40 = arith.constant 0 : index
    %51 = vector.load %arg4[%c5, %c0_39, %c0_40] : memref<16x128x128xbf16, #tpu.memory_space<vmem>>, vector<1x128x128xbf16>
    %52 = vector.shape_cast %51 : vector<1x128x128xbf16> to vector<128x128xbf16>
    %cst_41 = arith.constant dense<0.000000e+00> : vector<16x128xf32>
    %53 = tpu.matmul %50, %52, %cst_41 {dimension_numbers = #tpu.dot_dimension_numbers<[1], [0], [0], [1], [0, 0, 1, 1], [], []>} : vector<16x128xbf16>, vector<128x128xbf16>, vector<16x128xf32> -> vector<16x128xf32>
    %54 = arith.addf %49, %53 : vector<16x128xf32>
    %55 = vector.extract_strided_slice %25 {offsets = [96, 0], sizes = [16, 128], strides = [1, 1]} : vector<256x128xbf16> to vector<16x128xbf16>
    %c6 = arith.constant 6 : index
    %c0_42 = arith.constant 0 : index
    %c0_43 = arith.constant 0 : index
    %56 = vector.load %arg4[%c6, %c0_42, %c0_43] : memref<16x128x128xbf16, #tpu.memory_space<vmem>>, vector<1x128x128xbf16>
    %57 = vector.shape_cast %56 : vector<1x128x128xbf16> to vector<128x128xbf16>
    %cst_44 = arith.constant dense<0.000000e+00> : vector<16x128xf32>
    %58 = tpu.matmul %55, %57, %cst_44 {dimension_numbers = #tpu.dot_dimension_numbers<[1], [0], [0], [1], [0, 0, 1, 1], [], []>} : vector<16x128xbf16>, vector<128x128xbf16>, vector<16x128xf32> -> vector<16x128xf32>
    %59 = arith.addf %54, %58 : vector<16x128xf32>
    %60 = vector.extract_strided_slice %25 {offsets = [112, 0], sizes = [16, 128], strides = [1, 1]} : vector<256x128xbf16> to vector<16x128xbf16>
    %c7 = arith.constant 7 : index
    %c0_45 = arith.constant 0 : index
    %c0_46 = arith.constant 0 : index
    %61 = vector.load %arg4[%c7, %c0_45, %c0_46] : memref<16x128x128xbf16, #tpu.memory_space<vmem>>, vector<1x128x128xbf16>
    %62 = vector.shape_cast %61 : vector<1x128x128xbf16> to vector<128x128xbf16>
    %cst_47 = arith.constant dense<0.000000e+00> : vector<16x128xf32>
    %63 = tpu.matmul %60, %62, %cst_47 {dimension_numbers = #tpu.dot_dimension_numbers<[1], [0], [0], [1], [0, 0, 1, 1], [], []>} : vector<16x128xbf16>, vector<128x128xbf16>, vector<16x128xf32> -> vector<16x128xf32>
    %64 = arith.addf %59, %63 : vector<16x128xf32>
    %65 = vector.extract_strided_slice %25 {offsets = [128, 0], sizes = [16, 128], strides = [1, 1]} : vector<256x128xbf16> to vector<16x128xbf16>
    %c8 = arith.constant 8 : index
    %c0_48 = arith.constant 0 : index
    %c0_49 = arith.constant 0 : index
    %66 = vector.load %arg4[%c8, %c0_48, %c0_49] : memref<16x128x128xbf16, #tpu.memory_space<vmem>>, vector<1x128x128xbf16>
    %67 = vector.shape_cast %66 : vector<1x128x128xbf16> to vector<128x128xbf16>
    %cst_50 = arith.constant dense<0.000000e+00> : vector<16x128xf32>
    %68 = tpu.matmul %65, %67, %cst_50 {dimension_numbers = #tpu.dot_dimension_numbers<[1], [0], [0], [1], [0, 0, 1, 1], [], []>} : vector<16x128xbf16>, vector<128x128xbf16>, vector<16x128xf32> -> vector<16x128xf32>
    %69 = arith.addf %64, %68 : vector<16x128xf32>
    %70 = vector.extract_strided_slice %25 {offsets = [144, 0], sizes = [16, 128], strides = [1, 1]} : vector<256x128xbf16> to vector<16x128xbf16>
    %c9 = arith.constant 9 : index
    %c0_51 = arith.constant 0 : index
    %c0_52 = arith.constant 0 : index
    %71 = vector.load %arg4[%c9, %c0_51, %c0_52] : memref<16x128x128xbf16, #tpu.memory_space<vmem>>, vector<1x128x128xbf16>
    %72 = vector.shape_cast %71 : vector<1x128x128xbf16> to vector<128x128xbf16>
    %cst_53 = arith.constant dense<0.000000e+00> : vector<16x128xf32>
    %73 = tpu.matmul %70, %72, %cst_53 {dimension_numbers = #tpu.dot_dimension_numbers<[1], [0], [0], [1], [0, 0, 1, 1], [], []>} : vector<16x128xbf16>, vector<128x128xbf16>, vector<16x128xf32> -> vector<16x128xf32>
    %74 = arith.addf %69, %73 : vector<16x128xf32>
    %75 = vector.extract_strided_slice %25 {offsets = [160, 0], sizes = [16, 128], strides = [1, 1]} : vector<256x128xbf16> to vector<16x128xbf16>
    %c10 = arith.constant 10 : index
    %c0_54 = arith.constant 0 : index
    %c0_55 = arith.constant 0 : index
    %76 = vector.load %arg4[%c10, %c0_54, %c0_55] : memref<16x128x128xbf16, #tpu.memory_space<vmem>>, vector<1x128x128xbf16>
    %77 = vector.shape_cast %76 : vector<1x128x128xbf16> to vector<128x128xbf16>
    %cst_56 = arith.constant dense<0.000000e+00> : vector<16x128xf32>
    %78 = tpu.matmul %75, %77, %cst_56 {dimension_numbers = #tpu.dot_dimension_numbers<[1], [0], [0], [1], [0, 0, 1, 1], [], []>} : vector<16x128xbf16>, vector<128x128xbf16>, vector<16x128xf32> -> vector<16x128xf32>
    %79 = arith.addf %74, %78 : vector<16x128xf32>
    %80 = vector.extract_strided_slice %25 {offsets = [176, 0], sizes = [16, 128], strides = [1, 1]} : vector<256x128xbf16> to vector<16x128xbf16>
    %c11 = arith.constant 11 : index
    %c0_57 = arith.constant 0 : index
    %c0_58 = arith.constant 0 : index
    %81 = vector.load %arg4[%c11, %c0_57, %c0_58] : memref<16x128x128xbf16, #tpu.memory_space<vmem>>, vector<1x128x128xbf16>
    %82 = vector.shape_cast %81 : vector<1x128x128xbf16> to vector<128x128xbf16>
    %cst_59 = arith.constant dense<0.000000e+00> : vector<16x128xf32>
    %83 = tpu.matmul %80, %82, %cst_59 {dimension_numbers = #tpu.dot_dimension_numbers<[1], [0], [0], [1], [0, 0, 1, 1], [], []>} : vector<16x128xbf16>, vector<128x128xbf16>, vector<16x128xf32> -> vector<16x128xf32>
    %84 = arith.addf %79, %83 : vector<16x128xf32>
    %85 = vector.extract_strided_slice %25 {offsets = [192, 0], sizes = [16, 128], strides = [1, 1]} : vector<256x128xbf16> to vector<16x128xbf16>
    %c12 = arith.constant 12 : index
    %c0_60 = arith.constant 0 : index
    %c0_61 = arith.constant 0 : index
    %86 = vector.load %arg4[%c12, %c0_60, %c0_61] : memref<16x128x128xbf16, #tpu.memory_space<vmem>>, vector<1x128x128xbf16>
    %87 = vector.shape_cast %86 : vector<1x128x128xbf16> to vector<128x128xbf16>
    %cst_62 = arith.constant dense<0.000000e+00> : vector<16x128xf32>
    %88 = tpu.matmul %85, %87, %cst_62 {dimension_numbers = #tpu.dot_dimension_numbers<[1], [0], [0], [1], [0, 0, 1, 1], [], []>} : vector<16x128xbf16>, vector<128x128xbf16>, vector<16x128xf32> -> vector<16x128xf32>
    %89 = arith.addf %84, %88 : vector<16x128xf32>
    %90 = vector.extract_strided_slice %25 {offsets = [208, 0], sizes = [16, 128], strides = [1, 1]} : vector<256x128xbf16> to vector<16x128xbf16>
    %c13 = arith.constant 13 : index
    %c0_63 = arith.constant 0 : index
    %c0_64 = arith.constant 0 : index
    %91 = vector.load %arg4[%c13, %c0_63, %c0_64] : memref<16x128x128xbf16, #tpu.memory_space<vmem>>, vector<1x128x128xbf16>
    %92 = vector.shape_cast %91 : vector<1x128x128xbf16> to vector<128x128xbf16>
    %cst_65 = arith.constant dense<0.000000e+00> : vector<16x128xf32>
    %93 = tpu.matmul %90, %92, %cst_65 {dimension_numbers = #tpu.dot_dimension_numbers<[1], [0], [0], [1], [0, 0, 1, 1], [], []>} : vector<16x128xbf16>, vector<128x128xbf16>, vector<16x128xf32> -> vector<16x128xf32>
    %94 = arith.addf %89, %93 : vector<16x128xf32>
    %95 = vector.extract_strided_slice %25 {offsets = [224, 0], sizes = [16, 128], strides = [1, 1]} : vector<256x128xbf16> to vector<16x128xbf16>
    %c14 = arith.constant 14 : index
    %c0_66 = arith.constant 0 : index
    %c0_67 = arith.constant 0 : index
    %96 = vector.load %arg4[%c14, %c0_66, %c0_67] : memref<16x128x128xbf16, #tpu.memory_space<vmem>>, vector<1x128x128xbf16>
    %97 = vector.shape_cast %96 : vector<1x128x128xbf16> to vector<128x128xbf16>
    %cst_68 = arith.constant dense<0.000000e+00> : vector<16x128xf32>
    %98 = tpu.matmul %95, %97, %cst_68 {dimension_numbers = #tpu.dot_dimension_numbers<[1], [0], [0], [1], [0, 0, 1, 1], [], []>} : vector<16x128xbf16>, vector<128x128xbf16>, vector<16x128xf32> -> vector<16x128xf32>
    %99 = arith.addf %94, %98 : vector<16x128xf32>
    %100 = vector.extract_strided_slice %25 {offsets = [240, 0], sizes = [16, 128], strides = [1, 1]} : vector<256x128xbf16> to vector<16x128xbf16>
    %c15 = arith.constant 15 : index
    %c0_69 = arith.constant 0 : index
    %c0_70 = arith.constant 0 : index
    %101 = vector.load %arg4[%c15, %c0_69, %c0_70] : memref<16x128x128xbf16, #tpu.memory_space<vmem>>, vector<1x128x128xbf16>
    %102 = vector.shape_cast %101 : vector<1x128x128xbf16> to vector<128x128xbf16>
    %cst_71 = arith.constant dense<0.000000e+00> : vector<16x128xf32>
    %103 = tpu.matmul %100, %102, %cst_71 {dimension_numbers = #tpu.dot_dimension_numbers<[1], [0], [0], [1], [0, 0, 1, 1], [], []>} : vector<16x128xbf16>, vector<128x128xbf16>, vector<16x128xf32> -> vector<16x128xf32>
    %104 = arith.addf %99, %103 : vector<16x128xf32>
    %c0_72 = arith.constant 0 : index
    %c0_73 = arith.constant 0 : index
    %105 = vector.load %arg5[%c0_72, %c0_73] : memref<1x128xf32, #tpu.memory_space<vmem>>, vector<1x128xf32>
    %106 = vector.broadcast %105 : vector<1x128xf32> to vector<16x128xf32>
    %107 = arith.addf %104, %106 : vector<16x128xf32>
    %cst_74 = arith.constant 0.000000e+00 : f32
    %108 = vector.broadcast %cst_74 : f32 to vector<16x128xf32>
    %109 = arith.maximumf %107, %108 : vector<16x128xf32>
    %110 = arith.truncf %109 : vector<16x128xf32> to vector<16x128xbf16>
    %c0_75 = arith.constant 0 : index
    %c0_76 = arith.constant 0 : index
    %111 = vector.load %arg6[%c0_75, %c0_76] : memref<128x128xbf16, #tpu.memory_space<vmem>>, vector<128x128xbf16>
    %cst_77 = arith.constant dense<0.000000e+00> : vector<16x128xf32>
    %112 = tpu.matmul %110, %111, %cst_77 {dimension_numbers = #tpu.dot_dimension_numbers<[1], [0], [0], [1], [0, 0, 1, 1], [], []>} : vector<16x128xbf16>, vector<128x128xbf16>, vector<16x128xf32> -> vector<16x128xf32>
    %c0_78 = arith.constant 0 : index
    %c0_79 = arith.constant 0 : index
    %113 = vector.load %arg7[%c0_78, %c0_79] : memref<1x128xf32, #tpu.memory_space<vmem>>, vector<1x128xf32>
    %114 = vector.broadcast %113 : vector<1x128xf32> to vector<16x128xf32>
    %115 = arith.addf %112, %114 : vector<16x128xf32>
    %cst_80 = arith.constant 0.000000e+00 : f32
    %116 = vector.broadcast %cst_80 : f32 to vector<16x128xf32>
    %117 = arith.maximumf %115, %116 : vector<16x128xf32>
    %118 = tpu.iota {dimensions = array<i32: 1>} : vector<16x128xi32>
    %c10_i32 = arith.constant 10 : i32
    %119 = vector.broadcast %c10_i32 : i32 to vector<16x128xi32>
    %120 = arith.cmpi slt, %118, %119 : vector<16x128xi32>
    %cst_81 = arith.constant -1.000000e+30 : f32
    %121 = vector.broadcast %cst_81 : f32 to vector<16x128xf32>
    %122 = arith.select %120, %117, %121 : vector<16x128xi1>, vector<16x128xf32>
    %cst_82 = arith.constant dense<0xFF800000> : vector<16xf32>
    %123 = vector.multi_reduction <maximumf>, %122, %cst_82 [1] : vector<16x128xf32> to vector<16xf32>
    %124 = vector.shape_cast %123 : vector<16xf32> to vector<16x1xf32>
    %125 = vector.broadcast %124 : vector<16x1xf32> to vector<16x128xf32>
    %126 = arith.subf %122, %125 : vector<16x128xf32>
    %127 = math.exp %126 : vector<16x128xf32>
    %cst_83 = arith.constant dense<0.000000e+00> : vector<16xf32>
    %128 = vector.multi_reduction <add>, %127, %cst_83 [1] : vector<16x128xf32> to vector<16xf32>
    %129 = vector.shape_cast %128 : vector<16xf32> to vector<16x1xf32>
    %130 = math.log %129 : vector<16x1xf32>
    %131 = vector.broadcast %130 : vector<16x1xf32> to vector<16x128xf32>
    %132 = arith.subf %126, %131 : vector<16x128xf32>
    %c0_84 = arith.constant 0 : index
    %c0_85 = arith.constant 0 : index
    %133 = vector.load %arg8[%c0_84, %c0_85] : memref<16x128xf32, #tpu.memory_space<vmem>>, vector<16x128xf32>
    tpu.vector_store %arg8[%c0_84, %c0_85], %132 {strides = array<i32>} : memref<16x128xf32, #tpu.memory_space<vmem>>, vector<16x128xf32>,
    return
  }
  func.func @transform_0(%arg0: i32) -> (i32, i32, i32, i32) {
    %c0_i32 = arith.constant 0 : i32
    %c0_i32_0 = arith.constant 0 : i32
    %c0_i32_1 = arith.constant 0 : i32
    %c0_i32_2 = arith.constant 0 : i32
    return %c0_i32, %c0_i32_0, %arg0, %c0_i32_1 : i32, i32, i32, i32
  }
  func.func @transform_1(%arg0: i32) -> (i32, i32) {
    %c0_i32 = arith.constant 0 : i32
    %c0_i32_0 = arith.constant 0 : i32
    %c0_i32_1 = arith.constant 0 : i32
    return %c0_i32, %c0_i32_0 : i32, i32
  }
  func.func @transform_2(%arg0: i32) -> (i32, i32) {
    %c0_i32 = arith.constant 0 : i32
    %c0_i32_0 = arith.constant 0 : i32
    %c0_i32_1 = arith.constant 0 : i32
    return %c0_i32, %c0_i32_0 : i32, i32
  }
  func.func @transform_3(%arg0: i32) -> (i32, i32, i32) {
    %c0_i32 = arith.constant 0 : i32
    %c0_i32_0 = arith.constant 0 : i32
    %c0_i32_1 = arith.constant 0 : i32
    %c0_i32_2 = arith.constant 0 : i32
    return %c0_i32, %c0_i32_0, %c0_i32_1 : i32, i32, i32
  }
  func.func @transform_4(%arg0: i32) -> (i32, i32) {
    %c0_i32 = arith.constant 0 : i32
    %c0_i32_0 = arith.constant 0 : i32
    %c0_i32_1 = arith.constant 0 : i32
    return %c0_i32, %c0_i32_0 : i32, i32
  }
  func.func @transform_5(%arg0: i32) -> (i32, i32) {
    %c0_i32 = arith.constant 0 : i32
    %c0_i32_0 = arith.constant 0 : i32
    %c0_i32_1 = arith.constant 0 : i32
    return %c0_i32, %c0_i32_0 : i32, i32
  }
  func.func @transform_6(%arg0: i32) -> (i32, i32) {
    %c0_i32 = arith.constant 0 : i32
    %c0_i32_0 = arith.constant 0 : i32
    %c0_i32_1 = arith.constant 0 : i32
    return %c0_i32, %c0_i32_0 : i32, i32
  }
  func.func @transform_7(%arg0: i32) -> (i32, i32) {
    %c0_i32 = arith.constant 0 : i32
    %c0_i32_0 = arith.constant 0 : i32
    return %arg0, %c0_i32 : i32, i32
  }
}

</mosaic_0001>

<llo_original>
// kernel: net_forward.2
$region0: #{net_forward.2}
  #allocation0 [shape = 'u32[]', space=smem, size = 0x4, offset = 0x4, fixed_abs, tag = 'smem constant byte address 0x4 - core index']
  #allocation1 [shape = 'u32[72,128]{1,0:T(1,128)}', space=vmem, size = 0x9000, scoped, tag = 'internal scratch']
  %s0 = inlined_call_operand.vmem [shape: bf16[4,288,25], index: 0, kind: input, shape index: {}]
  %s1 = inlined_call_operand.vmem [shape: bf16[25,16], index: 1, kind: input, shape index: {}]
  %s2 = inlined_call_operand.hbm [shape: f32[1,16], index: 2, kind: input, shape index: {}]
  %s3 = inlined_call_operand.vmem [shape: bf16[288,16], index: 3, kind: output, shape index: {}]
  %s4 = sld [smem:[#allocation0]]
  $region26: #{net_forward.2} parent=0
    _
  %s6 = ssub.s32 1, %s4
  %s7 = scalar_select 0, %s6, %s4
  $region1: #{net_forward.2} parent=0
    #allocation2 [shape = 'u8[512]{0}', space=vmem, size = 0x400, scoped, tag = 'input window, operand 2, single buffered']
    #allocation3 [shape = 's32[1]{0}', space=sflag, size = 0x4, scoped, tag = 'scoped memory for net_forward.2']
    %8 = vsyncpa [#allocation3], 0
    // Predicated region
    $region2: #{net_forward.2} parent=1 // pred_check
      _
    $region3: #{net_forward.2} parent=1 // pred_check_branch
      %10 = sbr.rel (0) target = $region5
    $region4: #{net_forward.2} parent=1 // pred_region
      _
    $region5: #{net_forward.2} parent=1 // pred_fallthru
      _
    // Predicated region
    $region6: #{net_forward.2} parent=1 // pred_check
      _
    $region7: #{net_forward.2} parent=1 // pred_check_branch
      %12 = sbr.rel (0) target = $region9
    $region8: #{net_forward.2} parent=1 // pred_region
      _
    $region9: #{net_forward.2} parent=1 // pred_fallthru
      _
    // Predicated region
    $region10: #{net_forward.2} parent=1 // pred_check
      _
    $region11: #{net_forward.2} parent=1 // pred_check_branch
      %14 = sbr.rel (0) target = $region13
    $region12: #{net_forward.2} parent=1 // pred_region
      %16 = vsyncadd [#allocation3], 0
      %s18 = sshll.u32 %s2, 4
      %s19 = int_to_ptr.hbm [resolvable:$true] %s18
      %s20 = sshll.u32 [#allocation2], 4
      %s21 = int_to_ptr.vmem [resolvable:$true] %s20
      %23 = dma.hbm_to_vmem [thread:$0]  %s19, 16, %s21, [#allocation3]
    $region13: #{net_forward.2} parent=1 // pred_fallthru
      _
    // Predicated region
    $region14: #{net_forward.2} parent=1 // pred_check
      _
    $region15: #{net_forward.2} parent=1 // pred_check_branch
      %25 = sbr.rel (0) target = $region17
    $region16: #{net_forward.2} parent=1 // pred_region
      %27 = dma.done [#allocation3], 16
    $region17: #{net_forward.2} parent=1 // pred_fallthru
      _
    %v29 = vld [vmem:[%s1] sm:$0xf]
    %v30 = vld [vmem:[%s1 + $0x4] sm:$0xf]
    %v31 = vld [vmem:[%s1 + $0x8] sm:$0xf]
    %v32 = vld [vmem:[%s1 + $0xc] sm:$0x1]
    %v33 = vld [vmem:[%s0] sm:$0xf]
    %v34 = vld [vmem:[%s0 + $0x4] sm:$0xf]
    %v35 = vld [vmem:[%s0 + $0x8] sm:$0xf]
    %v36 = vld [vmem:[%s0 + $0xc] sm:$0xf]
    %v37 = vld [vmem:[%s0 + $0x10] sm:$0xf]
    %v38 = vld [vmem:[%s0 + $0x14] sm:$0xf]
    %v39 = vld [vmem:[%s0 + $0x18] sm:$0xf]
    %v40 = vld [vmem:[%s0 + $0x1c] sm:$0xf]
    %v41 = vld [vmem:[%s0 + $0x20] sm:$0xf]
    %v42 = vld [vmem:[%s0 + $0x24] sm:$0xf]
    %v43 = vld [vmem:[%s0 + $0x28] sm:$0xf]
    %v44 = vld [vmem:[%s0 + $0x2c] sm:$0xf]
    %v45 = vld [vmem:[%s0 + $0x30] sm:$0xf]
    %v46 = vld [vmem:[%s0 + $0x34] sm:$0xf]
    %v47 = vld [vmem:[%s0 + $0x38] sm:$0xf]
    %v48 = vld [vmem:[%s0 + $0x3c] sm:$0xf]
    %v49 = vld [vmem:[%s0 + $0x40] sm:$0xf]
    %v50 = vld [vmem:[%s0 + $0x44] sm:$0xf]
    %v51 = vld [vmem:[%s0 + $0x48] sm:$0xf]
    %v52 = vld [vmem:[%s0 + $0x4c] sm:$0xf]
    %v53 = vld [vmem:[%s0 + $0x50] sm:$0xf]
    %v54 = vld [vmem:[%s0 + $0x54] sm:$0xf]
    %v55 = vld [vmem:[%s0 + $0x58] sm:$0xf]
    %v56 = vld [vmem:[%s0 + $0x5c] sm:$0xf]
    %v57 = vld [vmem:[%s0 + $0x60] sm:$0xf]
    %v58 = vld [vmem:[%s0 + $0x64] sm:$0xf]
    %v59 = vld [vmem:[%s0 + $0x68] sm:$0xf]
    %v60 = vld [vmem:[%s0 + $0x6c] sm:$0xf]
    %v61 = vld [vmem:[%s0 + $0x70] sm:$0xf]
    %v62 = vld [vmem:[%s0 + $0x74] sm:$0xf]
    %v63 = vld [vmem:[%s0 + $0x78] sm:$0xf]
    %v64 = vld [vmem:[%s0 + $0x7c] sm:$0xf]
    %v65 = vld [vmem:[%s0 + $0x80] sm:$0xf]
    %v66 = vld [vmem:[%s0 + $0x84] sm:$0xf]
    %v67 = vld [vmem:[%s0 + $0x88] sm:$0xf]
    %v68 = vld [vmem:[%s0 + $0x8c] sm:$0xf]
    %v105 = vunpack.c.l.b16 %v33
    %v106 = vunpack.c.l.b16 %v34
    %v107 = vunpack.c.l.b16 %v35
    %v108 = vunpack.c.l.b16 %v36
    %v109 = vunpack.c.l.b16 %v37
    %v110 = vunpack.c.l.b16 %v38
    %v111 = vunpack.c.l.b16 %v39
    %v112 = vunpack.c.l.b16 %v40
    %v113 = vunpack.c.l.b16 %v41
    %v114 = vunpack.c.l.b16 %v42
    %v115 = vunpack.c.l.b16 %v43
    %v116 = vunpack.c.l.b16 %v44
    %v117 = vunpack.c.l.b16 %v45
    %v118 = vunpack.c.l.b16 %v46
    %v119 = vunpack.c.l.b16 %v47
    %v120 = vunpack.c.l.b16 %v48
    %v121 = vunpack.c.l.b16 %v49
    %v122 = vunpack.c.l.b16 %v50
    %v123 = vunpack.c.l.b16 %v51
    %v124 = vunpack.c.l.b16 %v52
    %v125 = vunpack.c.l.b16 %v53
    %v126 = vunpack.c.l.b16 %v54
    %v127 = vunpack.c.l.b16 %v55
    %v128 = vunpack.c.l.b16 %v56
    %v129 = vunpack.c.l.b16 %v57
    %v130 = vunpack.c.l.b16 %v58
    %v131 = vunpack.c.l.b16 %v59
    %v132 = vunpack.c.l.b16 %v60
    %v133 = vunpack.c.l.b16 %v61
    %v134 = vunpack.c.l.b16 %v62
    %v135 = vunpack.c.l.b16 %v63
    %v136 = vunpack.c.l.b16 %v64
    %v137 = vunpack.c.l.b16 %v65
    %v138 = vunpack.c.l.b16 %v66
    %v139 = vunpack.c.l.b16 %v67
    %v140 = vunpack.c.l.b16 %v68
    %v141 = vpack.c.b16 %v106, %v105
    %v142 = vpack.c.b16 %v108, %v107
    %v143 = vpack.c.b16 %v110, %v109
    %v144 = vpack.c.b16 %v112, %v111
    %v145 = vpack.c.b16 %v114, %v113
    %v146 = vpack.c.b16 %v116, %v115
    %v147 = vpack.c.b16 %v118, %v117
    %v148 = vpack.c.b16 %v120, %v119
    %v149 = vpack.c.b16 %v122, %v121
    %v150 = vpack.c.b16 %v124, %v123
    %v151 = vpack.c.b16 %v126, %v125
    %v152 = vpack.c.b16 %v128, %v127
    %v153 = vpack.c.b16 %v130, %v129
    %v154 = vpack.c.b16 %v132, %v131
    %v155 = vpack.c.b16 %v134, %v133
    %v156 = vpack.c.b16 %v136, %v135
    %v157 = vpack.c.b16 %v138, %v137
    %v158 = vpack.c.b16 %v140, %v139
    %v163 = vunpack.c.l.b16 %v29
    %v164 = vunpack.c.l.b16 %v30
    %v165 = vunpack.c.l.b16 %v31
    %v166 = vunpack.c.l.b16 %v32
    %v167 = vpack.c.b16 %v164, %v163
    %v168 = vpack.c.b16 %v166, %v165
    %vm170 = vcmask 203776
    %v172 = vsel %vm170, %v141, 0
    %v175 = vsel %vm170, %v142, 0
    %v178 = vsel %vm170, %v143, 0
    %v181 = vsel %vm170, %v144, 0
    %v184 = vsel %vm170, %v145, 0
    %v187 = vsel %vm170, %v146, 0
    %v190 = vsel %vm170, %v147, 0
    %v193 = vsel %vm170, %v148, 0
    %v196 = vsel %vm170, %v149, 0
    %v199 = vsel %vm170, %v150, 0
    %v202 = vsel %vm170, %v151, 0
    %v205 = vsel %vm170, %v152, 0
    %v208 = vsel %vm170, %v153, 0
    %v211 = vsel %vm170, %v154, 0
    %v214 = vsel %vm170, %v155, 0
    %v217 = vsel %vm170, %v156, 0
    %v220 = vsel %vm170, %v157, 0
    %v223 = vsel %vm170, %v158, 0
    %vm225 = vcmask 1043456
    %vm226 = vcmask 1044480
    %v227 = vsel %vm225, 4294967295, 65535
    %v228 = vsel %vm226, %v227, 0
    %v230 = vand.u32 %v168, %v228
    %232 = vmatpush.bf16.msra.mxu0 0
    %233 = vmatpush.bf16.msra.mxu0 0
    %234 = vmatpush.bf16.msra.mxu0 0
    %235 = vmatpush.bf16.msra.mxu0 0
    %236 = vmatpush.bf16.msra.mxu0 0
    %237 = vmatpush.bf16.msra.mxu0 0
    %238 = vmatpush.bf16.msra.mxu0 %v230
    %239 = vmatpush.bf16.msra.mxu0 %v167
    %240 = vmatmul.bf16.gmra.mxu0 %v172
    %v241 = vpop.f32.mrf.mxu0
    %v242 = vadd.f32 0.0, %v241
    %v243 = vpop.f32.mrf.mxu0
    %v244 = vadd.f32 0.0, %v243
    %245 = vmatmul.bf16.gmra.mxu0 %v175
    %v246 = vpop.f32.mrf.mxu0
    %v247 = vadd.f32 0.0, %v246
    %v248 = vpop.f32.mrf.mxu0
    %v249 = vadd.f32 0.0, %v248
    %250 = vmatmul.bf16.gmra.mxu0 %v178
    %v251 = vpop.f32.mrf.mxu0
    %v252 = vadd.f32 0.0, %v251
    %v253 = vpop.f32.mrf.mxu0
    %v254 = vadd.f32 0.0, %v253
    %255 = vmatmul.bf16.gmra.mxu0 %v181
    %v256 = vpop.f32.mrf.mxu0
    %v257 = vadd.f32 0.0, %v256
    %v258 = vpop.f32.mrf.mxu0
    %v259 = vadd.f32 0.0, %v258
    %260 = vmatmul.bf16.gmra.mxu0 %v184
    %v261 = vpop.f32.mrf.mxu0
    %v262 = vadd.f32 0.0, %v261
    %v263 = vpop.f32.mrf.mxu0
    %v264 = vadd.f32 0.0, %v263
    %265 = vmatmul.bf16.gmra.mxu0 %v187
    %v266 = vpop.f32.mrf.mxu0
    %v267 = vadd.f32 0.0, %v266
    %v268 = vpop.f32.mrf.mxu0
    %v269 = vadd.f32 0.0, %v268
    %270 = vmatmul.bf16.gmra.mxu0 %v190
    %v271 = vpop.f32.mrf.mxu0
    %v272 = vadd.f32 0.0, %v271
    %v273 = vpop.f32.mrf.mxu0
    %v274 = vadd.f32 0.0, %v273
    %275 = vmatmul.bf16.gmra.mxu0 %v193
    %v276 = vpop.f32.mrf.mxu0
    %v277 = vadd.f32 0.0, %v276
    %v278 = vpop.f32.mrf.mxu0
    %v279 = vadd.f32 0.0, %v278
    %280 = vmatmul.bf16.gmra.mxu0 %v196
    %v281 = vpop.f32.mrf.mxu0
    %v282 = vadd.f32 0.0, %v281
    %v283 = vpop.f32.mrf.mxu0
    %v284 = vadd.f32 0.0, %v283
    %285 = vmatmul.bf16.gmra.mxu0 %v199
    %v286 = vpop.f32.mrf.mxu0
    %v287 = vadd.f32 0.0, %v286
    %v288 = vpop.f32.mrf.mxu0
    %v289 = vadd.f32 0.0, %v288
    %290 = vmatmul.bf16.gmra.mxu0 %v202
    %v291 = vpop.f32.mrf.mxu0
    %v292 = vadd.f32 0.0, %v291
    %v293 = vpop.f32.mrf.mxu0
    %v294 = vadd.f32 0.0, %v293
    %295 = vmatmul.bf16.gmra.mxu0 %v205
    %v296 = vpop.f32.mrf.mxu0
    %v297 = vadd.f32 0.0, %v296
    %v298 = vpop.f32.mrf.mxu0
    %v299 = vadd.f32 0.0, %v298
    %300 = vmatmul.bf16.gmra.mxu0 %v208
    %v301 = vpop.f32.mrf.mxu0
    %v302 = vadd.f32 0.0, %v301
    %v303 = vpop.f32.mrf.mxu0
    %v304 = vadd.f32 0.0, %v303
    %305 = vmatmul.bf16.gmra.mxu0 %v211
    %v306 = vpop.f32.mrf.mxu0
    %v307 = vadd.f32 0.0, %v306
    %v308 = vpop.f32.mrf.mxu0
    %v309 = vadd.f32 0.0, %v308
    %310 = vmatmul.bf16.gmra.mxu0 %v214
    %v311 = vpop.f32.mrf.mxu0
    %v312 = vadd.f32 0.0, %v311
    %v313 = vpop.f32.mrf.mxu0
    %v314 = vadd.f32 0.0, %v313
    %315 = vmatmul.bf16.gmra.mxu0 %v217
    %v316 = vpop.f32.mrf.mxu0
    %v317 = vadd.f32 0.0, %v316
    %v318 = vpop.f32.mrf.mxu0
    %v319 = vadd.f32 0.0, %v318
    %320 = vmatmul.bf16.gmra.mxu0 %v220
    %v321 = vpop.f32.mrf.mxu0
    %v322 = vadd.f32 0.0, %v321
    %v323 = vpop.f32.mrf.mxu0
    %v324 = vadd.f32 0.0, %v323
    %325 = vmatmul.bf16.gmra.mxu0 %v223
    %v326 = vpop.f32.mrf.mxu0
    %v327 = vadd.f32 0.0, %v326
    %v328 = vpop.f32.mrf.mxu0
    %v329 = vadd.f32 0.0, %v328
    %330 = vdwg.mxu0
    %s331 = scalar_lea.vmem %s0, 144
    %v332 = vld [vmem:[%s331] sm:$0xf]
    %v333 = vld [vmem:[%s331 + $0x4] sm:$0xf]
    %v334 = vld [vmem:[%s331 + $0x8] sm:$0xf]
    %v335 = vld [vmem:[%s331 + $0xc] sm:$0xf]
    %v336 = vld [vmem:[%s331 + $0x10] sm:$0xf]
    %v337 = vld [vmem:[%s331 + $0x14] sm:$0xf]
    %v338 = vld [vmem:[%s331 + $0x18] sm:$0xf]
    %v339 = vld [vmem:[%s331 + $0x1c] sm:$0xf]
    %v340 = vld [vmem:[%s331 + $0x20] sm:$0xf]
    %v341 = vld [vmem:[%s331 + $0x24] sm:$0xf]
    %v342 = vld [vmem:[%s331 + $0x28] sm:$0xf]
    %v343 = vld [vmem:[%s331 + $0x2c] sm:$0xf]
    %v344 = vld [vmem:[%s331 + $0x30] sm:$0xf]
    %v345 = vld [vmem:[%s331 + $0x34] sm:$0xf]
    %v346 = vld [vmem:[%s331 + $0x38] sm:$0xf]
    %v347 = vld [vmem:[%s331 + $0x3c] sm:$0xf]
    %v348 = vld [vmem:[%s331 + $0x40] sm:$0xf]
    %v349 = vld [vmem:[%s331 + $0x44] sm:$0xf]
    %v350 = vld [vmem:[%s331 + $0x48] sm:$0xf]
    %v351 = vld [vmem:[%s331 + $0x4c] sm:$0xf]
    %v352 = vld [vmem:[%s331 + $0x50] sm:$0xf]
    %v353 = vld [vmem:[%s331 + $0x54] sm:$0xf]
    %v354 = vld [vmem:[%s331 + $0x58] sm:$0xf]
    %v355 = vld [vmem:[%s331 + $0x5c] sm:$0xf]
    %v356 = vld [vmem:[%s331 + $0x60] sm:$0xf]
    %v357 = vld [vmem:[%s331 + $0x64] sm:$0xf]
    %v358 = vld [vmem:[%s331 + $0x68] sm:$0xf]
    %v359 = vld [vmem:[%s331 + $0x6c] sm:$0xf]
    %v360 = vld [vmem:[%s331 + $0x70] sm:$0xf]
    %v361 = vld [vmem:[%s331 + $0x74] sm:$0xf]
    %v362 = vld [vmem:[%s331 + $0x78] sm:$0xf]
    %v363 = vld [vmem:[%s331 + $0x7c] sm:$0xf]
    %v364 = vld [vmem:[%s331 + $0x80] sm:$0xf]
    %v365 = vld [vmem:[%s331 + $0x84] sm:$0xf]
    %v366 = vld [vmem:[%s331 + $0x88] sm:$0xf]
    %v367 = vld [vmem:[%s331 + $0x8c] sm:$0xf]
    %v404 = vunpack.c.l.b16 %v332
    %v405 = vunpack.c.l.b16 %v333
    %v406 = vunpack.c.l.b16 %v334
    %v407 = vunpack.c.l.b16 %v335
    %v408 = vunpack.c.l.b16 %v336
    %v409 = vunpack.c.l.b16 %v337
    %v410 = vunpack.c.l.b16 %v338
    %v411 = vunpack.c.l.b16 %v339
    %v412 = vunpack.c.l.b16 %v340
    %v413 = vunpack.c.l.b16 %v341
    %v414 = vunpack.c.l.b16 %v342
    %v415 = vunpack.c.l.b16 %v343
    %v416 = vunpack.c.l.b16 %v344
    %v417 = vunpack.c.l.b16 %v345
    %v418 = vunpack.c.l.b16 %v346
    %v419 = vunpack.c.l.b16 %v347
    %v420 = vunpack.c.l.b16 %v348
    %v421 = vunpack.c.l.b16 %v349
    %v422 = vunpack.c.l.b16 %v350
    %v423 = vunpack.c.l.b16 %v351
    %v424 = vunpack.c.l.b16 %v352
    %v425 = vunpack.c.l.b16 %v353
    %v426 = vunpack.c.l.b16 %v354
    %v427 = vunpack.c.l.b16 %v355
    %v428 = vunpack.c.l.b16 %v356
    %v429 = vunpack.c.l.b16 %v357
    %v430 = vunpack.c.l.b16 %v358
    %v431 = vunpack.c.l.b16 %v359
    %v432 = vunpack.c.l.b16 %v360
    %v433 = vunpack.c.l.b16 %v361
    %v434 = vunpack.c.l.b16 %v362
    %v435 = vunpack.c.l.b16 %v363
    %v436 = vunpack.c.l.b16 %v364
    %v437 = vunpack.c.l.b16 %v365
    %v438 = vunpack.c.l.b16 %v366
    %v439 = vunpack.c.l.b16 %v367
    %v440 = vpack.c.b16 %v405, %v404
    %v441 = vpack.c.b16 %v407, %v406
    %v442 = vpack.c.b16 %v409, %v408
    %v443 = vpack.c.b16 %v411, %v410
    %v444 = vpack.c.b16 %v413, %v412
    %v445 = vpack.c.b16 %v415, %v414
    %v446 = vpack.c.b16 %v417, %v416
    %v447 = vpack.c.b16 %v419, %v418
    %v448 = vpack.c.b16 %v421, %v420
    %v449 = vpack.c.b16 %v423, %v422
    %v450 = vpack.c.b16 %v425, %v424
    %v451 = vpack.c.b16 %v427, %v426
    %v452 = vpack.c.b16 %v429, %v428
    %v453 = vpack.c.b16 %v431, %v430
    %v454 = vpack.c.b16 %v433, %v432
    %v455 = vpack.c.b16 %v435, %v434
    %v456 = vpack.c.b16 %v437, %v436
    %v457 = vpack.c.b16 %v439, %v438
    %v459 = vsel %vm170, %v440, 0
    %v462 = vsel %vm170, %v441, 0
    %v465 = vsel %vm170, %v442, 0
    %v468 = vsel %vm170, %v443, 0
    %v471 = vsel %vm170, %v444, 0
    %v474 = vsel %vm170, %v445, 0
    %v477 = vsel %vm170, %v446, 0
    %v480 = vsel %vm170, %v447, 0
    %v483 = vsel %vm170, %v448, 0
    %v486 = vsel %vm170, %v449, 0
    %v489 = vsel %vm170, %v450, 0
    %v492 = vsel %vm170, %v451, 0
    %v495 = vsel %vm170, %v452, 0
    %v498 = vsel %vm170, %v453, 0
    %v501 = vsel %vm170, %v454, 0
    %v504 = vsel %vm170, %v455, 0
    %v507 = vsel %vm170, %v456, 0
    %v510 = vsel %vm170, %v457, 0
    %512 = vmatpush.bf16.msra.mxu0 0
    %513 = vmatpush.bf16.msra.mxu0 0
    %514 = vmatpush.bf16.msra.mxu0 0
    %515 = vmatpush.bf16.msra.mxu0 0
    %516 = vmatpush.bf16.msra.mxu0 0
    %517 = vmatpush.bf16.msra.mxu0 0
    %518 = vmatpush.bf16.msra.mxu0 %v230
    %519 = vmatpush.bf16.msra.mxu0 %v167
    %520 = vmatmul.bf16.gmra.mxu0 %v459
    %v521 = vpop.f32.mrf.mxu0
    %v522 = vadd.f32 0.0, %v521
    %v523 = vpop.f32.mrf.mxu0
    %v524 = vadd.f32 0.0, %v523
    %525 = vmatmul.bf16.gmra.mxu0 %v462
    %v526 = vpop.f32.mrf.mxu0
    %v527 = vadd.f32 0.0, %v526
    %v528 = vpop.f32.mrf.mxu0
    %v529 = vadd.f32 0.0, %v528
    %530 = vmatmul.bf16.gmra.mxu0 %v465
    %v531 = vpop.f32.mrf.mxu0
    %v532 = vadd.f32 0.0, %v531
    %v533 = vpop.f32.mrf.mxu0
    %v534 = vadd.f32 0.0, %v533
    %535 = vmatmul.bf16.gmra.mxu0 %v468
    %v536 = vpop.f32.mrf.mxu0
    %v537 = vadd.f32 0.0, %v536
    %v538 = vpop.f32.mrf.mxu0
    %v539 = vadd.f32 0.0, %v538
    %540 = vmatmul.bf16.gmra.mxu0 %v471
    %v541 = vpop.f32.mrf.mxu0
    %v542 = vadd.f32 0.0, %v541
    %v543 = vpop.f32.mrf.mxu0
    %v544 = vadd.f32 0.0, %v543
    %545 = vmatmul.bf16.gmra.mxu0 %v474
    %v546 = vpop.f32.mrf.mxu0
    %v547 = vadd.f32 0.0, %v546
    %v548 = vpop.f32.mrf.mxu0
    %v549 = vadd.f32 0.0, %v548
    %550 = vmatmul.bf16.gmra.mxu0 %v477
    %v551 = vpop.f32.mrf.mxu0
    %v552 = vadd.f32 0.0, %v551
    %v553 = vpop.f32.mrf.mxu0
    %v554 = vadd.f32 0.0, %v553
    %555 = vmatmul.bf16.gmra.mxu0 %v480
    %v556 = vpop.f32.mrf.mxu0
    %v557 = vadd.f32 0.0, %v556
    %v558 = vpop.f32.mrf.mxu0
    %v559 = vadd.f32 0.0, %v558
    %560 = vmatmul.bf16.gmra.mxu0 %v483
    %v561 = vpop.f32.mrf.mxu0
    %v562 = vadd.f32 0.0, %v561
    %v563 = vpop.f32.mrf.mxu0
    %v564 = vadd.f32 0.0, %v563
    %565 = vmatmul.bf16.gmra.mxu0 %v486
    %v566 = vpop.f32.mrf.mxu0
    %v567 = vadd.f32 0.0, %v566
    %v568 = vpop.f32.mrf.mxu0
    %v569 = vadd.f32 0.0, %v568
    %570 = vmatmul.bf16.gmra.mxu0 %v489
    %v571 = vpop.f32.mrf.mxu0
    %v572 = vadd.f32 0.0, %v571
    %v573 = vpop.f32.mrf.mxu0
    %v574 = vadd.f32 0.0, %v573
    %575 = vmatmul.bf16.gmra.mxu0 %v492
    %v576 = vpop.f32.mrf.mxu0
    %v577 = vadd.f32 0.0, %v576
    %v578 = vpop.f32.mrf.mxu0
    %v579 = vadd.f32 0.0, %v578
    %580 = vmatmul.bf16.gmra.mxu0 %v495
    %v581 = vpop.f32.mrf.mxu0
    %v582 = vadd.f32 0.0, %v581
    %v583 = vpop.f32.mrf.mxu0
    %v584 = vadd.f32 0.0, %v583
    %585 = vmatmul.bf16.gmra.mxu0 %v498
    %v586 = vpop.f32.mrf.mxu0
    %v587 = vadd.f32 0.0, %v586
    %v588 = vpop.f32.mrf.mxu0
    %v589 = vadd.f32 0.0, %v588
    %590 = vmatmul.bf16.gmra.mxu0 %v501
    %v591 = vpop.f32.mrf.mxu0
    %v592 = vadd.f32 0.0, %v591
    %v593 = vpop.f32.mrf.mxu0
    %v594 = vadd.f32 0.0, %v593
    %595 = vmatmul.bf16.gmra.mxu0 %v504
    %v596 = vpop.f32.mrf.mxu0
    %v597 = vadd.f32 0.0, %v596
    %v598 = vpop.f32.mrf.mxu0
    %v599 = vadd.f32 0.0, %v598
    %600 = vmatmul.bf16.gmra.mxu0 %v507
    %v601 = vpop.f32.mrf.mxu0
    %v602 = vadd.f32 0.0, %v601
    %v603 = vpop.f32.mrf.mxu0
    %v604 = vadd.f32 0.0, %v603
    %605 = vmatmul.bf16.gmra.mxu0 %v510
    %v606 = vpop.f32.mrf.mxu0
    %v607 = vadd.f32 0.0, %v606
    %v608 = vpop.f32.mrf.mxu0
    %v609 = vadd.f32 0.0, %v608
    %610 = vdwg.mxu0
    %v611 = vmax.f32 %v242, %v522
    %v612 = vmax.f32 %v244, %v524
    %v613 = vmax.f32 %v247, %v527
    %v614 = vmax.f32 %v249, %v529
    %v615 = vmax.f32 %v252, %v532
    %v616 = vmax.f32 %v254, %v534
    %v617 = vmax.f32 %v257, %v537
    %v618 = vmax.f32 %v259, %v539
    %v619 = vmax.f32 %v262, %v542
    %v620 = vmax.f32 %v264, %v544
    %v621 = vmax.f32 %v267, %v547
    %v622 = vmax.f32 %v269, %v549
    %v623 = vmax.f32 %v272, %v552
    %v624 = vmax.f32 %v274, %v554
    %v625 = vmax.f32 %v277, %v557
    %v626 = vmax.f32 %v279, %v559
    %v627 = vmax.f32 %v282, %v562
    %v628 = vmax.f32 %v284, %v564
    %v629 = vmax.f32 %v287, %v567
    %v630 = vmax.f32 %v289, %v569
    %v631 = vmax.f32 %v292, %v572
    %v632 = vmax.f32 %v294, %v574
    %v633 = vmax.f32 %v297, %v577
    %v634 = vmax.f32 %v299, %v579
    %v635 = vmax.f32 %v302, %v582
    %v636 = vmax.f32 %v304, %v584
    %v637 = vmax.f32 %v307, %v587
    %v638 = vmax.f32 %v309, %v589
    %v639 = vmax.f32 %v312, %v592
    %v640 = vmax.f32 %v314, %v594
    %v641 = vmax.f32 %v317, %v597
    %v642 = vmax.f32 %v319, %v599
    %v643 = vmax.f32 %v322, %v602
    %v644 = vmax.f32 %v324, %v604
    %v645 = vmax.f32 %v327, %v607
    %v646 = vmax.f32 %v329, %v609
    %s647 = scalar_lea.vmem %s0, 288
    %v648 = vld [vmem:[%s647] sm:$0xf]
    %v649 = vld [vmem:[%s647 + $0x4] sm:$0xf]
    %v650 = vld [vmem:[%s647 + $0x8] sm:$0xf]
    %v651 = vld [vmem:[%s647 + $0xc] sm:$0xf]
    %v652 = vld [vmem:[%s647 + $0x10] sm:$0xf]
    %v653 = vld [vmem:[%s647 + $0x14] sm:$0xf]
    %v654 = vld [vmem:[%s647 + $0x18] sm:$0xf]
    %v655 = vld [vmem:[%s647 + $0x1c] sm:$0xf]
    %v656 = vld [vmem:[%s647 + $0x20] sm:$0xf]
    %v657 = vld [vmem:[%s647 + $0x24] sm:$0xf]
    %v658 = vld [vmem:[%s647 + $0x28] sm:$0xf]
    %v659 = vld [vmem:[%s647 + $0x2c] sm:$0xf]
    %v660 = vld [vmem:[%s647 + $0x30] sm:$0xf]
    %v661 = vld [vmem:[%s647 + $0x34] sm:$0xf]
    %v662 = vld [vmem:[%s647 + $0x38] sm:$0xf]
    %v663 = vld [vmem:[%s647 + $0x3c] sm:$0xf]
    %v664 = vld [vmem:[%s647 + $0x40] sm:$0xf]
    %v665 = vld [vmem:[%s647 + $0x44] sm:$0xf]
    %v666 = vld [vmem:[%s647 + $0x48] sm:$0xf]
    %v667 = vld [vmem:[%s647 + $0x4c] sm:$0xf]
    %v668 = vld [vmem:[%s647 + $0x50] sm:$0xf]
    %v669 = vld [vmem:[%s647 + $0x54] sm:$0xf]
    %v670 = vld [vmem:[%s647 + $0x58] sm:$0xf]
    %v671 = vld [vmem:[%s647 + $0x5c] sm:$0xf]
    %v672 = vld [vmem:[%s647 + $0x60] sm:$0xf]
    %v673 = vld [vmem:[%s647 + $0x64] sm:$0xf]
    %v674 = vld [vmem:[%s647 + $0x68] sm:$0xf]
    %v675 = vld [vmem:[%s647 + $0x6c] sm:$0xf]
    %v676 = vld [vmem:[%s647 + $0x70] sm:$0xf]
    %v677 = vld [vmem:[%s647 + $0x74] sm:$0xf]
    %v678 = vld [vmem:[%s647 + $0x78] sm:$0xf]
    %v679 = vld [vmem:[%s647 + $0x7c] sm:$0xf]
    %v680 = vld [vmem:[%s647 + $0x80] sm:$0xf]
    %v681 = vld [vmem:[%s647 + $0x84] sm:$0xf]
    %v682 = vld [vmem:[%s647 + $0x88] sm:$0xf]
    %v683 = vld [vmem:[%s647 + $0x8c] sm:$0xf]
    %v720 = vunpack.c.l.b16 %v648
    %v721 = vunpack.c.l.b16 %v649
    %v722 = vunpack.c.l.b16 %v650
    %v723 = vunpack.c.l.b16 %v651
    %v724 = vunpack.c.l.b16 %v652
    %v725 = vunpack.c.l.b16 %v653
    %v726 = vunpack.c.l.b16 %v654
    %v727 = vunpack.c.l.b16 %v655
    %v728 = vunpack.c.l.b16 %v656
    %v729 = vunpack.c.l.b16 %v657
    %v730 = vunpack.c.l.b16 %v658
    %v731 = vunpack.c.l.b16 %v659
    %v732 = vunpack.c.l.b16 %v660
    %v733 = vunpack.c.l.b16 %v661
    %v734 = vunpack.c.l.b16 %v662
    %v735 = vunpack.c.l.b16 %v663
    %v736 = vunpack.c.l.b16 %v664
    %v737 = vunpack.c.l.b16 %v665
    %v738 = vunpack.c.l.b16 %v666
    %v739 = vunpack.c.l.b16 %v667
    %v740 = vunpack.c.l.b16 %v668
    %v741 = vunpack.c.l.b16 %v669
    %v742 = vunpack.c.l.b16 %v670
    %v743 = vunpack.c.l.b16 %v671
    %v744 = vunpack.c.l.b16 %v672
    %v745 = vunpack.c.l.b16 %v673
    %v746 = vunpack.c.l.b16 %v674
    %v747 = vunpack.c.l.b16 %v675
    %v748 = vunpack.c.l.b16 %v676
    %v749 = vunpack.c.l.b16 %v677
    %v750 = vunpack.c.l.b16 %v678
    %v751 = vunpack.c.l.b16 %v679
    %v752 = vunpack.c.l.b16 %v680
    %v753 = vunpack.c.l.b16 %v681
    %v754 = vunpack.c.l.b16 %v682
    %v755 = vunpack.c.l.b16 %v683
    %v756 = vpack.c.b16 %v721, %v720
    %v757 = vpack.c.b16 %v723, %v722
    %v758 = vpack.c.b16 %v725, %v724
    %v759 = vpack.c.b16 %v727, %v726
    %v760 = vpack.c.b16 %v729, %v728
    %v761 = vpack.c.b16 %v731, %v730
    %v762 = vpack.c.b16 %v733, %v732
    %v763 = vpack.c.b16 %v735, %v734
    %v764 = vpack.c.b16 %v737, %v736
    %v765 = vpack.c.b16 %v739, %v738
    %v766 = vpack.c.b16 %v741, %v740
    %v767 = vpack.c.b16 %v743, %v742
    %v768 = vpack.c.b16 %v745, %v744
    %v769 = vpack.c.b16 %v747, %v746
    %v770 = vpack.c.b16 %v749, %v748
    %v771 = vpack.c.b16 %v751, %v750
    %v772 = vpack.c.b16 %v753, %v752
    %v773 = vpack.c.b16 %v755, %v754
    %v775 = vsel %vm170, %v756, 0
    %v778 = vsel %vm170, %v757, 0
    %v781 = vsel %vm170, %v758, 0
    %v784 = vsel %vm170, %v759, 0
    %v787 = vsel %vm170, %v760, 0
    %v790 = vsel %vm170, %v761, 0
    %v793 = vsel %vm170, %v762, 0
    %v796 = vsel %vm170, %v763, 0
    %v799 = vsel %vm170, %v764, 0
    %v802 = vsel %vm170, %v765, 0
    %v805 = vsel %vm170, %v766, 0
    %v808 = vsel %vm170, %v767, 0
    %v811 = vsel %vm170, %v768, 0
    %v814 = vsel %vm170, %v769, 0
    %v817 = vsel %vm170, %v770, 0
    %v820 = vsel %vm170, %v771, 0
    %v823 = vsel %vm170, %v772, 0
    %v826 = vsel %vm170, %v773, 0
    %828 = vmatpush.bf16.msra.mxu0 0
    %829 = vmatpush.bf16.msra.mxu0 0
    %830 = vmatpush.bf16.msra.mxu0 0
    %831 = vmatpush.bf16.msra.mxu0 0
    %832 = vmatpush.bf16.msra.mxu0 0
    %833 = vmatpush.bf16.msra.mxu0 0
    %834 = vmatpush.bf16.msra.mxu0 %v230
    %835 = vmatpush.bf16.msra.mxu0 %v167
    %836 = vmatmul.bf16.gmra.mxu0 %v775
    %v837 = vpop.f32.mrf.mxu0
    %v838 = vadd.f32 0.0, %v837
    %v839 = vpop.f32.mrf.mxu0
    %v840 = vadd.f32 0.0, %v839
    %841 = vmatmul.bf16.gmra.mxu0 %v778
    %v842 = vpop.f32.mrf.mxu0
    %v843 = vadd.f32 0.0, %v842
    %v844 = vpop.f32.mrf.mxu0
    %v845 = vadd.f32 0.0, %v844
    %846 = vmatmul.bf16.gmra.mxu0 %v781
    %v847 = vpop.f32.mrf.mxu0
    %v848 = vadd.f32 0.0, %v847
    %v849 = vpop.f32.mrf.mxu0
    %v850 = vadd.f32 0.0, %v849
    %851 = vmatmul.bf16.gmra.mxu0 %v784
    %v852 = vpop.f32.mrf.mxu0
    %v853 = vadd.f32 0.0, %v852
    %v854 = vpop.f32.mrf.mxu0
    %v855 = vadd.f32 0.0, %v854
    %856 = vmatmul.bf16.gmra.mxu0 %v787
    %v857 = vpop.f32.mrf.mxu0
    %v858 = vadd.f32 0.0, %v857
    %v859 = vpop.f32.mrf.mxu0
    %v860 = vadd.f32 0.0, %v859
    %861 = vmatmul.bf16.gmra.mxu0 %v790
    %v862 = vpop.f32.mrf.mxu0
    %v863 = vadd.f32 0.0, %v862
    %v864 = vpop.f32.mrf.mxu0
    %v865 = vadd.f32 0.0, %v864
    %866 = vmatmul.bf16.gmra.mxu0 %v793
    %v867 = vpop.f32.mrf.mxu0
    %v868 = vadd.f32 0.0, %v867
    %v869 = vpop.f32.mrf.mxu0
    %v870 = vadd.f32 0.0, %v869
    %871 = vmatmul.bf16.gmra.mxu0 %v796
    %v872 = vpop.f32.mrf.mxu0
    %v873 = vadd.f32 0.0, %v872
    %v874 = vpop.f32.mrf.mxu0
    %v875 = vadd.f32 0.0, %v874
    %876 = vmatmul.bf16.gmra.mxu0 %v799
    %v877 = vpop.f32.mrf.mxu0
    %v878 = vadd.f32 0.0, %v877
    %v879 = vpop.f32.mrf.mxu0
    %v880 = vadd.f32 0.0, %v879
    %881 = vmatmul.bf16.gmra.mxu0 %v802
    %v882 = vpop.f32.mrf.mxu0
    %v883 = vadd.f32 0.0, %v882
    %v884 = vpop.f32.mrf.mxu0
    %v885 = vadd.f32 0.0, %v884
    %886 = vmatmul.bf16.gmra.mxu0 %v805
    %v887 = vpop.f32.mrf.mxu0
    %v888 = vadd.f32 0.0, %v887
    %v889 = vpop.f32.mrf.mxu0
    %v890 = vadd.f32 0.0, %v889
    %891 = vmatmul.bf16.gmra.mxu0 %v808
    %v892 = vpop.f32.mrf.mxu0
    %v893 = vadd.f32 0.0, %v892
    %v894 = vpop.f32.mrf.mxu0
    %v895 = vadd.f32 0.0, %v894
    %896 = vmatmul.bf16.gmra.mxu0 %v811
    %v897 = vpop.f32.mrf.mxu0
    %v898 = vadd.f32 0.0, %v897
    %v899 = vpop.f32.mrf.mxu0
    %v900 = vadd.f32 0.0, %v899
    %901 = vmatmul.bf16.gmra.mxu0 %v814
    %v902 = vpop.f32.mrf.mxu0
    %v903 = vadd.f32 0.0, %v902
    %v904 = vpop.f32.mrf.mxu0
    %v905 = vadd.f32 0.0, %v904
    %906 = vmatmul.bf16.gmra.mxu0 %v817
    %v907 = vpop.f32.mrf.mxu0
    %v908 = vadd.f32 0.0, %v907
    %v909 = vpop.f32.mrf.mxu0
    %v910 = vadd.f32 0.0, %v909
    %911 = vmatmul.bf16.gmra.mxu0 %v820
    %v912 = vpop.f32.mrf.mxu0
    %v913 = vadd.f32 0.0, %v912
    %v914 = vpop.f32.mrf.mxu0
    %v915 = vadd.f32 0.0, %v914
    %916 = vmatmul.bf16.gmra.mxu0 %v823
    %v917 = vpop.f32.mrf.mxu0
    %v918 = vadd.f32 0.0, %v917
    %v919 = vpop.f32.mrf.mxu0
    %v920 = vadd.f32 0.0, %v919
    %921 = vmatmul.bf16.gmra.mxu0 %v826
    %v922 = vpop.f32.mrf.mxu0
    %v923 = vadd.f32 0.0, %v922
    %v924 = vpop.f32.mrf.mxu0
    %v925 = vadd.f32 0.0, %v924
    %926 = vdwg.mxu0
    %v927 = vmax.f32 %v611, %v838
    %v928 = vmax.f32 %v612, %v840
    %v929 = vmax.f32 %v613, %v843
    %v930 = vmax.f32 %v614, %v845
    %v931 = vmax.f32 %v615, %v848
    %v932 = vmax.f32 %v616, %v850
    %v933 = vmax.f32 %v617, %v853
    %v934 = vmax.f32 %v618, %v855
    %v935 = vmax.f32 %v619, %v858
    %v936 = vmax.f32 %v620, %v860
    %v937 = vmax.f32 %v621, %v863
    %v938 = vmax.f32 %v622, %v865
    %v939 = vmax.f32 %v623, %v868
    %v940 = vmax.f32 %v624, %v870
    %v941 = vmax.f32 %v625, %v873
    %v942 = vmax.f32 %v626, %v875
    %v943 = vmax.f32 %v627, %v878
    %v944 = vmax.f32 %v628, %v880
    %v945 = vmax.f32 %v629, %v883
    %v946 = vmax.f32 %v630, %v885
    %v947 = vmax.f32 %v631, %v888
    %v948 = vmax.f32 %v632, %v890
    %v949 = vmax.f32 %v633, %v893
    %v950 = vmax.f32 %v634, %v895
    %v951 = vmax.f32 %v635, %v898
    %v952 = vmax.f32 %v636, %v900
    %v953 = vmax.f32 %v637, %v903
    %v954 = vmax.f32 %v638, %v905
    %v955 = vmax.f32 %v639, %v908
    %v956 = vmax.f32 %v640, %v910
    %v957 = vmax.f32 %v641, %v913
    %v958 = vmax.f32 %v642, %v915
    %v959 = vmax.f32 %v643, %v918
    %v960 = vmax.f32 %v644, %v920
    %v961 = vmax.f32 %v645, %v923
    %v962 = vmax.f32 %v646, %v925
    %s963 = scalar_lea.vmem %s0, 432
    %v964 = vld [vmem:[%s963] sm:$0xf]
    %v965 = vld [vmem:[%s963 + $0x4] sm:$0xf]
    %v966 = vld [vmem:[%s963 + $0x8] sm:$0xf]
    %v967 = vld [vmem:[%s963 + $0xc] sm:$0xf]
    %v968 = vld [vmem:[%s963 + $0x10] sm:$0xf]
    %v969 = vld [vmem:[%s963 + $0x14] sm:$0xf]
    %v970 = vld [vmem:[%s963 + $0x18] sm:$0xf]
    %v971 = vld [vmem:[%s963 + $0x1c] sm:$0xf]
    %v972 = vld [vmem:[%s963 + $0x20] sm:$0xf]
    %v973 = vld [vmem:[%s963 + $0x24] sm:$0xf]
    %v974 = vld [vmem:[%s963 + $0x28] sm:$0xf]
    %v975 = vld [vmem:[%s963 + $0x2c] sm:$0xf]
    %v976 = vld [vmem:[%s963 + $0x30] sm:$0xf]
    %v977 = vld [vmem:[%s963 + $0x34] sm:$0xf]
    %v978 = vld [vmem:[%s963 + $0x38] sm:$0xf]
    %v979 = vld [vmem:[%s963 + $0x3c] sm:$0xf]
    %v980 = vld [vmem:[%s963 + $0x40] sm:$0xf]
    %v981 = vld [vmem:[%s963 + $0x44] sm:$0xf]
    %v982 = vld [vmem:[%s963 + $0x48] sm:$0xf]
    %v983 = vld [vmem:[%s963 + $0x4c] sm:$0xf]
    %v984 = vld [vmem:[%s963 + $0x50] sm:$0xf]
    %v985 = vld [vmem:[%s963 + $0x54] sm:$0xf]
    %v986 = vld [vmem:[%s963 + $0x58] sm:$0xf]
    %v987 = vld [vmem:[%s963 + $0x5c] sm:$0xf]
    %v988 = vld [vmem:[%s963 + $0x60] sm:$0xf]
    %v989 = vld [vmem:[%s963 + $0x64] sm:$0xf]
    %v990 = vld [vmem:[%s963 + $0x68] sm:$0xf]
    %v991 = vld [vmem:[%s963 + $0x6c] sm:$0xf]
    %v992 = vld [vmem:[%s963 + $0x70] sm:$0xf]
    %v993 = vld [vmem:[%s963 + $0x74] sm:$0xf]
    %v994 = vld [vmem:[%s963 + $0x78] sm:$0xf]
    %v995 = vld [vmem:[%s963 + $0x7c] sm:$0xf]
    %v996 = vld [vmem:[%s963 + $0x80] sm:$0xf]
    %v997 = vld [vmem:[%s963 + $0x84] sm:$0xf]
    %v998 = vld [vmem:[%s963 + $0x88] sm:$0xf]
    %v999 = vld [vmem:[%s963 + $0x8c] sm:$0xf]
    %v1036 = vunpack.c.l.b16 %v964
    %v1037 = vunpack.c.l.b16 %v965
    %v1038 = vunpack.c.l.b16 %v966
    %v1039 = vunpack.c.l.b16 %v967
    %v1040 = vunpack.c.l.b16 %v968
    %v1041 = vunpack.c.l.b16 %v969
    %v1042 = vunpack.c.l.b16 %v970
    %v1043 = vunpack.c.l.b16 %v971
    %v1044 = vunpack.c.l.b16 %v972
    %v1045 = vunpack.c.l.b16 %v973
    %v1046 = vunpack.c.l.b16 %v974
    %v1047 = vunpack.c.l.b16 %v975
    %v1048 = vunpack.c.l.b16 %v976
    %v1049 = vunpack.c.l.b16 %v977
    %v1050 = vunpack.c.l.b16 %v978
    %v1051 = vunpack.c.l.b16 %v979
    %v1052 = vunpack.c.l.b16 %v980
    %v1053 = vunpack.c.l.b16 %v981
    %v1054 = vunpack.c.l.b16 %v982
    %v1055 = vunpack.c.l.b16 %v983
    %v1056 = vunpack.c.l.b16 %v984
    %v1057 = vunpack.c.l.b16 %v985
    %v1058 = vunpack.c.l.b16 %v986
    %v1059 = vunpack.c.l.b16 %v987
    %v1060 = vunpack.c.l.b16 %v988
    %v1061 = vunpack.c.l.b16 %v989
    %v1062 = vunpack.c.l.b16 %v990
    %v1063 = vunpack.c.l.b16 %v991
    %v1064 = vunpack.c.l.b16 %v992
    %v1065 = vunpack.c.l.b16 %v993
    %v1066 = vunpack.c.l.b16 %v994
    %v1067 = vunpack.c.l.b16 %v995
    %v1068 = vunpack.c.l.b16 %v996
    %v1069 = vunpack.c.l.b16 %v997
    %v1070 = vunpack.c.l.b16 %v998
    %v1071 = vunpack.c.l.b16 %v999
    %v1072 = vpack.c.b16 %v1037, %v1036
    %v1073 = vpack.c.b16 %v1039, %v1038
    %v1074 = vpack.c.b16 %v1041, %v1040
    %v1075 = vpack.c.b16 %v1043, %v1042
    %v1076 = vpack.c.b16 %v1045, %v1044
    %v1077 = vpack.c.b16 %v1047, %v1046
    %v1078 = vpack.c.b16 %v1049, %v1048
    %v1079 = vpack.c.b16 %v1051, %v1050
    %v1080 = vpack.c.b16 %v1053, %v1052
    %v1081 = vpack.c.b16 %v1055, %v1054
    %v1082 = vpack.c.b16 %v1057, %v1056
    %v1083 = vpack.c.b16 %v1059, %v1058
    %v1084 = vpack.c.b16 %v1061, %v1060
    %v1085 = vpack.c.b16 %v1063, %v1062
    %v1086 = vpack.c.b16 %v1065, %v1064
    %v1087 = vpack.c.b16 %v1067, %v1066
    %v1088 = vpack.c.b16 %v1069, %v1068
    %v1089 = vpack.c.b16 %v1071, %v1070
    %v1091 = vsel %vm170, %v1072, 0
    %v1094 = vsel %vm170, %v1073, 0
    %v1097 = vsel %vm170, %v1074, 0
    %v1100 = vsel %vm170, %v1075, 0
    %v1103 = vsel %vm170, %v1076, 0
    %v1106 = vsel %vm170, %v1077, 0
    %v1109 = vsel %vm170, %v1078, 0
    %v1112 = vsel %vm170, %v1079, 0
    %v1115 = vsel %vm170, %v1080, 0
    %v1118 = vsel %vm170, %v1081, 0
    %v1121 = vsel %vm170, %v1082, 0
    %v1124 = vsel %vm170, %v1083, 0
    %v1127 = vsel %vm170, %v1084, 0
    %v1130 = vsel %vm170, %v1085, 0
    %v1133 = vsel %vm170, %v1086, 0
    %v1136 = vsel %vm170, %v1087, 0
    %v1139 = vsel %vm170, %v1088, 0
    %v1142 = vsel %vm170, %v1089, 0
    %1144 = vmatpush.bf16.msra.mxu0 0
    %1145 = vmatpush.bf16.msra.mxu0 0
    %1146 = vmatpush.bf16.msra.mxu0 0
    %1147 = vmatpush.bf16.msra.mxu0 0
    %1148 = vmatpush.bf16.msra.mxu0 0
    %1149 = vmatpush.bf16.msra.mxu0 0
    %1150 = vmatpush.bf16.msra.mxu0 %v230
    %1151 = vmatpush.bf16.msra.mxu0 %v167
    %1152 = vmatmul.bf16.gmra.mxu0 %v1091
    %v1153 = vpop.f32.mrf.mxu0
    %v1154 = vadd.f32 0.0, %v1153
    %v1155 = vpop.f32.mrf.mxu0
    %v1156 = vadd.f32 0.0, %v1155
    %1157 = vmatmul.bf16.gmra.mxu0 %v1094
    %v1158 = vpop.f32.mrf.mxu0
    %v1159 = vadd.f32 0.0, %v1158
    %v1160 = vpop.f32.mrf.mxu0
    %v1161 = vadd.f32 0.0, %v1160
    %1162 = vmatmul.bf16.gmra.mxu0 %v1097
    %v1163 = vpop.f32.mrf.mxu0
    %v1164 = vadd.f32 0.0, %v1163
    %v1165 = vpop.f32.mrf.mxu0
    %v1166 = vadd.f32 0.0, %v1165
    %1167 = vmatmul.bf16.gmra.mxu0 %v1100
    %v1168 = vpop.f32.mrf.mxu0
    %v1169 = vadd.f32 0.0, %v1168
    %v1170 = vpop.f32.mrf.mxu0
    %v1171 = vadd.f32 0.0, %v1170
    %1172 = vmatmul.bf16.gmra.mxu0 %v1103
    %v1173 = vpop.f32.mrf.mxu0
    %v1174 = vadd.f32 0.0, %v1173
    %v1175 = vpop.f32.mrf.mxu0
    %v1176 = vadd.f32 0.0, %v1175
    %1177 = vmatmul.bf16.gmra.mxu0 %v1106
    %v1178 = vpop.f32.mrf.mxu0
    %v1179 = vadd.f32 0.0, %v1178
    %v1180 = vpop.f32.mrf.mxu0
    %v1181 = vadd.f32 0.0, %v1180
    %1182 = vmatmul.bf16.gmra.mxu0 %v1109
    %v1183 = vpop.f32.mrf.mxu0
    %v1184 = vadd.f32 0.0, %v1183
    %v1185 = vpop.f32.mrf.mxu0
    %v1186 = vadd.f32 0.0, %v1185
    %1187 = vmatmul.bf16.gmra.mxu0 %v1112
    %v1188 = vpop.f32.mrf.mxu0
    %v1189 = vadd.f32 0.0, %v1188
    %v1190 = vpop.f32.mrf.mxu0
    %v1191 = vadd.f32 0.0, %v1190
    %1192 = vmatmul.bf16.gmra.mxu0 %v1115
    %v1193 = vpop.f32.mrf.mxu0
    %v1194 = vadd.f32 0.0, %v1193
    %v1195 = vpop.f32.mrf.mxu0
    %v1196 = vadd.f32 0.0, %v1195
    %1197 = vmatmul.bf16.gmra.mxu0 %v1118
    %v1198 = vpop.f32.mrf.mxu0
    %v1199 = vadd.f32 0.0, %v1198
    %v1200 = vpop.f32.mrf.mxu0
    %v1201 = vadd.f32 0.0, %v1200
    %1202 = vmatmul.bf16.gmra.mxu0 %v1121
    %v1203 = vpop.f32.mrf.mxu0
    %v1204 = vadd.f32 0.0, %v1203
    %v1205 = vpop.f32.mrf.mxu0
    %v1206 = vadd.f32 0.0, %v1205
    %1207 = vmatmul.bf16.gmra.mxu0 %v1124
    %v1208 = vpop.f32.mrf.mxu0
    %v1209 = vadd.f32 0.0, %v1208
    %v1210 = vpop.f32.mrf.mxu0
    %v1211 = vadd.f32 0.0, %v1210
    %1212 = vmatmul.bf16.gmra.mxu0 %v1127
    %v1213 = vpop.f32.mrf.mxu0
    %v1214 = vadd.f32 0.0, %v1213
    %v1215 = vpop.f32.mrf.mxu0
    %v1216 = vadd.f32 0.0, %v1215
    %1217 = vmatmul.bf16.gmra.mxu0 %v1130
    %v1218 = vpop.f32.mrf.mxu0
    %v1219 = vadd.f32 0.0, %v1218
    %v1220 = vpop.f32.mrf.mxu0
    %v1221 = vadd.f32 0.0, %v1220
    %1222 = vmatmul.bf16.gmra.mxu0 %v1133
    %v1223 = vpop.f32.mrf.mxu0
    %v1224 = vadd.f32 0.0, %v1223
    %v1225 = vpop.f32.mrf.mxu0
    %v1226 = vadd.f32 0.0, %v1225
    %1227 = vmatmul.bf16.gmra.mxu0 %v1136
    %v1228 = vpop.f32.mrf.mxu0
    %v1229 = vadd.f32 0.0, %v1228
    %v1230 = vpop.f32.mrf.mxu0
    %v1231 = vadd.f32 0.0, %v1230
    %1232 = vmatmul.bf16.gmra.mxu0 %v1139
    %v1233 = vpop.f32.mrf.mxu0
    %v1234 = vadd.f32 0.0, %v1233
    %v1235 = vpop.f32.mrf.mxu0
    %v1236 = vadd.f32 0.0, %v1235
    %1237 = vmatmul.bf16.gmra.mxu0 %v1142
    %v1238 = vpop.f32.mrf.mxu0
    %v1239 = vadd.f32 0.0, %v1238
    %v1240 = vpop.f32.mrf.mxu0
    %v1241 = vadd.f32 0.0, %v1240
    %1242 = vdwg.mxu0
    %v1243 = vmax.f32 %v927, %v1154
    %v1244 = vmax.f32 %v928, %v1156
    %v1245 = vmax.f32 %v929, %v1159
    %v1246 = vmax.f32 %v930, %v1161
    %v1247 = vmax.f32 %v931, %v1164
    %v1248 = vmax.f32 %v932, %v1166
    %v1249 = vmax.f32 %v933, %v1169
    %v1250 = vmax.f32 %v934, %v1171
    %v1251 = vmax.f32 %v935, %v1174
    %v1252 = vmax.f32 %v936, %v1176
    %v1253 = vmax.f32 %v937, %v1179
    %v1254 = vmax.f32 %v938, %v1181
    %v1255 = vmax.f32 %v939, %v1184
    %v1256 = vmax.f32 %v940, %v1186
    %v1257 = vmax.f32 %v941, %v1189
    %v1258 = vmax.f32 %v942, %v1191
    %v1259 = vmax.f32 %v943, %v1194
    %v1260 = vmax.f32 %v944, %v1196
    %v1261 = vmax.f32 %v945, %v1199
    %v1262 = vmax.f32 %v946, %v1201
    %v1263 = vmax.f32 %v947, %v1204
    %v1264 = vmax.f32 %v948, %v1206
    %v1265 = vmax.f32 %v949, %v1209
    %v1266 = vmax.f32 %v950, %v1211
    %v1267 = vmax.f32 %v951, %v1214
    %v1268 = vmax.f32 %v952, %v1216
    %v1269 = vmax.f32 %v953, %v1219
    %v1270 = vmax.f32 %v954, %v1221
    %v1271 = vmax.f32 %v955, %v1224
    %v1272 = vmax.f32 %v956, %v1226
    %v1273 = vmax.f32 %v957, %v1229
    %v1274 = vmax.f32 %v958, %v1231
    %v1275 = vmax.f32 %v959, %v1234
    %v1276 = vmax.f32 %v960, %v1236
    %v1277 = vmax.f32 %v961, %v1239
    %v1278 = vmax.f32 %v962, %v1241
    %v1279 = vld [vmem:[#allocation2] sm:$0x1]
    %v1281 = vperm.slane %v1279, 0
    %v1283 = vadd.f32 %v1243, %v1281
    %v1284 = vadd.f32 %v1244, %v1281
    %v1285 = vadd.f32 %v1245, %v1281
    %v1286 = vadd.f32 %v1246, %v1281
    %v1287 = vadd.f32 %v1247, %v1281
    %v1288 = vadd.f32 %v1248, %v1281
    %v1289 = vadd.f32 %v1249, %v1281
    %v1290 = vadd.f32 %v1250, %v1281
    %v1291 = vadd.f32 %v1251, %v1281
    %v1292 = vadd.f32 %v1252, %v1281
    %v1293 = vadd.f32 %v1253, %v1281
    %v1294 = vadd.f32 %v1254, %v1281
    %v1295 = vadd.f32 %v1255, %v1281
    %v1296 = vadd.f32 %v1256, %v1281
    %v1297 = vadd.f32 %v1257, %v1281
    %v1298 = vadd.f32 %v1258, %v1281
    %v1299 = vadd.f32 %v1259, %v1281
    %v1300 = vadd.f32 %v1260, %v1281
    %v1301 = vadd.f32 %v1261, %v1281
    %v1302 = vadd.f32 %v1262, %v1281
    %v1303 = vadd.f32 %v1263, %v1281
    %v1304 = vadd.f32 %v1264, %v1281
    %v1305 = vadd.f32 %v1265, %v1281
    %v1306 = vadd.f32 %v1266, %v1281
    %v1307 = vadd.f32 %v1267, %v1281
    %v1308 = vadd.f32 %v1268, %v1281
    %v1309 = vadd.f32 %v1269, %v1281
    %v1310 = vadd.f32 %v1270, %v1281
    %v1311 = vadd.f32 %v1271, %v1281
    %v1312 = vadd.f32 %v1272, %v1281
    %v1313 = vadd.f32 %v1273, %v1281
    %v1314 = vadd.f32 %v1274, %v1281
    %v1315 = vadd.f32 %v1275, %v1281
    %v1316 = vadd.f32 %v1276, %v1281
    %v1317 = vadd.f32 %v1277, %v1281
    %v1318 = vadd.f32 %v1278, %v1281
    %v1319 = vmax.f32 %v1283, 0.0
    %v1320 = vmax.f32 %v1284, 0.0
    %v1321 = vmax.f32 %v1285, 0.0
    %v1322 = vmax.f32 %v1286, 0.0
    %v1323 = vmax.f32 %v1287, 0.0
    %v1324 = vmax.f32 %v1288, 0.0
    %v1325 = vmax.f32 %v1289, 0.0
    %v1326 = vmax.f32 %v1290, 0.0
    %v1327 = vmax.f32 %v1291, 0.0
    %v1328 = vmax.f32 %v1292, 0.0
    %v1329 = vmax.f32 %v1293, 0.0
    %v1330 = vmax.f32 %v1294, 0.0
    %v1331 = vmax.f32 %v1295, 0.0
    %v1332 = vmax.f32 %v1296, 0.0
    %v1333 = vmax.f32 %v1297, 0.0
    %v1334 = vmax.f32 %v1298, 0.0
    %v1335 = vmax.f32 %v1299, 0.0
    %v1336 = vmax.f32 %v1300, 0.0
    %v1337 = vmax.f32 %v1301, 0.0
    %v1338 = vmax.f32 %v1302, 0.0
    %v1339 = vmax.f32 %v1303, 0.0
    %v1340 = vmax.f32 %v1304, 0.0
    %v1341 = vmax.f32 %v1305, 0.0
    %v1342 = vmax.f32 %v1306, 0.0
    %v1343 = vmax.f32 %v1307, 0.0
    %v1344 = vmax.f32 %v1308, 0.0
    %v1345 = vmax.f32 %v1309, 0.0
    %v1346 = vmax.f32 %v1310, 0.0
    %v1347 = vmax.f32 %v1311, 0.0
    %v1348 = vmax.f32 %v1312, 0.0
    %v1349 = vmax.f32 %v1313, 0.0
    %v1350 = vmax.f32 %v1314, 0.0
    %v1351 = vmax.f32 %v1315, 0.0
    %v1352 = vmax.f32 %v1316, 0.0
    %v1353 = vmax.f32 %v1317, 0.0
    %v1354 = vmax.f32 %v1318, 0.0
    %v1355 = vpack.c.bf16 %v1319, %v1319
    %v1356 = vpack.c.bf16 %v1320, %v1320
    %v1357 = vpack.c.bf16 %v1321, %v1321
    %v1358 = vpack.c.bf16 %v1322, %v1322
    %v1359 = vpack.c.bf16 %v1323, %v1323
    %v1360 = vpack.c.bf16 %v1324, %v1324
    %v1361 = vpack.c.bf16 %v1325, %v1325
    %v1362 = vpack.c.bf16 %v1326, %v1326
    %v1363 = vpack.c.bf16 %v1327, %v1327
    %v1364 = vpack.c.bf16 %v1328, %v1328
    %v1365 = vpack.c.bf16 %v1329, %v1329
    %v1366 = vpack.c.bf16 %v1330, %v1330
    %v1367 = vpack.c.bf16 %v1331, %v1331
    %v1368 = vpack.c.bf16 %v1332, %v1332
    %v1369 = vpack.c.bf16 %v1333, %v1333
    %v1370 = vpack.c.bf16 %v1334, %v1334
    %v1371 = vpack.c.bf16 %v1335, %v1335
    %v1372 = vpack.c.bf16 %v1336, %v1336
    %v1373 = vpack.c.bf16 %v1337, %v1337
    %v1374 = vpack.c.bf16 %v1338, %v1338
    %v1375 = vpack.c.bf16 %v1339, %v1339
    %v1376 = vpack.c.bf16 %v1340, %v1340
    %v1377 = vpack.c.bf16 %v1341, %v1341
    %v1378 = vpack.c.bf16 %v1342, %v1342
    %v1379 = vpack.c.bf16 %v1343, %v1343
    %v1380 = vpack.c.bf16 %v1344, %v1344
    %v1381 = vpack.c.bf16 %v1345, %v1345
    %v1382 = vpack.c.bf16 %v1346, %v1346
    %v1383 = vpack.c.bf16 %v1347, %v1347
    %v1384 = vpack.c.bf16 %v1348, %v1348
    %v1385 = vpack.c.bf16 %v1349, %v1349
    %v1386 = vpack.c.bf16 %v1350, %v1350
    %v1387 = vpack.c.bf16 %v1351, %v1351
    %v1388 = vpack.c.bf16 %v1352, %v1352
    %v1389 = vpack.c.bf16 %v1353, %v1353
    %v1390 = vpack.c.bf16 %v1354, %v1354
    %vm1391 = vcmask 125952
    %1392 = vst.msk [vmem:[%s3] sm:$0xf] %vm1391, %v1355
    %1393 = vst.msk [vmem:[%s3 + $0x4] sm:$0xf] %vm1391, %v1356
    %1394 = vst.msk [vmem:[%s3 + $0x8] sm:$0xf] %vm1391, %v1357
    %1395 = vst.msk [vmem:[%s3 + $0xc] sm:$0xf] %vm1391, %v1358
    %1396 = vst.msk [vmem:[%s3 + $0x10] sm:$0xf] %vm1391, %v1359
    %1397 = vst.msk [vmem:[%s3 + $0x14] sm:$0xf] %vm1391, %v1360
    %1398 = vst.msk [vmem:[%s3 + $0x18] sm:$0xf] %vm1391, %v1361
    %1399 = vst.msk [vmem:[%s3 + $0x1c] sm:$0xf] %vm1391, %v1362
    %1400 = vst.msk [vmem:[%s3 + $0x20] sm:$0xf] %vm1391, %v1363
    %1401 = vst.msk [vmem:[%s3 + $0x24] sm:$0xf] %vm1391, %v1364
    %1402 = vst.msk [vmem:[%s3 + $0x28] sm:$0xf] %vm1391, %v1365
    %1403 = vst.msk [vmem:[%s3 + $0x2c] sm:$0xf] %vm1391, %v1366
    %1404 = vst.msk [vmem:[%s3 + $0x30] sm:$0xf] %vm1391, %v1367
    %1405 = vst.msk [vmem:[%s3 + $0x34] sm:$0xf] %vm1391, %v1368
    %1406 = vst.msk [vmem:[%s3 + $0x38] sm:$0xf] %vm1391, %v1369
    %1407 = vst.msk [vmem:[%s3 + $0x3c] sm:$0xf] %vm1391, %v1370
    %1408 = vst.msk [vmem:[%s3 + $0x40] sm:$0xf] %vm1391, %v1371
    %1409 = vst.msk [vmem:[%s3 + $0x44] sm:$0xf] %vm1391, %v1372
    %1410 = vst.msk [vmem:[%s3 + $0x48] sm:$0xf] %vm1391, %v1373
    %1411 = vst.msk [vmem:[%s3 + $0x4c] sm:$0xf] %vm1391, %v1374
    %1412 = vst.msk [vmem:[%s3 + $0x50] sm:$0xf] %vm1391, %v1375
    %1413 = vst.msk [vmem:[%s3 + $0x54] sm:$0xf] %vm1391, %v1376
    %1414 = vst.msk [vmem:[%s3 + $0x58] sm:$0xf] %vm1391, %v1377
    %1415 = vst.msk [vmem:[%s3 + $0x5c] sm:$0xf] %vm1391, %v1378
    %1416 = vst.msk [vmem:[%s3 + $0x60] sm:$0xf] %vm1391, %v1379
    %1417 = vst.msk [vmem:[%s3 + $0x64] sm:$0xf] %vm1391, %v1380
    %1418 = vst.msk [vmem:[%s3 + $0x68] sm:$0xf] %vm1391, %v1381
    %1419 = vst.msk [vmem:[%s3 + $0x6c] sm:$0xf] %vm1391, %v1382
    %1420 = vst.msk [vmem:[%s3 + $0x70] sm:$0xf] %vm1391, %v1383
    %1421 = vst.msk [vmem:[%s3 + $0x74] sm:$0xf] %vm1391, %v1384
    %1422 = vst.msk [vmem:[%s3 + $0x78] sm:$0xf] %vm1391, %v1385
    %1423 = vst.msk [vmem:[%s3 + $0x7c] sm:$0xf] %vm1391, %v1386
    %1424 = vst.msk [vmem:[%s3 + $0x80] sm:$0xf] %vm1391, %v1387
    %1425 = vst.msk [vmem:[%s3 + $0x84] sm:$0xf] %vm1391, %v1388
    %1426 = vst.msk [vmem:[%s3 + $0x88] sm:$0xf] %vm1391, %v1389
    %1427 = vst.msk [vmem:[%s3 + $0x8c] sm:$0xf] %vm1391, %v1390
    // Predicated region
    $region18: #{net_forward.2} parent=1 // pred_check
      _
    $region19: #{net_forward.2} parent=1 // pred_check_branch
      %1429 = sbr.rel (0) target = $region21
    $region20: #{net_forward.2} parent=1 // pred_region
      _
    $region21: #{net_forward.2} parent=1 // pred_fallthru
      _
    // Predicated region
    $region22: #{net_forward.2} parent=1 // pred_check
      _
    $region23: #{net_forward.2} parent=1 // pred_check_branch
      %1431 = sbr.rel (0) target = $region25
    $region24: #{net_forward.2} parent=1 // pred_region
      _
    $region25: #{net_forward.2} parent=1 // pred_fallthru
      _
    %1432 = vsyncpa [#allocation3], 1

// kernel: net_forward.3
$region0: #{net_forward.3}
  #allocation0 [shape = 'u32[]', space=smem, size = 0x4, offset = 0x4, fixed_abs, tag = 'smem constant byte address 0x4 - core index']
  #allocation1 [shape = 'u32[72,128]{1,0:T(1,128)}', space=vmem, size = 0x9000, scoped, tag = 'internal scratch']
  %s0 = inlined_call_operand.vmem [shape: bf16[4,16,16,256], index: 0, kind: input, shape index: {}]
  %s1 = inlined_call_operand.vmem [shape: bf16[256,128], index: 1, kind: input, shape index: {}]
  %s2 = inlined_call_operand.vmem [shape: f32[1,128], index: 2, kind: input, shape index: {}]
  %s3 = inlined_call_operand.vmem [shape: bf16[16,128,128], index: 3, kind: input, shape index: {}]
  %s4 = inlined_call_operand.vmem [shape: f32[1,128], index: 4, kind: input, shape index: {}]
  %s5 = inlined_call_operand.vmem [shape: bf16[128,128], index: 5, kind: input, shape index: {}]
  %s6 = inlined_call_operand.vmem [shape: f32[1,128], index: 6, kind: input, shape index: {}]
  %s7 = inlined_call_operand.vmem [shape: f32[16,128], index: 7, kind: output, shape index: {}]
  %s8 = sld [smem:[#allocation0]]
  $region38: #{net_forward.3} parent=0
    _
  %s10 = ssub.s32 1, %s8
  %s11 = scalar_select 0, %s10, %s8
  // Predicated region
  $region2: #{net_forward.3} parent=0 // pred_check
    _
  $region3: #{net_forward.3} parent=0 // pred_check_branch
    %13 = sbr.rel (0) target = $region5
  $region4: #{net_forward.3} parent=0 // pred_region
    _
  $region5: #{net_forward.3} parent=0 // pred_fallthru
    _
  // Predicated region
  $region6: #{net_forward.3} parent=0 // pred_check
    _
  $region7: #{net_forward.3} parent=0 // pred_check_branch
    %15 = sbr.rel (0) target = $region9
  $region8: #{net_forward.3} parent=0 // pred_region
    _
  $region9: #{net_forward.3} parent=0 // pred_fallthru
    _
  // Predicated region
  $region10: #{net_forward.3} parent=0 // pred_check
    _
  $region11: #{net_forward.3} parent=0 // pred_check_branch
    %17 = sbr.rel (0) target = $region13
  $region12: #{net_forward.3} parent=0 // pred_region
    _
  $region13: #{net_forward.3} parent=0 // pred_fallthru
    _
  // Predicated region
  $region14: #{net_forward.3} parent=0 // pred_check
    _
  $region15: #{net_forward.3} parent=0 // pred_check_branch
    %19 = sbr.rel (0) target = $region17
  $region16: #{net_forward.3} parent=0 // pred_region
    _
  $region17: #{net_forward.3} parent=0 // pred_fallthru
    _
  // Predicated region
  $region18: #{net_forward.3} parent=0 // pred_check
    _
  $region19: #{net_forward.3} parent=0 // pred_check_branch
    %21 = sbr.rel (0) target = $region21
  $region20: #{net_forward.3} parent=0 // pred_region
    _
  $region21: #{net_forward.3} parent=0 // pred_fallthru
    _
  // Predicated region
  $region22: #{net_forward.3} parent=0 // pred_check
    _
  $region23: #{net_forward.3} parent=0 // pred_check_branch
    %23 = sbr.rel (0) target = $region25
  $region24: #{net_forward.3} parent=0 // pred_region
    _
  $region25: #{net_forward.3} parent=0 // pred_fallthru
    _
  // Predicated region
  $region26: #{net_forward.3} parent=0 // pred_check
    _
  $region27: #{net_forward.3} parent=0 // pred_check_branch
    %25 = sbr.rel (0) target = $region29
  $region28: #{net_forward.3} parent=0 // pred_region
    _
  $region29: #{net_forward.3} parent=0 // pred_fallthru
    _
  %v26 = vld [vmem:[%s1] sm:$0xf]
  %v27 = vld [vmem:[%s1 + $0x4] sm:$0xf]
  %v28 = vld [vmem:[%s1 + $0x8] sm:$0xf]
  %v29 = vld [vmem:[%s1 + $0xc] sm:$0xf]
  %v30 = vld [vmem:[%s1 + $0x10] sm:$0xf]
  %v31 = vld [vmem:[%s1 + $0x14] sm:$0xf]
  %v32 = vld [vmem:[%s1 + $0x18] sm:$0xf]
  %v33 = vld [vmem:[%s1 + $0x1c] sm:$0xf]
  %v34 = vld [vmem:[%s1 + $0x20] sm:$0xf]
  %v35 = vld [vmem:[%s1 + $0x24] sm:$0xf]
  %v36 = vld [vmem:[%s1 + $0x28] sm:$0xf]
  %v37 = vld [vmem:[%s1 + $0x2c] sm:$0xf]
  %v38 = vld [vmem:[%s1 + $0x30] sm:$0xf]
  %v39 = vld [vmem:[%s1 + $0x34] sm:$0xf]
  %v40 = vld [vmem:[%s1 + $0x38] sm:$0xf]
  %v41 = vld [vmem:[%s1 + $0x3c] sm:$0xf]
  %v42 = vld [vmem:[%s1 + $0x40] sm:$0xf]
  %v43 = vld [vmem:[%s1 + $0x44] sm:$0xf]
  %v44 = vld [vmem:[%s1 + $0x48] sm:$0xf]
  %v45 = vld [vmem:[%s1 + $0x4c] sm:$0xf]
  %v46 = vld [vmem:[%s1 + $0x50] sm:$0xf]
  %v47 = vld [vmem:[%s1 + $0x54] sm:$0xf]
  %v48 = vld [vmem:[%s1 + $0x58] sm:$0xf]
  %v49 = vld [vmem:[%s1 + $0x5c] sm:$0xf]
  %v50 = vld [vmem:[%s1 + $0x60] sm:$0xf]
  %v51 = vld [vmem:[%s1 + $0x64] sm:$0xf]
  %v52 = vld [vmem:[%s1 + $0x68] sm:$0xf]
  %v53 = vld [vmem:[%s1 + $0x6c] sm:$0xf]
  %v54 = vld [vmem:[%s1 + $0x70] sm:$0xf]
  %v55 = vld [vmem:[%s1 + $0x74] sm:$0xf]
  %v56 = vld [vmem:[%s1 + $0x78] sm:$0xf]
  %v57 = vld [vmem:[%s1 + $0x7c] sm:$0xf]
  %v58 = vld [vmem:[%s0] sm:$0xff]
  %v59 = vld [vmem:[%s0 + $0x8] sm:$0xff]
  %v60 = vld [vmem:[%s0 + $0x10] sm:$0xff]
  %v61 = vld [vmem:[%s0 + $0x18] sm:$0xff]
  %v62 = vld [vmem:[%s0 + $0x20] sm:$0xff]
  %v63 = vld [vmem:[%s0 + $0x28] sm:$0xff]
  %v64 = vld [vmem:[%s0 + $0x30] sm:$0xff]
  %v65 = vld [vmem:[%s0 + $0x38] sm:$0xff]
  %v66 = vld [vmem:[%s0 + $0x40] sm:$0xff]
  %v67 = vld [vmem:[%s0 + $0x48] sm:$0xff]
  %v68 = vld [vmem:[%s0 + $0x50] sm:$0xff]
  %v69 = vld [vmem:[%s0 + $0x58] sm:$0xff]
  %v70 = vld [vmem:[%s0 + $0x60] sm:$0xff]
  %v71 = vld [vmem:[%s0 + $0x68] sm:$0xff]
  %v72 = vld [vmem:[%s0 + $0x70] sm:$0xff]
  %v73 = vld [vmem:[%s0 + $0x78] sm:$0xff]
  %v74 = vld [vmem:[%s0 + $0x80] sm:$0xff]
  %v75 = vld [vmem:[%s0 + $0x88] sm:$0xff]
  %v76 = vld [vmem:[%s0 + $0x90] sm:$0xff]
  %v77 = vld [vmem:[%s0 + $0x98] sm:$0xff]
  %v78 = vld [vmem:[%s0 + $0xa0] sm:$0xff]
  %v79 = vld [vmem:[%s0 + $0xa8] sm:$0xff]
  %v80 = vld [vmem:[%s0 + $0xb0] sm:$0xff]
  %v81 = vld [vmem:[%s0 + $0xb8] sm:$0xff]
  %v82 = vld [vmem:[%s0 + $0xc0] sm:$0xff]
  %v83 = vld [vmem:[%s0 + $0xc8] sm:$0xff]
  %v84 = vld [vmem:[%s0 + $0xd0] sm:$0xff]
  %v85 = vld [vmem:[%s0 + $0xd8] sm:$0xff]
  %v86 = vld [vmem:[%s0 + $0xe0] sm:$0xff]
  %v87 = vld [vmem:[%s0 + $0xe8] sm:$0xff]
  %v88 = vld [vmem:[%s0 + $0xf0] sm:$0xff]
  %v89 = vld [vmem:[%s0 + $0xf8] sm:$0xff]
  %v122 = vunpack.c.l.b16 %v58
  %v123 = vunpack.c.h.b16 %v58
  %v124 = vunpack.c.l.b16 %v59
  %v125 = vunpack.c.h.b16 %v59
  %v126 = vunpack.c.l.b16 %v60
  %v127 = vunpack.c.h.b16 %v60
  %v128 = vunpack.c.l.b16 %v61
  %v129 = vunpack.c.h.b16 %v61
  %v130 = vunpack.c.l.b16 %v62
  %v131 = vunpack.c.h.b16 %v62
  %v132 = vunpack.c.l.b16 %v63
  %v133 = vunpack.c.h.b16 %v63
  %v134 = vunpack.c.l.b16 %v64
  %v135 = vunpack.c.h.b16 %v64
  %v136 = vunpack.c.l.b16 %v65
  %v137 = vunpack.c.h.b16 %v65
  %v138 = vunpack.c.l.b16 %v66
  %v139 = vunpack.c.h.b16 %v66
  %v140 = vunpack.c.l.b16 %v67
  %v141 = vunpack.c.h.b16 %v67
  %v142 = vunpack.c.l.b16 %v68
  %v143 = vunpack.c.h.b16 %v68
  %v144 = vunpack.c.l.b16 %v69
  %v145 = vunpack.c.h.b16 %v69
  %v146 = vunpack.c.l.b16 %v70
  %v147 = vunpack.c.h.b16 %v70
  %v148 = vunpack.c.l.b16 %v71
  %v149 = vunpack.c.h.b16 %v71
  %v150 = vunpack.c.l.b16 %v72
  %v151 = vunpack.c.h.b16 %v72
  %v152 = vunpack.c.l.b16 %v73
  %v153 = vunpack.c.h.b16 %v73
  %v154 = vunpack.c.l.b16 %v74
  %v155 = vunpack.c.h.b16 %v74
  %v156 = vunpack.c.l.b16 %v75
  %v157 = vunpack.c.h.b16 %v75
  %v158 = vunpack.c.l.b16 %v76
  %v159 = vunpack.c.h.b16 %v76
  %v160 = vunpack.c.l.b16 %v77
  %v161 = vunpack.c.h.b16 %v77
  %v162 = vunpack.c.l.b16 %v78
  %v163 = vunpack.c.h.b16 %v78
  %v164 = vunpack.c.l.b16 %v79
  %v165 = vunpack.c.h.b16 %v79
  %v166 = vunpack.c.l.b16 %v80
  %v167 = vunpack.c.h.b16 %v80
  %v168 = vunpack.c.l.b16 %v81
  %v169 = vunpack.c.h.b16 %v81
  %v170 = vunpack.c.l.b16 %v82
  %v171 = vunpack.c.h.b16 %v82
  %v172 = vunpack.c.l.b16 %v83
  %v173 = vunpack.c.h.b16 %v83
  %v174 = vunpack.c.l.b16 %v84
  %v175 = vunpack.c.h.b16 %v84
  %v176 = vunpack.c.l.b16 %v85
  %v177 = vunpack.c.h.b16 %v85
  %v178 = vunpack.c.l.b16 %v86
  %v179 = vunpack.c.h.b16 %v86
  %v180 = vunpack.c.l.b16 %v87
  %v181 = vunpack.c.h.b16 %v87
  %v182 = vunpack.c.l.b16 %v88
  %v183 = vunpack.c.h.b16 %v88
  %v184 = vunpack.c.l.b16 %v89
  %v185 = vunpack.c.h.b16 %v89
  %v186 = vpack.c.b16 %v124, %v122
  %v187 = vpack.c.b16 %v125, %v123
  %v188 = vpack.c.b16 %v128, %v126
  %v189 = vpack.c.b16 %v129, %v127
  %v190 = vpack.c.b16 %v132, %v130
  %v191 = vpack.c.b16 %v133, %v131
  %v192 = vpack.c.b16 %v136, %v134
  %v193 = vpack.c.b16 %v137, %v135
  %v194 = vpack.c.b16 %v140, %v138
  %v195 = vpack.c.b16 %v141, %v139
  %v196 = vpack.c.b16 %v144, %v142
  %v197 = vpack.c.b16 %v145, %v143
  %v198 = vpack.c.b16 %v148, %v146
  %v199 = vpack.c.b16 %v149, %v147
  %v200 = vpack.c.b16 %v152, %v150
  %v201 = vpack.c.b16 %v153, %v151
  %v202 = vpack.c.b16 %v156, %v154
  %v203 = vpack.c.b16 %v157, %v155
  %v204 = vpack.c.b16 %v160, %v158
  %v205 = vpack.c.b16 %v161, %v159
  %v206 = vpack.c.b16 %v164, %v162
  %v207 = vpack.c.b16 %v165, %v163
  %v208 = vpack.c.b16 %v168, %v166
  %v209 = vpack.c.b16 %v169, %v167
  %v210 = vpack.c.b16 %v172, %v170
  %v211 = vpack.c.b16 %v173, %v171
  %v212 = vpack.c.b16 %v176, %v174
  %v213 = vpack.c.b16 %v177, %v175
  %v214 = vpack.c.b16 %v180, %v178
  %v215 = vpack.c.b16 %v181, %v179
  %v216 = vpack.c.b16 %v184, %v182
  %v217 = vpack.c.b16 %v185, %v183
  %v282 = vunpack.c.l.b16 %v26
  %v283 = vunpack.c.l.b16 %v27
  %v284 = vunpack.c.l.b16 %v28
  %v285 = vunpack.c.l.b16 %v29
  %v286 = vunpack.c.l.b16 %v30
  %v287 = vunpack.c.l.b16 %v31
  %v288 = vunpack.c.l.b16 %v32
  %v289 = vunpack.c.l.b16 %v33
  %v290 = vunpack.c.l.b16 %v34
  %v291 = vunpack.c.l.b16 %v35
  %v292 = vunpack.c.l.b16 %v36
  %v293 = vunpack.c.l.b16 %v37
  %v294 = vunpack.c.l.b16 %v38
  %v295 = vunpack.c.l.b16 %v39
  %v296 = vunpack.c.l.b16 %v40
  %v297 = vunpack.c.l.b16 %v41
  %v298 = vunpack.c.l.b16 %v42
  %v299 = vunpack.c.l.b16 %v43
  %v300 = vunpack.c.l.b16 %v44
  %v301 = vunpack.c.l.b16 %v45
  %v302 = vunpack.c.l.b16 %v46
  %v303 = vunpack.c.l.b16 %v47
  %v304 = vunpack.c.l.b16 %v48
  %v305 = vunpack.c.l.b16 %v49
  %v306 = vunpack.c.l.b16 %v50
  %v307 = vunpack.c.l.b16 %v51
  %v308 = vunpack.c.l.b16 %v52
  %v309 = vunpack.c.l.b16 %v53
  %v310 = vunpack.c.l.b16 %v54
  %v311 = vunpack.c.l.b16 %v55
  %v312 = vunpack.c.l.b16 %v56
  %v313 = vunpack.c.l.b16 %v57
  %v314 = vpack.c.b16 %v283, %v282
  %v315 = vpack.c.b16 %v285, %v284
  %v316 = vpack.c.b16 %v287, %v286
  %v317 = vpack.c.b16 %v289, %v288
  %v318 = vpack.c.b16 %v291, %v290
  %v319 = vpack.c.b16 %v293, %v292
  %v320 = vpack.c.b16 %v295, %v294
  %v321 = vpack.c.b16 %v297, %v296
  %v322 = vpack.c.b16 %v299, %v298
  %v323 = vpack.c.b16 %v301, %v300
  %v324 = vpack.c.b16 %v303, %v302
  %v325 = vpack.c.b16 %v305, %v304
  %v326 = vpack.c.b16 %v307, %v306
  %v327 = vpack.c.b16 %v309, %v308
  %v328 = vpack.c.b16 %v311, %v310
  %v329 = vpack.c.b16 %v313, %v312
  %346 = vmatpush.bf16.msra.mxu0 %v321
  %347 = vmatpush.bf16.msra.mxu0 %v320
  %348 = vmatpush.bf16.msra.mxu0 %v319
  %349 = vmatpush.bf16.msra.mxu0 %v318
  %350 = vmatpush.bf16.msra.mxu0 %v317
  %351 = vmatpush.bf16.msra.mxu0 %v316
  %352 = vmatpush.bf16.msra.mxu0 %v315
  %353 = vmatpush.bf16.msra.mxu0 %v314
  %354 = vmatmul.bf16.gmra.mxu0 %v186
  %v355 = vpop.f32.mrf.mxu0
  %v356 = vadd.f32 0.0, %v355
  %v357 = vpop.f32.mrf.mxu0
  %v358 = vadd.f32 0.0, %v357
  %359 = vmatmul.bf16.gmra.mxu0 %v188
  %v360 = vpop.f32.mrf.mxu0
  %v361 = vadd.f32 0.0, %v360
  %v362 = vpop.f32.mrf.mxu0
  %v363 = vadd.f32 0.0, %v362
  %364 = vmatmul.bf16.gmra.mxu0 %v190
  %v365 = vpop.f32.mrf.mxu0
  %v366 = vadd.f32 0.0, %v365
  %v367 = vpop.f32.mrf.mxu0
  %v368 = vadd.f32 0.0, %v367
  %369 = vmatmul.bf16.gmra.mxu0 %v192
  %v370 = vpop.f32.mrf.mxu0
  %v371 = vadd.f32 0.0, %v370
  %v372 = vpop.f32.mrf.mxu0
  %v373 = vadd.f32 0.0, %v372
  %374 = vmatmul.bf16.gmra.mxu0 %v194
  %v375 = vpop.f32.mrf.mxu0
  %v376 = vadd.f32 0.0, %v375
  %v377 = vpop.f32.mrf.mxu0
  %v378 = vadd.f32 0.0, %v377
  %379 = vmatmul.bf16.gmra.mxu0 %v196
  %v380 = vpop.f32.mrf.mxu0
  %v381 = vadd.f32 0.0, %v380
  %v382 = vpop.f32.mrf.mxu0
  %v383 = vadd.f32 0.0, %v382
  %384 = vmatmul.bf16.gmra.mxu0 %v198
  %v385 = vpop.f32.mrf.mxu0
  %v386 = vadd.f32 0.0, %v385
  %v387 = vpop.f32.mrf.mxu0
  %v388 = vadd.f32 0.0, %v387
  %389 = vmatmul.bf16.gmra.mxu0 %v200
  %v390 = vpop.f32.mrf.mxu0
  %v391 = vadd.f32 0.0, %v390
  %v392 = vpop.f32.mrf.mxu0
  %v393 = vadd.f32 0.0, %v392
  %394 = vmatmul.bf16.gmra.mxu0 %v202
  %v395 = vpop.f32.mrf.mxu0
  %v396 = vadd.f32 0.0, %v395
  %v397 = vpop.f32.mrf.mxu0
  %v398 = vadd.f32 0.0, %v397
  %399 = vmatmul.bf16.gmra.mxu0 %v204
  %v400 = vpop.f32.mrf.mxu0
  %v401 = vadd.f32 0.0, %v400
  %v402 = vpop.f32.mrf.mxu0
  %v403 = vadd.f32 0.0, %v402
  %404 = vmatmul.bf16.gmra.mxu0 %v206
  %v405 = vpop.f32.mrf.mxu0
  %v406 = vadd.f32 0.0, %v405
  %v407 = vpop.f32.mrf.mxu0
  %v408 = vadd.f32 0.0, %v407
  %409 = vmatmul.bf16.gmra.mxu0 %v208
  %v410 = vpop.f32.mrf.mxu0
  %v411 = vadd.f32 0.0, %v410
  %v412 = vpop.f32.mrf.mxu0
  %v413 = vadd.f32 0.0, %v412
  %414 = vmatmul.bf16.gmra.mxu0 %v210
  %v415 = vpop.f32.mrf.mxu0
  %v416 = vadd.f32 0.0, %v415
  %v417 = vpop.f32.mrf.mxu0
  %v418 = vadd.f32 0.0, %v417
  %419 = vmatmul.bf16.gmra.mxu0 %v212
  %v420 = vpop.f32.mrf.mxu0
  %v421 = vadd.f32 0.0, %v420
  %v422 = vpop.f32.mrf.mxu0
  %v423 = vadd.f32 0.0, %v422
  %424 = vmatmul.bf16.gmra.mxu0 %v214
  %v425 = vpop.f32.mrf.mxu0
  %v426 = vadd.f32 0.0, %v425
  %v427 = vpop.f32.mrf.mxu0
  %v428 = vadd.f32 0.0, %v427
  %429 = vmatmul.bf16.gmra.mxu0 %v216
  %v430 = vpop.f32.mrf.mxu0
  %v431 = vadd.f32 0.0, %v430
  %v432 = vpop.f32.mrf.mxu0
  %v433 = vadd.f32 0.0, %v432
  %434 = vdwg.mxu0
  %435 = vmatpush.bf16.msra.mxu0 %v329
  %436 = vmatpush.bf16.msra.mxu0 %v328
  %437 = vmatpush.bf16.msra.mxu0 %v327
  %438 = vmatpush.bf16.msra.mxu0 %v326
  %439 = vmatpush.bf16.msra.mxu0 %v325
  %440 = vmatpush.bf16.msra.mxu0 %v324
  %441 = vmatpush.bf16.msra.mxu0 %v323
  %442 = vmatpush.bf16.msra.mxu0 %v322
  %443 = vmatmul.bf16.gmra.mxu0 %v187
  %v444 = vpop.f32.mrf.mxu0
  %v445 = vadd.f32 %v356, %v444
  %v446 = vpop.f32.mrf.mxu0
  %v447 = vadd.f32 %v358, %v446
  %448 = vmatmul.bf16.gmra.mxu0 %v189
  %v449 = vpop.f32.mrf.mxu0
  %v450 = vadd.f32 %v361, %v449
  %v451 = vpop.f32.mrf.mxu0
  %v452 = vadd.f32 %v363, %v451
  %453 = vmatmul.bf16.gmra.mxu0 %v191
  %v454 = vpop.f32.mrf.mxu0
  %v455 = vadd.f32 %v366, %v454
  %v456 = vpop.f32.mrf.mxu0
  %v457 = vadd.f32 %v368, %v456
  %458 = vmatmul.bf16.gmra.mxu0 %v193
  %v459 = vpop.f32.mrf.mxu0
  %v460 = vadd.f32 %v371, %v459
  %v461 = vpop.f32.mrf.mxu0
  %v462 = vadd.f32 %v373, %v461
  %463 = vmatmul.bf16.gmra.mxu0 %v195
  %v464 = vpop.f32.mrf.mxu0
  %v465 = vadd.f32 %v376, %v464
  %v466 = vpop.f32.mrf.mxu0
  %v467 = vadd.f32 %v378, %v466
  %468 = vmatmul.bf16.gmra.mxu0 %v197
  %v469 = vpop.f32.mrf.mxu0
  %v470 = vadd.f32 %v381, %v469
  %v471 = vpop.f32.mrf.mxu0
  %v472 = vadd.f32 %v383, %v471
  %473 = vmatmul.bf16.gmra.mxu0 %v199
  %v474 = vpop.f32.mrf.mxu0
  %v475 = vadd.f32 %v386, %v474
  %v476 = vpop.f32.mrf.mxu0
  %v477 = vadd.f32 %v388, %v476
  %478 = vmatmul.bf16.gmra.mxu0 %v201
  %v479 = vpop.f32.mrf.mxu0
  %v480 = vadd.f32 %v391, %v479
  %v481 = vpop.f32.mrf.mxu0
  %v482 = vadd.f32 %v393, %v481
  %483 = vmatmul.bf16.gmra.mxu0 %v203
  %v484 = vpop.f32.mrf.mxu0
  %v485 = vadd.f32 %v396, %v484
  %v486 = vpop.f32.mrf.mxu0
  %v487 = vadd.f32 %v398, %v486
  %488 = vmatmul.bf16.gmra.mxu0 %v205
  %v489 = vpop.f32.mrf.mxu0
  %v490 = vadd.f32 %v401, %v489
  %v491 = vpop.f32.mrf.mxu0
  %v492 = vadd.f32 %v403, %v491
  %493 = vmatmul.bf16.gmra.mxu0 %v207
  %v494 = vpop.f32.mrf.mxu0
  %v495 = vadd.f32 %v406, %v494
  %v496 = vpop.f32.mrf.mxu0
  %v497 = vadd.f32 %v408, %v496
  %498 = vmatmul.bf16.gmra.mxu0 %v209
  %v499 = vpop.f32.mrf.mxu0
  %v500 = vadd.f32 %v411, %v499
  %v501 = vpop.f32.mrf.mxu0
  %v502 = vadd.f32 %v413, %v501
  %503 = vmatmul.bf16.gmra.mxu0 %v211
  %v504 = vpop.f32.mrf.mxu0
  %v505 = vadd.f32 %v416, %v504
  %v506 = vpop.f32.mrf.mxu0
  %v507 = vadd.f32 %v418, %v506
  %508 = vmatmul.bf16.gmra.mxu0 %v213
  %v509 = vpop.f32.mrf.mxu0
  %v510 = vadd.f32 %v421, %v509
  %v511 = vpop.f32.mrf.mxu0
  %v512 = vadd.f32 %v423, %v511
  %513 = vmatmul.bf16.gmra.mxu0 %v215
  %v514 = vpop.f32.mrf.mxu0
  %v515 = vadd.f32 %v426, %v514
  %v516 = vpop.f32.mrf.mxu0
  %v517 = vadd.f32 %v428, %v516
  %518 = vmatmul.bf16.gmra.mxu0 %v217
  %v519 = vpop.f32.mrf.mxu0
  %v520 = vadd.f32 %v431, %v519
  %v521 = vpop.f32.mrf.mxu0
  %v522 = vadd.f32 %v433, %v521
  %523 = vdwg.mxu0
  %s524 = scalar_lea.vmem %s0, 256
  %v525 = vld [vmem:[%s524] sm:$0xff]
  %v526 = vld [vmem:[%s524 + $0x8] sm:$0xff]
  %v527 = vld [vmem:[%s524 + $0x10] sm:$0xff]
  %v528 = vld [vmem:[%s524 + $0x18] sm:$0xff]
  %v529 = vld [vmem:[%s524 + $0x20] sm:$0xff]
  %v530 = vld [vmem:[%s524 + $0x28] sm:$0xff]
  %v531 = vld [vmem:[%s524 + $0x30] sm:$0xff]
  %v532 = vld [vmem:[%s524 + $0x38] sm:$0xff]
  %v533 = vld [vmem:[%s524 + $0x40] sm:$0xff]
  %v534 = vld [vmem:[%s524 + $0x48] sm:$0xff]
  %v535 = vld [vmem:[%s524 + $0x50] sm:$0xff]
  %v536 = vld [vmem:[%s524 + $0x58] sm:$0xff]
  %v537 = vld [vmem:[%s524 + $0x60] sm:$0xff]
  %v538 = vld [vmem:[%s524 + $0x68] sm:$0xff]
  %v539 = vld [vmem:[%s524 + $0x70] sm:$0xff]
  %v540 = vld [vmem:[%s524 + $0x78] sm:$0xff]
  %v541 = vld [vmem:[%s524 + $0x80] sm:$0xff]
  %v542 = vld [vmem:[%s524 + $0x88] sm:$0xff]
  %v543 = vld [vmem:[%s524 + $0x90] sm:$0xff]
  %v544 = vld [vmem:[%s524 + $0x98] sm:$0xff]
  %v545 = vld [vmem:[%s524 + $0xa0] sm:$0xff]
  %v546 = vld [vmem:[%s524 + $0xa8] sm:$0xff]
  %v547 = vld [vmem:[%s524 + $0xb0] sm:$0xff]
  %v548 = vld [vmem:[%s524 + $0xb8] sm:$0xff]
  %v549 = vld [vmem:[%s524 + $0xc0] sm:$0xff]
  %v550 = vld [vmem:[%s524 + $0xc8] sm:$0xff]
  %v551 = vld [vmem:[%s524 + $0xd0] sm:$0xff]
  %v552 = vld [vmem:[%s524 + $0xd8] sm:$0xff]
  %v553 = vld [vmem:[%s524 + $0xe0] sm:$0xff]
  %v554 = vld [vmem:[%s524 + $0xe8] sm:$0xff]
  %v555 = vld [vmem:[%s524 + $0xf0] sm:$0xff]
  %v556 = vld [vmem:[%s524 + $0xf8] sm:$0xff]
  %v589 = vunpack.c.l.b16 %v525
  %v590 = vunpack.c.h.b16 %v525
  %v591 = vunpack.c.l.b16 %v526
  %v592 = vunpack.c.h.b16 %v526
  %v593 = vunpack.c.l.b16 %v527
  %v594 = vunpack.c.h.b16 %v527
  %v595 = vunpack.c.l.b16 %v528
  %v596 = vunpack.c.h.b16 %v528
  %v597 = vunpack.c.l.b16 %v529
  %v598 = vunpack.c.h.b16 %v529
  %v599 = vunpack.c.l.b16 %v530
  %v600 = vunpack.c.h.b16 %v530
  %v601 = vunpack.c.l.b16 %v531
  %v602 = vunpack.c.h.b16 %v531
  %v603 = vunpack.c.l.b16 %v532
  %v604 = vunpack.c.h.b16 %v532
  %v605 = vunpack.c.l.b16 %v533
  %v606 = vunpack.c.h.b16 %v533
  %v607 = vunpack.c.l.b16 %v534
  %v608 = vunpack.c.h.b16 %v534
  %v609 = vunpack.c.l.b16 %v535
  %v610 = vunpack.c.h.b16 %v535
  %v611 = vunpack.c.l.b16 %v536
  %v612 = vunpack.c.h.b16 %v536
  %v613 = vunpack.c.l.b16 %v537
  %v614 = vunpack.c.h.b16 %v537
  %v615 = vunpack.c.l.b16 %v538
  %v616 = vunpack.c.h.b16 %v538
  %v617 = vunpack.c.l.b16 %v539
  %v618 = vunpack.c.h.b16 %v539
  %v619 = vunpack.c.l.b16 %v540
  %v620 = vunpack.c.h.b16 %v540
  %v621 = vunpack.c.l.b16 %v541
  %v622 = vunpack.c.h.b16 %v541
  %v623 = vunpack.c.l.b16 %v542
  %v624 = vunpack.c.h.b16 %v542
  %v625 = vunpack.c.l.b16 %v543
  %v626 = vunpack.c.h.b16 %v543
  %v627 = vunpack.c.l.b16 %v544
  %v628 = vunpack.c.h.b16 %v544
  %v629 = vunpack.c.l.b16 %v545
  %v630 = vunpack.c.h.b16 %v545
  %v631 = vunpack.c.l.b16 %v546
  %v632 = vunpack.c.h.b16 %v546
  %v633 = vunpack.c.l.b16 %v547
  %v634 = vunpack.c.h.b16 %v547
  %v635 = vunpack.c.l.b16 %v548
  %v636 = vunpack.c.h.b16 %v548
  %v637 = vunpack.c.l.b16 %v549
  %v638 = vunpack.c.h.b16 %v549
  %v639 = vunpack.c.l.b16 %v550
  %v640 = vunpack.c.h.b16 %v550
  %v641 = vunpack.c.l.b16 %v551
  %v642 = vunpack.c.h.b16 %v551
  %v643 = vunpack.c.l.b16 %v552
  %v644 = vunpack.c.h.b16 %v552
  %v645 = vunpack.c.l.b16 %v553
  %v646 = vunpack.c.h.b16 %v553
  %v647 = vunpack.c.l.b16 %v554
  %v648 = vunpack.c.h.b16 %v554
  %v649 = vunpack.c.l.b16 %v555
  %v650 = vunpack.c.h.b16 %v555
  %v651 = vunpack.c.l.b16 %v556
  %v652 = vunpack.c.h.b16 %v556
  %v653 = vpack.c.b16 %v591, %v589
  %v654 = vpack.c.b16 %v592, %v590
  %v655 = vpack.c.b16 %v595, %v593
  %v656 = vpack.c.b16 %v596, %v594
  %v657 = vpack.c.b16 %v599, %v597
  %v658 = vpack.c.b16 %v600, %v598
  %v659 = vpack.c.b16 %v603, %v601
  %v660 = vpack.c.b16 %v604, %v602
  %v661 = vpack.c.b16 %v607, %v605
  %v662 = vpack.c.b16 %v608, %v606
  %v663 = vpack.c.b16 %v611, %v609
  %v664 = vpack.c.b16 %v612, %v610
  %v665 = vpack.c.b16 %v615, %v613
  %v666 = vpack.c.b16 %v616, %v614
  %v667 = vpack.c.b16 %v619, %v617
  %v668 = vpack.c.b16 %v620, %v618
  %v669 = vpack.c.b16 %v623, %v621
  %v670 = vpack.c.b16 %v624, %v622
  %v671 = vpack.c.b16 %v627, %v625
  %v672 = vpack.c.b16 %v628, %v626
  %v673 = vpack.c.b16 %v631, %v629
  %v674 = vpack.c.b16 %v632, %v630
  %v675 = vpack.c.b16 %v635, %v633
  %v676 = vpack.c.b16 %v636, %v634
  %v677 = vpack.c.b16 %v639, %v637
  %v678 = vpack.c.b16 %v640, %v638
  %v679 = vpack.c.b16 %v643, %v641
  %v680 = vpack.c.b16 %v644, %v642
  %v681 = vpack.c.b16 %v647, %v645
  %v682 = vpack.c.b16 %v648, %v646
  %v683 = vpack.c.b16 %v651, %v649
  %v684 = vpack.c.b16 %v652, %v650
  %717 = vmatpush.bf16.msra.mxu0 %v321
  %718 = vmatpush.bf16.msra.mxu0 %v320
  %719 = vmatpush.bf16.msra.mxu0 %v319
  %720 = vmatpush.bf16.msra.mxu0 %v318
  %721 = vmatpush.bf16.msra.mxu0 %v317
  %722 = vmatpush.bf16.msra.mxu0 %v316
  %723 = vmatpush.bf16.msra.mxu0 %v315
  %724 = vmatpush.bf16.msra.mxu0 %v314
  %725 = vmatmul.bf16.gmra.mxu0 %v653
  %v726 = vpop.f32.mrf.mxu0
  %v727 = vadd.f32 0.0, %v726
  %v728 = vpop.f32.mrf.mxu0
  %v729 = vadd.f32 0.0, %v728
  %730 = vmatmul.bf16.gmra.mxu0 %v655
  %v731 = vpop.f32.mrf.mxu0
  %v732 = vadd.f32 0.0, %v731
  %v733 = vpop.f32.mrf.mxu0
  %v734 = vadd.f32 0.0, %v733
  %735 = vmatmul.bf16.gmra.mxu0 %v657
  %v736 = vpop.f32.mrf.mxu0
  %v737 = vadd.f32 0.0, %v736
  %v738 = vpop.f32.mrf.mxu0
  %v739 = vadd.f32 0.0, %v738
  %740 = vmatmul.bf16.gmra.mxu0 %v659
  %v741 = vpop.f32.mrf.mxu0
  %v742 = vadd.f32 0.0, %v741
  %v743 = vpop.f32.mrf.mxu0
  %v744 = vadd.f32 0.0, %v743
  %745 = vmatmul.bf16.gmra.mxu0 %v661
  %v746 = vpop.f32.mrf.mxu0
  %v747 = vadd.f32 0.0, %v746
  %v748 = vpop.f32.mrf.mxu0
  %v749 = vadd.f32 0.0, %v748
  %750 = vmatmul.bf16.gmra.mxu0 %v663
  %v751 = vpop.f32.mrf.mxu0
  %v752 = vadd.f32 0.0, %v751
  %v753 = vpop.f32.mrf.mxu0
  %v754 = vadd.f32 0.0, %v753
  %755 = vmatmul.bf16.gmra.mxu0 %v665
  %v756 = vpop.f32.mrf.mxu0
  %v757 = vadd.f32 0.0, %v756
  %v758 = vpop.f32.mrf.mxu0
  %v759 = vadd.f32 0.0, %v758
  %760 = vmatmul.bf16.gmra.mxu0 %v667
  %v761 = vpop.f32.mrf.mxu0
  %v762 = vadd.f32 0.0, %v761
  %v763 = vpop.f32.mrf.mxu0
  %v764 = vadd.f32 0.0, %v763
  %765 = vmatmul.bf16.gmra.mxu0 %v669
  %v766 = vpop.f32.mrf.mxu0
  %v767 = vadd.f32 0.0, %v766
  %v768 = vpop.f32.mrf.mxu0
  %v769 = vadd.f32 0.0, %v768
  %770 = vmatmul.bf16.gmra.mxu0 %v671
  %v771 = vpop.f32.mrf.mxu0
  %v772 = vadd.f32 0.0, %v771
  %v773 = vpop.f32.mrf.mxu0
  %v774 = vadd.f32 0.0, %v773
  %775 = vmatmul.bf16.gmra.mxu0 %v673
  %v776 = vpop.f32.mrf.mxu0
  %v777 = vadd.f32 0.0, %v776
  %v778 = vpop.f32.mrf.mxu0
  %v779 = vadd.f32 0.0, %v778
  %780 = vmatmul.bf16.gmra.mxu0 %v675
  %v781 = vpop.f32.mrf.mxu0
  %v782 = vadd.f32 0.0, %v781
  %v783 = vpop.f32.mrf.mxu0
  %v784 = vadd.f32 0.0, %v783
  %785 = vmatmul.bf16.gmra.mxu0 %v677
  %v786 = vpop.f32.mrf.mxu0
  %v787 = vadd.f32 0.0, %v786
  %v788 = vpop.f32.mrf.mxu0
  %v789 = vadd.f32 0.0, %v788
  %790 = vmatmul.bf16.gmra.mxu0 %v679
  %v791 = vpop.f32.mrf.mxu0
  %v792 = vadd.f32 0.0, %v791
  %v793 = vpop.f32.mrf.mxu0
  %v794 = vadd.f32 0.0, %v793
  %795 = vmatmul.bf16.gmra.mxu0 %v681
  %v796 = vpop.f32.mrf.mxu0
  %v797 = vadd.f32 0.0, %v796
  %v798 = vpop.f32.mrf.mxu0
  %v799 = vadd.f32 0.0, %v798
  %800 = vmatmul.bf16.gmra.mxu0 %v683
  %v801 = vpop.f32.mrf.mxu0
  %v802 = vadd.f32 0.0, %v801
  %v803 = vpop.f32.mrf.mxu0
  %v804 = vadd.f32 0.0, %v803
  %805 = vdwg.mxu0
  %806 = vmatpush.bf16.msra.mxu0 %v329
  %807 = vmatpush.bf16.msra.mxu0 %v328
  %808 = vmatpush.bf16.msra.mxu0 %v327
  %809 = vmatpush.bf16.msra.mxu0 %v326
  %810 = vmatpush.bf16.msra.mxu0 %v325
  %811 = vmatpush.bf16.msra.mxu0 %v324
  %812 = vmatpush.bf16.msra.mxu0 %v323
  %813 = vmatpush.bf16.msra.mxu0 %v322
  %814 = vmatmul.bf16.gmra.mxu0 %v654
  %v815 = vpop.f32.mrf.mxu0
  %v816 = vadd.f32 %v727, %v815
  %v817 = vpop.f32.mrf.mxu0
  %v818 = vadd.f32 %v729, %v817
  %819 = vmatmul.bf16.gmra.mxu0 %v656
  %v820 = vpop.f32.mrf.mxu0
  %v821 = vadd.f32 %v732, %v820
  %v822 = vpop.f32.mrf.mxu0
  %v823 = vadd.f32 %v734, %v822
  %824 = vmatmul.bf16.gmra.mxu0 %v658
  %v825 = vpop.f32.mrf.mxu0
  %v826 = vadd.f32 %v737, %v825
  %v827 = vpop.f32.mrf.mxu0
  %v828 = vadd.f32 %v739, %v827
  %829 = vmatmul.bf16.gmra.mxu0 %v660
  %v830 = vpop.f32.mrf.mxu0
  %v831 = vadd.f32 %v742, %v830
  %v832 = vpop.f32.mrf.mxu0
  %v833 = vadd.f32 %v744, %v832
  %834 = vmatmul.bf16.gmra.mxu0 %v662
  %v835 = vpop.f32.mrf.mxu0
  %v836 = vadd.f32 %v747, %v835
  %v837 = vpop.f32.mrf.mxu0
  %v838 = vadd.f32 %v749, %v837
  %839 = vmatmul.bf16.gmra.mxu0 %v664
  %v840 = vpop.f32.mrf.mxu0
  %v841 = vadd.f32 %v752, %v840
  %v842 = vpop.f32.mrf.mxu0
  %v843 = vadd.f32 %v754, %v842
  %844 = vmatmul.bf16.gmra.mxu0 %v666
  %v845 = vpop.f32.mrf.mxu0
  %v846 = vadd.f32 %v757, %v845
  %v847 = vpop.f32.mrf.mxu0
  %v848 = vadd.f32 %v759, %v847
  %849 = vmatmul.bf16.gmra.mxu0 %v668
  %v850 = vpop.f32.mrf.mxu0
  %v851 = vadd.f32 %v762, %v850
  %v852 = vpop.f32.mrf.mxu0
  %v853 = vadd.f32 %v764, %v852
  %854 = vmatmul.bf16.gmra.mxu0 %v670
  %v855 = vpop.f32.mrf.mxu0
  %v856 = vadd.f32 %v767, %v855
  %v857 = vpop.f32.mrf.mxu0
  %v858 = vadd.f32 %v769, %v857
  %859 = vmatmul.bf16.gmra.mxu0 %v672
  %v860 = vpop.f32.mrf.mxu0
  %v861 = vadd.f32 %v772, %v860
  %v862 = vpop.f32.mrf.mxu0
  %v863 = vadd.f32 %v774, %v862
  %864 = vmatmul.bf16.gmra.mxu0 %v674
  %v865 = vpop.f32.mrf.mxu0
  %v866 = vadd.f32 %v777, %v865
  %v867 = vpop.f32.mrf.mxu0
  %v868 = vadd.f32 %v779, %v867
  %869 = vmatmul.bf16.gmra.mxu0 %v676
  %v870 = vpop.f32.mrf.mxu0
  %v871 = vadd.f32 %v782, %v870
  %v872 = vpop.f32.mrf.mxu0
  %v873 = vadd.f32 %v784, %v872
  %874 = vmatmul.bf16.gmra.mxu0 %v678
  %v875 = vpop.f32.mrf.mxu0
  %v876 = vadd.f32 %v787, %v875
  %v877 = vpop.f32.mrf.mxu0
  %v878 = vadd.f32 %v789, %v877
  %879 = vmatmul.bf16.gmra.mxu0 %v680
  %v880 = vpop.f32.mrf.mxu0
  %v881 = vadd.f32 %v792, %v880
  %v882 = vpop.f32.mrf.mxu0
  %v883 = vadd.f32 %v794, %v882
  %884 = vmatmul.bf16.gmra.mxu0 %v682
  %v885 = vpop.f32.mrf.mxu0
  %v886 = vadd.f32 %v797, %v885
  %v887 = vpop.f32.mrf.mxu0
  %v888 = vadd.f32 %v799, %v887
  %889 = vmatmul.bf16.gmra.mxu0 %v684
  %v890 = vpop.f32.mrf.mxu0
  %v891 = vadd.f32 %v802, %v890
  %v892 = vpop.f32.mrf.mxu0
  %v893 = vadd.f32 %v804, %v892
  %894 = vdwg.mxu0
  %v895 = vmax.f32 %v445, %v816
  %v896 = vmax.f32 %v447, %v818
  %v897 = vmax.f32 %v450, %v821
  %v898 = vmax.f32 %v452, %v823
  %v899 = vmax.f32 %v455, %v826
  %v900 = vmax.f32 %v457, %v828
  %v901 = vmax.f32 %v460, %v831
  %v902 = vmax.f32 %v462, %v833
  %v903 = vmax.f32 %v465, %v836
  %v904 = vmax.f32 %v467, %v838
  %v905 = vmax.f32 %v470, %v841
  %v906 = vmax.f32 %v472, %v843
  %v907 = vmax.f32 %v475, %v846
  %v908 = vmax.f32 %v477, %v848
  %v909 = vmax.f32 %v480, %v851
  %v910 = vmax.f32 %v482, %v853
  %v911 = vmax.f32 %v485, %v856
  %v912 = vmax.f32 %v487, %v858
  %v913 = vmax.f32 %v490, %v861
  %v914 = vmax.f32 %v492, %v863
  %v915 = vmax.f32 %v495, %v866
  %v916 = vmax.f32 %v497, %v868
  %v917 = vmax.f32 %v500, %v871
  %v918 = vmax.f32 %v502, %v873
  %v919 = vmax.f32 %v505, %v876
  %v920 = vmax.f32 %v507, %v878
  %v921 = vmax.f32 %v510, %v881
  %v922 = vmax.f32 %v512, %v883
  %v923 = vmax.f32 %v515, %v886
  %v924 = vmax.f32 %v517, %v888
  %v925 = vmax.f32 %v520, %v891
  %v926 = vmax.f32 %v522, %v893
  %s927 = scalar_lea.vmem %s0, 512
  %v928 = vld [vmem:[%s927] sm:$0xff]
  %v929 = vld [vmem:[%s927 + $0x8] sm:$0xff]
  %v930 = vld [vmem:[%s927 + $0x10] sm:$0xff]
  %v931 = vld [vmem:[%s927 + $0x18] sm:$0xff]
  %v932 = vld [vmem:[%s927 + $0x20] sm:$0xff]
  %v933 = vld [vmem:[%s927 + $0x28] sm:$0xff]
  %v934 = vld [vmem:[%s927 + $0x30] sm:$0xff]
  %v935 = vld [vmem:[%s927 + $0x38] sm:$0xff]
  %v936 = vld [vmem:[%s927 + $0x40] sm:$0xff]
  %v937 = vld [vmem:[%s927 + $0x48] sm:$0xff]
  %v938 = vld [vmem:[%s927 + $0x50] sm:$0xff]
  %v939 = vld [vmem:[%s927 + $0x58] sm:$0xff]
  %v940 = vld [vmem:[%s927 + $0x60] sm:$0xff]
  %v941 = vld [vmem:[%s927 + $0x68] sm:$0xff]
  %v942 = vld [vmem:[%s927 + $0x70] sm:$0xff]
  %v943 = vld [vmem:[%s927 + $0x78] sm:$0xff]
  %v944 = vld [vmem:[%s927 + $0x80] sm:$0xff]
  %v945 = vld [vmem:[%s927 + $0x88] sm:$0xff]
  %v946 = vld [vmem:[%s927 + $0x90] sm:$0xff]
  %v947 = vld [vmem:[%s927 + $0x98] sm:$0xff]
  %v948 = vld [vmem:[%s927 + $0xa0] sm:$0xff]
  %v949 = vld [vmem:[%s927 + $0xa8] sm:$0xff]
  %v950 = vld [vmem:[%s927 + $0xb0] sm:$0xff]
  %v951 = vld [vmem:[%s927 + $0xb8] sm:$0xff]
  %v952 = vld [vmem:[%s927 + $0xc0] sm:$0xff]
  %v953 = vld [vmem:[%s927 + $0xc8] sm:$0xff]
  %v954 = vld [vmem:[%s927 + $0xd0] sm:$0xff]
  %v955 = vld [vmem:[%s927 + $0xd8] sm:$0xff]
  %v956 = vld [vmem:[%s927 + $0xe0] sm:$0xff]
  %v957 = vld [vmem:[%s927 + $0xe8] sm:$0xff]
  %v958 = vld [vmem:[%s927 + $0xf0] sm:$0xff]
  %v959 = vld [vmem:[%s927 + $0xf8] sm:$0xff]
  %v992 = vunpack.c.l.b16 %v928
  %v993 = vunpack.c.h.b16 %v928
  %v994 = vunpack.c.l.b16 %v929
  %v995 = vunpack.c.h.b16 %v929
  %v996 = vunpack.c.l.b16 %v930
  %v997 = vunpack.c.h.b16 %v930
  %v998 = vunpack.c.l.b16 %v931
  %v999 = vunpack.c.h.b16 %v931
  %v1000 = vunpack.c.l.b16 %v932
  %v1001 = vunpack.c.h.b16 %v932
  %v1002 = vunpack.c.l.b16 %v933
  %v1003 = vunpack.c.h.b16 %v933
  %v1004 = vunpack.c.l.b16 %v934
  %v1005 = vunpack.c.h.b16 %v934
  %v1006 = vunpack.c.l.b16 %v935
  %v1007 = vunpack.c.h.b16 %v935
  %v1008 = vunpack.c.l.b16 %v936
  %v1009 = vunpack.c.h.b16 %v936
  %v1010 = vunpack.c.l.b16 %v937
  %v1011 = vunpack.c.h.b16 %v937
  %v1012 = vunpack.c.l.b16 %v938
  %v1013 = vunpack.c.h.b16 %v938
  %v1014 = vunpack.c.l.b16 %v939
  %v1015 = vunpack.c.h.b16 %v939
  %v1016 = vunpack.c.l.b16 %v940
  %v1017 = vunpack.c.h.b16 %v940
  %v1018 = vunpack.c.l.b16 %v941
  %v1019 = vunpack.c.h.b16 %v941
  %v1020 = vunpack.c.l.b16 %v942
  %v1021 = vunpack.c.h.b16 %v942
  %v1022 = vunpack.c.l.b16 %v943
  %v1023 = vunpack.c.h.b16 %v943
  %v1024 = vunpack.c.l.b16 %v944
  %v1025 = vunpack.c.h.b16 %v944
  %v1026 = vunpack.c.l.b16 %v945
  %v1027 = vunpack.c.h.b16 %v945
  %v1028 = vunpack.c.l.b16 %v946
  %v1029 = vunpack.c.h.b16 %v946
  %v1030 = vunpack.c.l.b16 %v947
  %v1031 = vunpack.c.h.b16 %v947
  %v1032 = vunpack.c.l.b16 %v948
  %v1033 = vunpack.c.h.b16 %v948
  %v1034 = vunpack.c.l.b16 %v949
  %v1035 = vunpack.c.h.b16 %v949
  %v1036 = vunpack.c.l.b16 %v950
  %v1037 = vunpack.c.h.b16 %v950
  %v1038 = vunpack.c.l.b16 %v951
  %v1039 = vunpack.c.h.b16 %v951
  %v1040 = vunpack.c.l.b16 %v952
  %v1041 = vunpack.c.h.b16 %v952
  %v1042 = vunpack.c.l.b16 %v953
  %v1043 = vunpack.c.h.b16 %v953
  %v1044 = vunpack.c.l.b16 %v954
  %v1045 = vunpack.c.h.b16 %v954
  %v1046 = vunpack.c.l.b16 %v955
  %v1047 = vunpack.c.h.b16 %v955
  %v1048 = vunpack.c.l.b16 %v956
  %v1049 = vunpack.c.h.b16 %v956
  %v1050 = vunpack.c.l.b16 %v957
  %v1051 = vunpack.c.h.b16 %v957
  %v1052 = vunpack.c.l.b16 %v958
  %v1053 = vunpack.c.h.b16 %v958
  %v1054 = vunpack.c.l.b16 %v959
  %v1055 = vunpack.c.h.b16 %v959
  %v1056 = vpack.c.b16 %v994, %v992
  %v1057 = vpack.c.b16 %v995, %v993
  %v1058 = vpack.c.b16 %v998, %v996
  %v1059 = vpack.c.b16 %v999, %v997
  %v1060 = vpack.c.b16 %v1002, %v1000
  %v1061 = vpack.c.b16 %v1003, %v1001
  %v1062 = vpack.c.b16 %v1006, %v1004
  %v1063 = vpack.c.b16 %v1007, %v1005
  %v1064 = vpack.c.b16 %v1010, %v1008
  %v1065 = vpack.c.b16 %v1011, %v1009
  %v1066 = vpack.c.b16 %v1014, %v1012
  %v1067 = vpack.c.b16 %v1015, %v1013
  %v1068 = vpack.c.b16 %v1018, %v1016
  %v1069 = vpack.c.b16 %v1019, %v1017
  %v1070 = vpack.c.b16 %v1022, %v1020
  %v1071 = vpack.c.b16 %v1023, %v1021
  %v1072 = vpack.c.b16 %v1026, %v1024
  %v1073 = vpack.c.b16 %v1027, %v1025
  %v1074 = vpack.c.b16 %v1030, %v1028
  %v1075 = vpack.c.b16 %v1031, %v1029
  %v1076 = vpack.c.b16 %v1034, %v1032
  %v1077 = vpack.c.b16 %v1035, %v1033
  %v1078 = vpack.c.b16 %v1038, %v1036
  %v1079 = vpack.c.b16 %v1039, %v1037
  %v1080 = vpack.c.b16 %v1042, %v1040
  %v1081 = vpack.c.b16 %v1043, %v1041
  %v1082 = vpack.c.b16 %v1046, %v1044
  %v1083 = vpack.c.b16 %v1047, %v1045
  %v1084 = vpack.c.b16 %v1050, %v1048
  %v1085 = vpack.c.b16 %v1051, %v1049
  %v1086 = vpack.c.b16 %v1054, %v1052
  %v1087 = vpack.c.b16 %v1055, %v1053
  %1120 = vmatpush.bf16.msra.mxu0 %v321
  %1121 = vmatpush.bf16.msra.mxu0 %v320
  %1122 = vmatpush.bf16.msra.mxu0 %v319
  %1123 = vmatpush.bf16.msra.mxu0 %v318
  %1124 = vmatpush.bf16.msra.mxu0 %v317
  %1125 = vmatpush.bf16.msra.mxu0 %v316
  %1126 = vmatpush.bf16.msra.mxu0 %v315
  %1127 = vmatpush.bf16.msra.mxu0 %v314
  %1128 = vmatmul.bf16.gmra.mxu0 %v1056
  %v1129 = vpop.f32.mrf.mxu0
  %v1130 = vadd.f32 0.0, %v1129
  %v1131 = vpop.f32.mrf.mxu0
  %v1132 = vadd.f32 0.0, %v1131
  %1133 = vmatmul.bf16.gmra.mxu0 %v1058
  %v1134 = vpop.f32.mrf.mxu0
  %v1135 = vadd.f32 0.0, %v1134
  %v1136 = vpop.f32.mrf.mxu0
  %v1137 = vadd.f32 0.0, %v1136
  %1138 = vmatmul.bf16.gmra.mxu0 %v1060
  %v1139 = vpop.f32.mrf.mxu0
  %v1140 = vadd.f32 0.0, %v1139
  %v1141 = vpop.f32.mrf.mxu0
  %v1142 = vadd.f32 0.0, %v1141
  %1143 = vmatmul.bf16.gmra.mxu0 %v1062
  %v1144 = vpop.f32.mrf.mxu0
  %v1145 = vadd.f32 0.0, %v1144
  %v1146 = vpop.f32.mrf.mxu0
  %v1147 = vadd.f32 0.0, %v1146
  %1148 = vmatmul.bf16.gmra.mxu0 %v1064
  %v1149 = vpop.f32.mrf.mxu0
  %v1150 = vadd.f32 0.0, %v1149
  %v1151 = vpop.f32.mrf.mxu0
  %v1152 = vadd.f32 0.0, %v1151
  %1153 = vmatmul.bf16.gmra.mxu0 %v1066
  %v1154 = vpop.f32.mrf.mxu0
  %v1155 = vadd.f32 0.0, %v1154
  %v1156 = vpop.f32.mrf.mxu0
  %v1157 = vadd.f32 0.0, %v1156
  %1158 = vmatmul.bf16.gmra.mxu0 %v1068
  %v1159 = vpop.f32.mrf.mxu0
  %v1160 = vadd.f32 0.0, %v1159
  %v1161 = vpop.f32.mrf.mxu0
  %v1162 = vadd.f32 0.0, %v1161
  %1163 = vmatmul.bf16.gmra.mxu0 %v1070
  %v1164 = vpop.f32.mrf.mxu0
  %v1165 = vadd.f32 0.0, %v1164
  %v1166 = vpop.f32.mrf.mxu0
  %v1167 = vadd.f32 0.0, %v1166
  %1168 = vmatmul.bf16.gmra.mxu0 %v1072
  %v1169 = vpop.f32.mrf.mxu0
  %v1170 = vadd.f32 0.0, %v1169
  %v1171 = vpop.f32.mrf.mxu0
  %v1172 = vadd.f32 0.0, %v1171
  %1173 = vmatmul.bf16.gmra.mxu0 %v1074
  %v1174 = vpop.f32.mrf.mxu0
  %v1175 = vadd.f32 0.0, %v1174
  %v1176 = vpop.f32.mrf.mxu0
  %v1177 = vadd.f32 0.0, %v1176
  %1178 = vmatmul.bf16.gmra.mxu0 %v1076
  %v1179 = vpop.f32.mrf.mxu0
  %v1180 = vadd.f32 0.0, %v1179
  %v1181 = vpop.f32.mrf.mxu0
  %v1182 = vadd.f32 0.0, %v1181
  %1183 = vmatmul.bf16.gmra.mxu0 %v1078
  %v1184 = vpop.f32.mrf.mxu0
  %v1185 = vadd.f32 0.0, %v1184
  %v1186 = vpop.f32.mrf.mxu0
  %v1187 = vadd.f32 0.0, %v1186
  %1188 = vmatmul.bf16.gmra.mxu0 %v1080
  %v1189 = vpop.f32.mrf.mxu0
  %v1190 = vadd.f32 0.0, %v1189
  %v1191 = vpop.f32.mrf.mxu0
  %v1192 = vadd.f32 0.0, %v1191
  %1193 = vmatmul.bf16.gmra.mxu0 %v1082
  %v1194 = vpop.f32.mrf.mxu0
  %v1195 = vadd.f32 0.0, %v1194
  %v1196 = vpop.f32.mrf.mxu0
  %v1197 = vadd.f32 0.0, %v1196
  %1198 = vmatmul.bf16.gmra.mxu0 %v1084
  %v1199 = vpop.f32.mrf.mxu0
  %v1200 = vadd.f32 0.0, %v1199
  %v1201 = vpop.f32.mrf.mxu0
  %v1202 = vadd.f32 0.0, %v1201
  %1203 = vmatmul.bf16.gmra.mxu0 %v1086
  %v1204 = vpop.f32.mrf.mxu0
  %v1205 = vadd.f32 0.0, %v1204
  %v1206 = vpop.f32.mrf.mxu0
  %v1207 = vadd.f32 0.0, %v1206
  %1208 = vdwg.mxu0
  %1209 = vmatpush.bf16.msra.mxu0 %v329
  %1210 = vmatpush.bf16.msra.mxu0 %v328
  %1211 = vmatpush.bf16.msra.mxu0 %v327
  %1212 = vmatpush.bf16.msra.mxu0 %v326
  %1213 = vmatpush.bf16.msra.mxu0 %v325
  %1214 = vmatpush.bf16.msra.mxu0 %v324
  %1215 = vmatpush.bf16.msra.mxu0 %v323
  %1216 = vmatpush.bf16.msra.mxu0 %v322
  %1217 = vmatmul.bf16.gmra.mxu0 %v1057
  %v1218 = vpop.f32.mrf.mxu0
  %v1219 = vadd.f32 %v1130, %v1218
  %v1220 = vpop.f32.mrf.mxu0
  %v1221 = vadd.f32 %v1132, %v1220
  %1222 = vmatmul.bf16.gmra.mxu0 %v1059
  %v1223 = vpop.f32.mrf.mxu0
  %v1224 = vadd.f32 %v1135, %v1223
  %v1225 = vpop.f32.mrf.mxu0
  %v1226 = vadd.f32 %v1137, %v1225
  %1227 = vmatmul.bf16.gmra.mxu0 %v1061
  %v1228 = vpop.f32.mrf.mxu0
  %v1229 = vadd.f32 %v1140, %v1228
  %v1230 = vpop.f32.mrf.mxu0
  %v1231 = vadd.f32 %v1142, %v1230
  %1232 = vmatmul.bf16.gmra.mxu0 %v1063
  %v1233 = vpop.f32.mrf.mxu0
  %v1234 = vadd.f32 %v1145, %v1233
  %v1235 = vpop.f32.mrf.mxu0
  %v1236 = vadd.f32 %v1147, %v1235
  %1237 = vmatmul.bf16.gmra.mxu0 %v1065
  %v1238 = vpop.f32.mrf.mxu0
  %v1239 = vadd.f32 %v1150, %v1238
  %v1240 = vpop.f32.mrf.mxu0
  %v1241 = vadd.f32 %v1152, %v1240
  %1242 = vmatmul.bf16.gmra.mxu0 %v1067
  %v1243 = vpop.f32.mrf.mxu0
  %v1244 = vadd.f32 %v1155, %v1243
  %v1245 = vpop.f32.mrf.mxu0
  %v1246 = vadd.f32 %v1157, %v1245
  %1247 = vmatmul.bf16.gmra.mxu0 %v1069
  %v1248 = vpop.f32.mrf.mxu0
  %v1249 = vadd.f32 %v1160, %v1248
  %v1250 = vpop.f32.mrf.mxu0
  %v1251 = vadd.f32 %v1162, %v1250
  %1252 = vmatmul.bf16.gmra.mxu0 %v1071
  %v1253 = vpop.f32.mrf.mxu0
  %v1254 = vadd.f32 %v1165, %v1253
  %v1255 = vpop.f32.mrf.mxu0
  %v1256 = vadd.f32 %v1167, %v1255
  %1257 = vmatmul.bf16.gmra.mxu0 %v1073
  %v1258 = vpop.f32.mrf.mxu0
  %v1259 = vadd.f32 %v1170, %v1258
  %v1260 = vpop.f32.mrf.mxu0
  %v1261 = vadd.f32 %v1172, %v1260
  %1262 = vmatmul.bf16.gmra.mxu0 %v1075
  %v1263 = vpop.f32.mrf.mxu0
  %v1264 = vadd.f32 %v1175, %v1263
  %v1265 = vpop.f32.mrf.mxu0
  %v1266 = vadd.f32 %v1177, %v1265
  %1267 = vmatmul.bf16.gmra.mxu0 %v1077
  %v1268 = vpop.f32.mrf.mxu0
  %v1269 = vadd.f32 %v1180, %v1268
  %v1270 = vpop.f32.mrf.mxu0
  %v1271 = vadd.f32 %v1182, %v1270
  %1272 = vmatmul.bf16.gmra.mxu0 %v1079
  %v1273 = vpop.f32.mrf.mxu0
  %v1274 = vadd.f32 %v1185, %v1273
  %v1275 = vpop.f32.mrf.mxu0
  %v1276 = vadd.f32 %v1187, %v1275
  %1277 = vmatmul.bf16.gmra.mxu0 %v1081
  %v1278 = vpop.f32.mrf.mxu0
  %v1279 = vadd.f32 %v1190, %v1278
  %v1280 = vpop.f32.mrf.mxu0
  %v1281 = vadd.f32 %v1192, %v1280
  %1282 = vmatmul.bf16.gmra.mxu0 %v1083
  %v1283 = vpop.f32.mrf.mxu0
  %v1284 = vadd.f32 %v1195, %v1283
  %v1285 = vpop.f32.mrf.mxu0
  %v1286 = vadd.f32 %v1197, %v1285
  %1287 = vmatmul.bf16.gmra.mxu0 %v1085
  %v1288 = vpop.f32.mrf.mxu0
  %v1289 = vadd.f32 %v1200, %v1288
  %v1290 = vpop.f32.mrf.mxu0
  %v1291 = vadd.f32 %v1202, %v1290
  %1292 = vmatmul.bf16.gmra.mxu0 %v1087
  %v1293 = vpop.f32.mrf.mxu0
  %v1294 = vadd.f32 %v1205, %v1293
  %v1295 = vpop.f32.mrf.mxu0
  %v1296 = vadd.f32 %v1207, %v1295
  %1297 = vdwg.mxu0
  %v1298 = vmax.f32 %v895, %v1219
  %v1299 = vmax.f32 %v896, %v1221
  %v1300 = vmax.f32 %v897, %v1224
  %v1301 = vmax.f32 %v898, %v1226
  %v1302 = vmax.f32 %v899, %v1229
  %v1303 = vmax.f32 %v900, %v1231
  %v1304 = vmax.f32 %v901, %v1234
  %v1305 = vmax.f32 %v902, %v1236
  %v1306 = vmax.f32 %v903, %v1239
  %v1307 = vmax.f32 %v904, %v1241
  %v1308 = vmax.f32 %v905, %v1244
  %v1309 = vmax.f32 %v906, %v1246
  %v1310 = vmax.f32 %v907, %v1249
  %v1311 = vmax.f32 %v908, %v1251
  %v1312 = vmax.f32 %v909, %v1254
  %v1313 = vmax.f32 %v910, %v1256
  %v1314 = vmax.f32 %v911, %v1259
  %v1315 = vmax.f32 %v912, %v1261
  %v1316 = vmax.f32 %v913, %v1264
  %v1317 = vmax.f32 %v914, %v1266
  %v1318 = vmax.f32 %v915, %v1269
  %v1319 = vmax.f32 %v916, %v1271
  %v1320 = vmax.f32 %v917, %v1274
  %v1321 = vmax.f32 %v918, %v1276
  %v1322 = vmax.f32 %v919, %v1279
  %v1323 = vmax.f32 %v920, %v1281
  %v1324 = vmax.f32 %v921, %v1284
  %v1325 = vmax.f32 %v922, %v1286
  %v1326 = vmax.f32 %v923, %v1289
  %v1327 = vmax.f32 %v924, %v1291
  %v1328 = vmax.f32 %v925, %v1294
  %v1329 = vmax.f32 %v926, %v1296
  %s1330 = scalar_lea.vmem %s0, 768
  %v1331 = vld [vmem:[%s1330] sm:$0xff]
  %v1332 = vld [vmem:[%s1330 + $0x8] sm:$0xff]
  %v1333 = vld [vmem:[%s1330 + $0x10] sm:$0xff]
  %v1334 = vld [vmem:[%s1330 + $0x18] sm:$0xff]
  %v1335 = vld [vmem:[%s1330 + $0x20] sm:$0xff]
  %v1336 = vld [vmem:[%s1330 + $0x28] sm:$0xff]
  %v1337 = vld [vmem:[%s1330 + $0x30] sm:$0xff]
  %v1338 = vld [vmem:[%s1330 + $0x38] sm:$0xff]
  %v1339 = vld [vmem:[%s1330 + $0x40] sm:$0xff]
  %v1340 = vld [vmem:[%s1330 + $0x48] sm:$0xff]
  %v1341 = vld [vmem:[%s1330 + $0x50] sm:$0xff]
  %v1342 = vld [vmem:[%s1330 + $0x58] sm:$0xff]
  %v1343 = vld [vmem:[%s1330 + $0x60] sm:$0xff]
  %v1344 = vld [vmem:[%s1330 + $0x68] sm:$0xff]
  %v1345 = vld [vmem:[%s1330 + $0x70] sm:$0xff]
  %v1346 = vld [vmem:[%s1330 + $0x78] sm:$0xff]
  %v1347 = vld [vmem:[%s1330 + $0x80] sm:$0xff]
  %v1348 = vld [vmem:[%s1330 + $0x88] sm:$0xff]
  %v1349 = vld [vmem:[%s1330 + $0x90] sm:$0xff]
  %v1350 = vld [vmem:[%s1330 + $0x98] sm:$0xff]
  %v1351 = vld [vmem:[%s1330 + $0xa0] sm:$0xff]
  %v1352 = vld [vmem:[%s1330 + $0xa8] sm:$0xff]
  %v1353 = vld [vmem:[%s1330 + $0xb0] sm:$0xff]
  %v1354 = vld [vmem:[%s1330 + $0xb8] sm:$0xff]
  %v1355 = vld [vmem:[%s1330 + $0xc0] sm:$0xff]
  %v1356 = vld [vmem:[%s1330 + $0xc8] sm:$0xff]
  %v1357 = vld [vmem:[%s1330 + $0xd0] sm:$0xff]
  %v1358 = vld [vmem:[%s1330 + $0xd8] sm:$0xff]
  %v1359 = vld [vmem:[%s1330 + $0xe0] sm:$0xff]
  %v1360 = vld [vmem:[%s1330 + $0xe8] sm:$0xff]
  %v1361 = vld [vmem:[%s1330 + $0xf0] sm:$0xff]
  %v1362 = vld [vmem:[%s1330 + $0xf8] sm:$0xff]
  %v1395 = vunpack.c.l.b16 %v1331
  %v1396 = vunpack.c.h.b16 %v1331
  %v1397 = vunpack.c.l.b16 %v1332
  %v1398 = vunpack.c.h.b16 %v1332
  %v1399 = vunpack.c.l.b16 %v1333
  %v1400 = vunpack.c.h.b16 %v1333
  %v1401 = vunpack.c.l.b16 %v1334
  %v1402 = vunpack.c.h.b16 %v1334
  %v1403 = vunpack.c.l.b16 %v1335
  %v1404 = vunpack.c.h.b16 %v1335
  %v1405 = vunpack.c.l.b16 %v1336
  %v1406 = vunpack.c.h.b16 %v1336
  %v1407 = vunpack.c.l.b16 %v1337
  %v1408 = vunpack.c.h.b16 %v1337
  %v1409 = vunpack.c.l.b16 %v1338
  %v1410 = vunpack.c.h.b16 %v1338
  %v1411 = vunpack.c.l.b16 %v1339
  %v1412 = vunpack.c.h.b16 %v1339
  %v1413 = vunpack.c.l.b16 %v1340
  %v1414 = vunpack.c.h.b16 %v1340
  %v1415 = vunpack.c.l.b16 %v1341
  %v1416 = vunpack.c.h.b16 %v1341
  %v1417 = vunpack.c.l.b16 %v1342
  %v1418 = vunpack.c.h.b16 %v1342
  %v1419 = vunpack.c.l.b16 %v1343
  %v1420 = vunpack.c.h.b16 %v1343
  %v1421 = vunpack.c.l.b16 %v1344
  %v1422 = vunpack.c.h.b16 %v1344
  %v1423 = vunpack.c.l.b16 %v1345
  %v1424 = vunpack.c.h.b16 %v1345
  %v1425 = vunpack.c.l.b16 %v1346
  %v1426 = vunpack.c.h.b16 %v1346
  %v1427 = vunpack.c.l.b16 %v1347
  %v1428 = vunpack.c.h.b16 %v1347
  %v1429 = vunpack.c.l.b16 %v1348
  %v1430 = vunpack.c.h.b16 %v1348
  %v1431 = vunpack.c.l.b16 %v1349
  %v1432 = vunpack.c.h.b16 %v1349
  %v1433 = vunpack.c.l.b16 %v1350
  %v1434 = vunpack.c.h.b16 %v1350
  %v1435 = vunpack.c.l.b16 %v1351
  %v1436 = vunpack.c.h.b16 %v1351
  %v1437 = vunpack.c.l.b16 %v1352
  %v1438 = vunpack.c.h.b16 %v1352
  %v1439 = vunpack.c.l.b16 %v1353
  %v1440 = vunpack.c.h.b16 %v1353
  %v1441 = vunpack.c.l.b16 %v1354
  %v1442 = vunpack.c.h.b16 %v1354
  %v1443 = vunpack.c.l.b16 %v1355
  %v1444 = vunpack.c.h.b16 %v1355
  %v1445 = vunpack.c.l.b16 %v1356
  %v1446 = vunpack.c.h.b16 %v1356
  %v1447 = vunpack.c.l.b16 %v1357
  %v1448 = vunpack.c.h.b16 %v1357
  %v1449 = vunpack.c.l.b16 %v1358
  %v1450 = vunpack.c.h.b16 %v1358
  %v1451 = vunpack.c.l.b16 %v1359
  %v1452 = vunpack.c.h.b16 %v1359
  %v1453 = vunpack.c.l.b16 %v1360
  %v1454 = vunpack.c.h.b16 %v1360
  %v1455 = vunpack.c.l.b16 %v1361
  %v1456 = vunpack.c.h.b16 %v1361
  %v1457 = vunpack.c.l.b16 %v1362
  %v1458 = vunpack.c.h.b16 %v1362
  %v1459 = vpack.c.b16 %v1397, %v1395
  %v1460 = vpack.c.b16 %v1398, %v1396
  %v1461 = vpack.c.b16 %v1401, %v1399
  %v1462 = vpack.c.b16 %v1402, %v1400
  %v1463 = vpack.c.b16 %v1405, %v1403
  %v1464 = vpack.c.b16 %v1406, %v1404
  %v1465 = vpack.c.b16 %v1409, %v1407
  %v1466 = vpack.c.b16 %v1410, %v1408
  %v1467 = vpack.c.b16 %v1413, %v1411
  %v1468 = vpack.c.b16 %v1414, %v1412
  %v1469 = vpack.c.b16 %v1417, %v1415
  %v1470 = vpack.c.b16 %v1418, %v1416
  %v1471 = vpack.c.b16 %v1421, %v1419
  %v1472 = vpack.c.b16 %v1422, %v1420
  %v1473 = vpack.c.b16 %v1425, %v1423
  %v1474 = vpack.c.b16 %v1426, %v1424
  %v1475 = vpack.c.b16 %v1429, %v1427
  %v1476 = vpack.c.b16 %v1430, %v1428
  %v1477 = vpack.c.b16 %v1433, %v1431
  %v1478 = vpack.c.b16 %v1434, %v1432
  %v1479 = vpack.c.b16 %v1437, %v1435
  %v1480 = vpack.c.b16 %v1438, %v1436
  %v1481 = vpack.c.b16 %v1441, %v1439
  %v1482 = vpack.c.b16 %v1442, %v1440
  %v1483 = vpack.c.b16 %v1445, %v1443
  %v1484 = vpack.c.b16 %v1446, %v1444
  %v1485 = vpack.c.b16 %v1449, %v1447
  %v1486 = vpack.c.b16 %v1450, %v1448
  %v1487 = vpack.c.b16 %v1453, %v1451
  %v1488 = vpack.c.b16 %v1454, %v1452
  %v1489 = vpack.c.b16 %v1457, %v1455
  %v1490 = vpack.c.b16 %v1458, %v1456
  %1523 = vmatpush.bf16.msra.mxu0 %v321
  %1524 = vmatpush.bf16.msra.mxu0 %v320
  %1525 = vmatpush.bf16.msra.mxu0 %v319
  %1526 = vmatpush.bf16.msra.mxu0 %v318
  %1527 = vmatpush.bf16.msra.mxu0 %v317
  %1528 = vmatpush.bf16.msra.mxu0 %v316
  %1529 = vmatpush.bf16.msra.mxu0 %v315
  %1530 = vmatpush.bf16.msra.mxu0 %v314
  %1531 = vmatmul.bf16.gmra.mxu0 %v1459
  %v1532 = vpop.f32.mrf.mxu0
  %v1533 = vadd.f32 0.0, %v1532
  %v1534 = vpop.f32.mrf.mxu0
  %v1535 = vadd.f32 0.0, %v1534
  %1536 = vmatmul.bf16.gmra.mxu0 %v1461
  %v1537 = vpop.f32.mrf.mxu0
  %v1538 = vadd.f32 0.0, %v1537
  %v1539 = vpop.f32.mrf.mxu0
  %v1540 = vadd.f32 0.0, %v1539
  %1541 = vmatmul.bf16.gmra.mxu0 %v1463
  %v1542 = vpop.f32.mrf.mxu0
  %v1543 = vadd.f32 0.0, %v1542
  %v1544 = vpop.f32.mrf.mxu0
  %v1545 = vadd.f32 0.0, %v1544
  %1546 = vmatmul.bf16.gmra.mxu0 %v1465
  %v1547 = vpop.f32.mrf.mxu0
  %v1548 = vadd.f32 0.0, %v1547
  %v1549 = vpop.f32.mrf.mxu0
  %v1550 = vadd.f32 0.0, %v1549
  %1551 = vmatmul.bf16.gmra.mxu0 %v1467
  %v1552 = vpop.f32.mrf.mxu0
  %v1553 = vadd.f32 0.0, %v1552
  %v1554 = vpop.f32.mrf.mxu0
  %v1555 = vadd.f32 0.0, %v1554
  %1556 = vmatmul.bf16.gmra.mxu0 %v1469
  %v1557 = vpop.f32.mrf.mxu0
  %v1558 = vadd.f32 0.0, %v1557
  %v1559 = vpop.f32.mrf.mxu0
  %v1560 = vadd.f32 0.0, %v1559
  %1561 = vmatmul.bf16.gmra.mxu0 %v1471
  %v1562 = vpop.f32.mrf.mxu0
  %v1563 = vadd.f32 0.0, %v1562
  %v1564 = vpop.f32.mrf.mxu0
  %v1565 = vadd.f32 0.0, %v1564
  %1566 = vmatmul.bf16.gmra.mxu0 %v1473
  %v1567 = vpop.f32.mrf.mxu0
  %v1568 = vadd.f32 0.0, %v1567
  %v1569 = vpop.f32.mrf.mxu0
  %v1570 = vadd.f32 0.0, %v1569
  %1571 = vmatmul.bf16.gmra.mxu0 %v1475
  %v1572 = vpop.f32.mrf.mxu0
  %v1573 = vadd.f32 0.0, %v1572
  %v1574 = vpop.f32.mrf.mxu0
  %v1575 = vadd.f32 0.0, %v1574
  %1576 = vmatmul.bf16.gmra.mxu0 %v1477
  %v1577 = vpop.f32.mrf.mxu0
  %v1578 = vadd.f32 0.0, %v1577
  %v1579 = vpop.f32.mrf.mxu0
  %v1580 = vadd.f32 0.0, %v1579
  %1581 = vmatmul.bf16.gmra.mxu0 %v1479
  %v1582 = vpop.f32.mrf.mxu0
  %v1583 = vadd.f32 0.0, %v1582
  %v1584 = vpop.f32.mrf.mxu0
  %v1585 = vadd.f32 0.0, %v1584
  %1586 = vmatmul.bf16.gmra.mxu0 %v1481
  %v1587 = vpop.f32.mrf.mxu0
  %v1588 = vadd.f32 0.0, %v1587
  %v1589 = vpop.f32.mrf.mxu0
  %v1590 = vadd.f32 0.0, %v1589
  %1591 = vmatmul.bf16.gmra.mxu0 %v1483
  %v1592 = vpop.f32.mrf.mxu0
  %v1593 = vadd.f32 0.0, %v1592
  %v1594 = vpop.f32.mrf.mxu0
  %v1595 = vadd.f32 0.0, %v1594
  %1596 = vmatmul.bf16.gmra.mxu0 %v1485
  %v1597 = vpop.f32.mrf.mxu0
  %v1598 = vadd.f32 0.0, %v1597
  %v1599 = vpop.f32.mrf.mxu0
  %v1600 = vadd.f32 0.0, %v1599
  %1601 = vmatmul.bf16.gmra.mxu0 %v1487
  %v1602 = vpop.f32.mrf.mxu0
  %v1603 = vadd.f32 0.0, %v1602
  %v1604 = vpop.f32.mrf.mxu0
  %v1605 = vadd.f32 0.0, %v1604
  %1606 = vmatmul.bf16.gmra.mxu0 %v1489
  %v1607 = vpop.f32.mrf.mxu0
  %v1608 = vadd.f32 0.0, %v1607
  %v1609 = vpop.f32.mrf.mxu0
  %v1610 = vadd.f32 0.0, %v1609
  %1611 = vdwg.mxu0
  %1612 = vmatpush.bf16.msra.mxu0 %v329
  %1613 = vmatpush.bf16.msra.mxu0 %v328
  %1614 = vmatpush.bf16.msra.mxu0 %v327
  %1615 = vmatpush.bf16.msra.mxu0 %v326
  %1616 = vmatpush.bf16.msra.mxu0 %v325
  %1617 = vmatpush.bf16.msra.mxu0 %v324
  %1618 = vmatpush.bf16.msra.mxu0 %v323
  %1619 = vmatpush.bf16.msra.mxu0 %v322
  %1620 = vmatmul.bf16.gmra.mxu0 %v1460
  %v1621 = vpop.f32.mrf.mxu0
  %v1622 = vadd.f32 %v1533, %v1621
  %v1623 = vpop.f32.mrf.mxu0
  %v1624 = vadd.f32 %v1535, %v1623
  %1625 = vmatmul.bf16.gmra.mxu0 %v1462
  %v1626 = vpop.f32.mrf.mxu0
  %v1627 = vadd.f32 %v1538, %v1626
  %v1628 = vpop.f32.mrf.mxu0
  %v1629 = vadd.f32 %v1540, %v1628
  %1630 = vmatmul.bf16.gmra.mxu0 %v1464
  %v1631 = vpop.f32.mrf.mxu0
  %v1632 = vadd.f32 %v1543, %v1631
  %v1633 = vpop.f32.mrf.mxu0
  %v1634 = vadd.f32 %v1545, %v1633
  %1635 = vmatmul.bf16.gmra.mxu0 %v1466
  %v1636 = vpop.f32.mrf.mxu0
  %v1637 = vadd.f32 %v1548, %v1636
  %v1638 = vpop.f32.mrf.mxu0
  %v1639 = vadd.f32 %v1550, %v1638
  %1640 = vmatmul.bf16.gmra.mxu0 %v1468
  %v1641 = vpop.f32.mrf.mxu0
  %v1642 = vadd.f32 %v1553, %v1641
  %v1643 = vpop.f32.mrf.mxu0
  %v1644 = vadd.f32 %v1555, %v1643
  %1645 = vmatmul.bf16.gmra.mxu0 %v1470
  %v1646 = vpop.f32.mrf.mxu0
  %v1647 = vadd.f32 %v1558, %v1646
  %v1648 = vpop.f32.mrf.mxu0
  %v1649 = vadd.f32 %v1560, %v1648
  %1650 = vmatmul.bf16.gmra.mxu0 %v1472
  %v1651 = vpop.f32.mrf.mxu0
  %v1652 = vadd.f32 %v1563, %v1651
  %v1653 = vpop.f32.mrf.mxu0
  %v1654 = vadd.f32 %v1565, %v1653
  %1655 = vmatmul.bf16.gmra.mxu0 %v1474
  %v1656 = vpop.f32.mrf.mxu0
  %v1657 = vadd.f32 %v1568, %v1656
  %v1658 = vpop.f32.mrf.mxu0
  %v1659 = vadd.f32 %v1570, %v1658
  %1660 = vmatmul.bf16.gmra.mxu0 %v1476
  %v1661 = vpop.f32.mrf.mxu0
  %v1662 = vadd.f32 %v1573, %v1661
  %v1663 = vpop.f32.mrf.mxu0
  %v1664 = vadd.f32 %v1575, %v1663
  %1665 = vmatmul.bf16.gmra.mxu0 %v1478
  %v1666 = vpop.f32.mrf.mxu0
  %v1667 = vadd.f32 %v1578, %v1666
  %v1668 = vpop.f32.mrf.mxu0
  %v1669 = vadd.f32 %v1580, %v1668
  %1670 = vmatmul.bf16.gmra.mxu0 %v1480
  %v1671 = vpop.f32.mrf.mxu0
  %v1672 = vadd.f32 %v1583, %v1671
  %v1673 = vpop.f32.mrf.mxu0
  %v1674 = vadd.f32 %v1585, %v1673
  %1675 = vmatmul.bf16.gmra.mxu0 %v1482
  %v1676 = vpop.f32.mrf.mxu0
  %v1677 = vadd.f32 %v1588, %v1676
  %v1678 = vpop.f32.mrf.mxu0
  %v1679 = vadd.f32 %v1590, %v1678
  %1680 = vmatmul.bf16.gmra.mxu0 %v1484
  %v1681 = vpop.f32.mrf.mxu0
  %v1682 = vadd.f32 %v1593, %v1681
  %v1683 = vpop.f32.mrf.mxu0
  %v1684 = vadd.f32 %v1595, %v1683
  %1685 = vmatmul.bf16.gmra.mxu0 %v1486
  %v1686 = vpop.f32.mrf.mxu0
  %v1687 = vadd.f32 %v1598, %v1686
  %v1688 = vpop.f32.mrf.mxu0
  %v1689 = vadd.f32 %v1600, %v1688
  %1690 = vmatmul.bf16.gmra.mxu0 %v1488
  %v1691 = vpop.f32.mrf.mxu0
  %v1692 = vadd.f32 %v1603, %v1691
  %v1693 = vpop.f32.mrf.mxu0
  %v1694 = vadd.f32 %v1605, %v1693
  %1695 = vmatmul.bf16.gmra.mxu0 %v1490
  %v1696 = vpop.f32.mrf.mxu0
  %v1697 = vadd.f32 %v1608, %v1696
  %v1698 = vpop.f32.mrf.mxu0
  %v1699 = vadd.f32 %v1610, %v1698
  %1700 = vdwg.mxu0
  %v1701 = vmax.f32 %v1298, %v1622
  %v1702 = vmax.f32 %v1299, %v1624
  %v1703 = vmax.f32 %v1300, %v1627
  %v1704 = vmax.f32 %v1301, %v1629
  %v1705 = vmax.f32 %v1302, %v1632
  %v1706 = vmax.f32 %v1303, %v1634
  %v1707 = vmax.f32 %v1304, %v1637
  %v1708 = vmax.f32 %v1305, %v1639
  %v1709 = vmax.f32 %v1306, %v1642
  %v1710 = vmax.f32 %v1307, %v1644
  %v1711 = vmax.f32 %v1308, %v1647
  %v1712 = vmax.f32 %v1309, %v1649
  %v1713 = vmax.f32 %v1310, %v1652
  %v1714 = vmax.f32 %v1311, %v1654
  %v1715 = vmax.f32 %v1312, %v1657
  %v1716 = vmax.f32 %v1313, %v1659
  %v1717 = vmax.f32 %v1314, %v1662
  %v1718 = vmax.f32 %v1315, %v1664
  %v1719 = vmax.f32 %v1316, %v1667
  %v1720 = vmax.f32 %v1317, %v1669
  %v1721 = vmax.f32 %v1318, %v1672
  %v1722 = vmax.f32 %v1319, %v1674
  %v1723 = vmax.f32 %v1320, %v1677
  %v1724 = vmax.f32 %v1321, %v1679
  %v1725 = vmax.f32 %v1322, %v1682
  %v1726 = vmax.f32 %v1323, %v1684
  %v1727 = vmax.f32 %v1324, %v1687
  %v1728 = vmax.f32 %v1325, %v1689
  %v1729 = vmax.f32 %v1326, %v1692
  %v1730 = vmax.f32 %v1327, %v1694
  %v1731 = vmax.f32 %v1328, %v1697
  %v1732 = vmax.f32 %v1329, %v1699
  %v1733 = vld [vmem:[%s2] sm:$0x1]
  %v1735 = vperm.slane %v1733, 0
  %v1737 = vadd.f32 %v1701, %v1735
  %v1738 = vadd.f32 %v1702, %v1735
  %v1739 = vadd.f32 %v1703, %v1735
  %v1740 = vadd.f32 %v1704, %v1735
  %v1741 = vadd.f32 %v1705, %v1735
  %v1742 = vadd.f32 %v1706, %v1735
  %v1743 = vadd.f32 %v1707, %v1735
  %v1744 = vadd.f32 %v1708, %v1735
  %v1745 = vadd.f32 %v1709, %v1735
  %v1746 = vadd.f32 %v1710, %v1735
  %v1747 = vadd.f32 %v1711, %v1735
  %v1748 = vadd.f32 %v1712, %v1735
  %v1749 = vadd.f32 %v1713, %v1735
  %v1750 = vadd.f32 %v1714, %v1735
  %v1751 = vadd.f32 %v1715, %v1735
  %v1752 = vadd.f32 %v1716, %v1735
  %v1753 = vadd.f32 %v1717, %v1735
  %v1754 = vadd.f32 %v1718, %v1735
  %v1755 = vadd.f32 %v1719, %v1735
  %v1756 = vadd.f32 %v1720, %v1735
  %v1757 = vadd.f32 %v1721, %v1735
  %v1758 = vadd.f32 %v1722, %v1735
  %v1759 = vadd.f32 %v1723, %v1735
  %v1760 = vadd.f32 %v1724, %v1735
  %v1761 = vadd.f32 %v1725, %v1735
  %v1762 = vadd.f32 %v1726, %v1735
  %v1763 = vadd.f32 %v1727, %v1735
  %v1764 = vadd.f32 %v1728, %v1735
  %v1765 = vadd.f32 %v1729, %v1735
  %v1766 = vadd.f32 %v1730, %v1735
  %v1767 = vadd.f32 %v1731, %v1735
  %v1768 = vadd.f32 %v1732, %v1735
  %v1769 = vmax.f32 %v1737, 0.0
  %v1770 = vmax.f32 %v1738, 0.0
  %v1771 = vmax.f32 %v1739, 0.0
  %v1772 = vmax.f32 %v1740, 0.0
  %v1773 = vmax.f32 %v1741, 0.0
  %v1774 = vmax.f32 %v1742, 0.0
  %v1775 = vmax.f32 %v1743, 0.0
  %v1776 = vmax.f32 %v1744, 0.0
  %v1777 = vmax.f32 %v1745, 0.0
  %v1778 = vmax.f32 %v1746, 0.0
  %v1779 = vmax.f32 %v1747, 0.0
  %v1780 = vmax.f32 %v1748, 0.0
  %v1781 = vmax.f32 %v1749, 0.0
  %v1782 = vmax.f32 %v1750, 0.0
  %v1783 = vmax.f32 %v1751, 0.0
  %v1784 = vmax.f32 %v1752, 0.0
  %v1785 = vmax.f32 %v1753, 0.0
  %v1786 = vmax.f32 %v1754, 0.0
  %v1787 = vmax.f32 %v1755, 0.0
  %v1788 = vmax.f32 %v1756, 0.0
  %v1789 = vmax.f32 %v1757, 0.0
  %v1790 = vmax.f32 %v1758, 0.0
  %v1791 = vmax.f32 %v1759, 0.0
  %v1792 = vmax.f32 %v1760, 0.0
  %v1793 = vmax.f32 %v1761, 0.0
  %v1794 = vmax.f32 %v1762, 0.0
  %v1795 = vmax.f32 %v1763, 0.0
  %v1796 = vmax.f32 %v1764, 0.0
  %v1797 = vmax.f32 %v1765, 0.0
  %v1798 = vmax.f32 %v1766, 0.0
  %v1799 = vmax.f32 %v1767, 0.0
  %v1800 = vmax.f32 %v1768, 0.0
  %v1801 = vpack.c.bf16 %v1769, %v1769
  %v1802 = vpack.c.bf16 %v1770, %v1770
  %v1803 = vpack.c.bf16 %v1771, %v1771
  %v1804 = vpack.c.bf16 %v1772, %v1772
  %v1805 = vpack.c.bf16 %v1773, %v1773
  %v1806 = vpack.c.bf16 %v1774, %v1774
  %v1807 = vpack.c.bf16 %v1775, %v1775
  %v1808 = vpack.c.bf16 %v1776, %v1776
  %v1809 = vpack.c.bf16 %v1777, %v1777
  %v1810 = vpack.c.bf16 %v1778, %v1778
  %v1811 = vpack.c.bf16 %v1779, %v1779
  %v1812 = vpack.c.bf16 %v1780, %v1780
  %v1813 = vpack.c.bf16 %v1781, %v1781
  %v1814 = vpack.c.bf16 %v1782, %v1782
  %v1815 = vpack.c.bf16 %v1783, %v1783
  %v1816 = vpack.c.bf16 %v1784, %v1784
  %v1817 = vpack.c.bf16 %v1785, %v1785
  %v1818 = vpack.c.bf16 %v1786, %v1786
  %v1819 = vpack.c.bf16 %v1787, %v1787
  %v1820 = vpack.c.bf16 %v1788, %v1788
  %v1821 = vpack.c.bf16 %v1789, %v1789
  %v1822 = vpack.c.bf16 %v1790, %v1790
  %v1823 = vpack.c.bf16 %v1791, %v1791
  %v1824 = vpack.c.bf16 %v1792, %v1792
  %v1825 = vpack.c.bf16 %v1793, %v1793
  %v1826 = vpack.c.bf16 %v1794, %v1794
  %v1827 = vpack.c.bf16 %v1795, %v1795
  %v1828 = vpack.c.bf16 %v1796, %v1796
  %v1829 = vpack.c.bf16 %v1797, %v1797
  %v1830 = vpack.c.bf16 %v1798, %v1798
  %v1831 = vpack.c.bf16 %v1799, %v1799
  %v1832 = vpack.c.bf16 %v1800, %v1800
  %v1833 = vld [vmem:[%s3] sm:$0xf]
  %v1834 = vld [vmem:[%s3 + $0x4] sm:$0xf]
  %v1835 = vld [vmem:[%s3 + $0x8] sm:$0xf]
  %v1836 = vld [vmem:[%s3 + $0xc] sm:$0xf]
  %v1837 = vld [vmem:[%s3 + $0x10] sm:$0xf]
  %v1838 = vld [vmem:[%s3 + $0x14] sm:$0xf]
  %v1839 = vld [vmem:[%s3 + $0x18] sm:$0xf]
  %v1840 = vld [vmem:[%s3 + $0x1c] sm:$0xf]
  %v1841 = vld [vmem:[%s3 + $0x20] sm:$0xf]
  %v1842 = vld [vmem:[%s3 + $0x24] sm:$0xf]
  %v1843 = vld [vmem:[%s3 + $0x28] sm:$0xf]
  %v1844 = vld [vmem:[%s3 + $0x2c] sm:$0xf]
  %v1845 = vld [vmem:[%s3 + $0x30] sm:$0xf]
  %v1846 = vld [vmem:[%s3 + $0x34] sm:$0xf]
  %v1847 = vld [vmem:[%s3 + $0x38] sm:$0xf]
  %v1848 = vld [vmem:[%s3 + $0x3c] sm:$0xf]
  %s1849 = scalar_lea.vmem %s3, 64
  %v1850 = vld [vmem:[%s1849] sm:$0xf]
  %v1851 = vld [vmem:[%s1849 + $0x4] sm:$0xf]
  %v1852 = vld [vmem:[%s1849 + $0x8] sm:$0xf]
  %v1853 = vld [vmem:[%s1849 + $0xc] sm:$0xf]
  %v1854 = vld [vmem:[%s1849 + $0x10] sm:$0xf]
  %v1855 = vld [vmem:[%s1849 + $0x14] sm:$0xf]
  %v1856 = vld [vmem:[%s1849 + $0x18] sm:$0xf]
  %v1857 = vld [vmem:[%s1849 + $0x1c] sm:$0xf]
  %v1858 = vld [vmem:[%s1849 + $0x20] sm:$0xf]
  %v1859 = vld [vmem:[%s1849 + $0x24] sm:$0xf]
  %v1860 = vld [vmem:[%s1849 + $0x28] sm:$0xf]
  %v1861 = vld [vmem:[%s1849 + $0x2c] sm:$0xf]
  %v1862 = vld [vmem:[%s1849 + $0x30] sm:$0xf]
  %v1863 = vld [vmem:[%s1849 + $0x34] sm:$0xf]
  %v1864 = vld [vmem:[%s1849 + $0x38] sm:$0xf]
  %v1865 = vld [vmem:[%s1849 + $0x3c] sm:$0xf]
  %v1868 = vunpack.c.l.b16 %v1803
  %v1869 = vunpack.c.l.b16 %v1804
  %v1870 = vpack.c.b16 %v1869, %v1868
  %v1888 = vunpack.c.l.b16 %v1850
  %v1889 = vunpack.c.l.b16 %v1851
  %v1890 = vunpack.c.l.b16 %v1852
  %v1891 = vunpack.c.l.b16 %v1853
  %v1892 = vunpack.c.l.b16 %v1854
  %v1893 = vunpack.c.l.b16 %v1855
  %v1894 = vunpack.c.l.b16 %v1856
  %v1895 = vunpack.c.l.b16 %v1857
  %v1896 = vunpack.c.l.b16 %v1858
  %v1897 = vunpack.c.l.b16 %v1859
  %v1898 = vunpack.c.l.b16 %v1860
  %v1899 = vunpack.c.l.b16 %v1861
  %v1900 = vunpack.c.l.b16 %v1862
  %v1901 = vunpack.c.l.b16 %v1863
  %v1902 = vunpack.c.l.b16 %v1864
  %v1903 = vunpack.c.l.b16 %v1865
  %v1904 = vpack.c.b16 %v1889, %v1888
  %v1905 = vpack.c.b16 %v1891, %v1890
  %v1906 = vpack.c.b16 %v1893, %v1892
  %v1907 = vpack.c.b16 %v1895, %v1894
  %v1908 = vpack.c.b16 %v1897, %v1896
  %v1909 = vpack.c.b16 %v1899, %v1898
  %v1910 = vpack.c.b16 %v1901, %v1900
  %v1911 = vpack.c.b16 %v1903, %v1902
  %1920 = vmatpush.bf16.msra.mxu0 %v1911
  %1921 = vmatpush.bf16.msra.mxu0 %v1910
  %1922 = vmatpush.bf16.msra.mxu0 %v1909
  %1923 = vmatpush.bf16.msra.mxu0 %v1908
  %1924 = vmatpush.bf16.msra.mxu0 %v1907
  %1925 = vmatpush.bf16.msra.mxu0 %v1906
  %1926 = vmatpush.bf16.msra.mxu0 %v1905
  %1927 = vmatpush.bf16.msra.mxu0 %v1904
  %1928 = vmatmul.bf16.gmra.mxu0 %v1870
  %v1929 = vpop.f32.mrf.mxu0
  %v1930 = vadd.f32 0.0, %v1929
  %v1931 = vpop.f32.mrf.mxu0
  %v1932 = vadd.f32 0.0, %v1931
  %1933 = vdwg.mxu0
  %v1936 = vunpack.c.l.b16 %v1801
  %v1937 = vunpack.c.l.b16 %v1802
  %v1938 = vpack.c.b16 %v1937, %v1936
  %v1956 = vunpack.c.l.b16 %v1833
  %v1957 = vunpack.c.l.b16 %v1834
  %v1958 = vunpack.c.l.b16 %v1835
  %v1959 = vunpack.c.l.b16 %v1836
  %v1960 = vunpack.c.l.b16 %v1837
  %v1961 = vunpack.c.l.b16 %v1838
  %v1962 = vunpack.c.l.b16 %v1839
  %v1963 = vunpack.c.l.b16 %v1840
  %v1964 = vunpack.c.l.b16 %v1841
  %v1965 = vunpack.c.l.b16 %v1842
  %v1966 = vunpack.c.l.b16 %v1843
  %v1967 = vunpack.c.l.b16 %v1844
  %v1968 = vunpack.c.l.b16 %v1845
  %v1969 = vunpack.c.l.b16 %v1846
  %v1970 = vunpack.c.l.b16 %v1847
  %v1971 = vunpack.c.l.b16 %v1848
  %v1972 = vpack.c.b16 %v1957, %v1956
  %v1973 = vpack.c.b16 %v1959, %v1958
  %v1974 = vpack.c.b16 %v1961, %v1960
  %v1975 = vpack.c.b16 %v1963, %v1962
  %v1976 = vpack.c.b16 %v1965, %v1964
  %v1977 = vpack.c.b16 %v1967, %v1966
  %v1978 = vpack.c.b16 %v1969, %v1968
  %v1979 = vpack.c.b16 %v1971, %v1970
  %1988 = vmatpush.bf16.msra.mxu0 %v1979
  %1989 = vmatpush.bf16.msra.mxu0 %v1978
  %1990 = vmatpush.bf16.msra.mxu0 %v1977
  %1991 = vmatpush.bf16.msra.mxu0 %v1976
  %1992 = vmatpush.bf16.msra.mxu0 %v1975
  %1993 = vmatpush.bf16.msra.mxu0 %v1974
  %1994 = vmatpush.bf16.msra.mxu0 %v1973
  %1995 = vmatpush.bf16.msra.mxu0 %v1972
  %1996 = vmatmul.bf16.gmra.mxu0 %v1938
  %v1997 = vpop.f32.mrf.mxu0
  %v1998 = vadd.f32 %v1930, %v1997
  %v1999 = vpop.f32.mrf.mxu0
  %v2000 = vadd.f32 %v1932, %v1999
  %2001 = vdwg.mxu0
  %s2002 = scalar_lea.vmem %s3, 128
  %v2003 = vld [vmem:[%s2002] sm:$0xf]
  %v2004 = vld [vmem:[%s2002 + $0x4] sm:$0xf]
  %v2005 = vld [vmem:[%s2002 + $0x8] sm:$0xf]
  %v2006 = vld [vmem:[%s2002 + $0xc] sm:$0xf]
  %v2007 = vld [vmem:[%s2002 + $0x10] sm:$0xf]
  %v2008 = vld [vmem:[%s2002 + $0x14] sm:$0xf]
  %v2009 = vld [vmem:[%s2002 + $0x18] sm:$0xf]
  %v2010 = vld [vmem:[%s2002 + $0x1c] sm:$0xf]
  %v2011 = vld [vmem:[%s2002 + $0x20] sm:$0xf]
  %v2012 = vld [vmem:[%s2002 + $0x24] sm:$0xf]
  %v2013 = vld [vmem:[%s2002 + $0x28] sm:$0xf]
  %v2014 = vld [vmem:[%s2002 + $0x2c] sm:$0xf]
  %v2015 = vld [vmem:[%s2002 + $0x30] sm:$0xf]
  %v2016 = vld [vmem:[%s2002 + $0x34] sm:$0xf]
  %v2017 = vld [vmem:[%s2002 + $0x38] sm:$0xf]
  %v2018 = vld [vmem:[%s2002 + $0x3c] sm:$0xf]
  %v2021 = vunpack.c.l.b16 %v1805
  %v2022 = vunpack.c.l.b16 %v1806
  %v2023 = vpack.c.b16 %v2022, %v2021
  %v2041 = vunpack.c.l.b16 %v2003
  %v2042 = vunpack.c.l.b16 %v2004
  %v2043 = vunpack.c.l.b16 %v2005
  %v2044 = vunpack.c.l.b16 %v2006
  %v2045 = vunpack.c.l.b16 %v2007
  %v2046 = vunpack.c.l.b16 %v2008
  %v2047 = vunpack.c.l.b16 %v2009
  %v2048 = vunpack.c.l.b16 %v2010
  %v2049 = vunpack.c.l.b16 %v2011
  %v2050 = vunpack.c.l.b16 %v2012
  %v2051 = vunpack.c.l.b16 %v2013
  %v2052 = vunpack.c.l.b16 %v2014
  %v2053 = vunpack.c.l.b16 %v2015
  %v2054 = vunpack.c.l.b16 %v2016
  %v2055 = vunpack.c.l.b16 %v2017
  %v2056 = vunpack.c.l.b16 %v2018
  %v2057 = vpack.c.b16 %v2042, %v2041
  %v2058 = vpack.c.b16 %v2044, %v2043
  %v2059 = vpack.c.b16 %v2046, %v2045
  %v2060 = vpack.c.b16 %v2048, %v2047
  %v2061 = vpack.c.b16 %v2050, %v2049
  %v2062 = vpack.c.b16 %v2052, %v2051
  %v2063 = vpack.c.b16 %v2054, %v2053
  %v2064 = vpack.c.b16 %v2056, %v2055
  %2073 = vmatpush.bf16.msra.mxu0 %v2064
  %2074 = vmatpush.bf16.msra.mxu0 %v2063
  %2075 = vmatpush.bf16.msra.mxu0 %v2062
  %2076 = vmatpush.bf16.msra.mxu0 %v2061
  %2077 = vmatpush.bf16.msra.mxu0 %v2060
  %2078 = vmatpush.bf16.msra.mxu0 %v2059
  %2079 = vmatpush.bf16.msra.mxu0 %v2058
  %2080 = vmatpush.bf16.msra.mxu0 %v2057
  %2081 = vmatmul.bf16.gmra.mxu0 %v2023
  %v2082 = vpop.f32.mrf.mxu0
  %v2083 = vadd.f32 0.0, %v2082
  %v2084 = vpop.f32.mrf.mxu0
  %v2085 = vadd.f32 0.0, %v2084
  %2086 = vdwg.mxu0
  %v2087 = vadd.f32 %v1998, %v2083
  %v2088 = vadd.f32 %v2000, %v2085
  %s2089 = scalar_lea.vmem %s3, 192
  %v2090 = vld [vmem:[%s2089] sm:$0xf]
  %v2091 = vld [vmem:[%s2089 + $0x4] sm:$0xf]
  %v2092 = vld [vmem:[%s2089 + $0x8] sm:$0xf]
  %v2093 = vld [vmem:[%s2089 + $0xc] sm:$0xf]
  %v2094 = vld [vmem:[%s2089 + $0x10] sm:$0xf]
  %v2095 = vld [vmem:[%s2089 + $0x14] sm:$0xf]
  %v2096 = vld [vmem:[%s2089 + $0x18] sm:$0xf]
  %v2097 = vld [vmem:[%s2089 + $0x1c] sm:$0xf]
  %v2098 = vld [vmem:[%s2089 + $0x20] sm:$0xf]
  %v2099 = vld [vmem:[%s2089 + $0x24] sm:$0xf]
  %v2100 = vld [vmem:[%s2089 + $0x28] sm:$0xf]
  %v2101 = vld [vmem:[%s2089 + $0x2c] sm:$0xf]
  %v2102 = vld [vmem:[%s2089 + $0x30] sm:$0xf]
  %v2103 = vld [vmem:[%s2089 + $0x34] sm:$0xf]
  %v2104 = vld [vmem:[%s2089 + $0x38] sm:$0xf]
  %v2105 = vld [vmem:[%s2089 + $0x3c] sm:$0xf]
  %v2108 = vunpack.c.l.b16 %v1807
  %v2109 = vunpack.c.l.b16 %v1808
  %v2110 = vpack.c.b16 %v2109, %v2108
  %v2128 = vunpack.c.l.b16 %v2090
  %v2129 = vunpack.c.l.b16 %v2091
  %v2130 = vunpack.c.l.b16 %v2092
  %v2131 = vunpack.c.l.b16 %v2093
  %v2132 = vunpack.c.l.b16 %v2094
  %v2133 = vunpack.c.l.b16 %v2095
  %v2134 = vunpack.c.l.b16 %v2096
  %v2135 = vunpack.c.l.b16 %v2097
  %v2136 = vunpack.c.l.b16 %v2098
  %v2137 = vunpack.c.l.b16 %v2099
  %v2138 = vunpack.c.l.b16 %v2100
  %v2139 = vunpack.c.l.b16 %v2101
  %v2140 = vunpack.c.l.b16 %v2102
  %v2141 = vunpack.c.l.b16 %v2103
  %v2142 = vunpack.c.l.b16 %v2104
  %v2143 = vunpack.c.l.b16 %v2105
  %v2144 = vpack.c.b16 %v2129, %v2128
  %v2145 = vpack.c.b16 %v2131, %v2130
  %v2146 = vpack.c.b16 %v2133, %v2132
  %v2147 = vpack.c.b16 %v2135, %v2134
  %v2148 = vpack.c.b16 %v2137, %v2136
  %v2149 = vpack.c.b16 %v2139, %v2138
  %v2150 = vpack.c.b16 %v2141, %v2140
  %v2151 = vpack.c.b16 %v2143, %v2142
  %2160 = vmatpush.bf16.msra.mxu0 %v2151
  %2161 = vmatpush.bf16.msra.mxu0 %v2150
  %2162 = vmatpush.bf16.msra.mxu0 %v2149
  %2163 = vmatpush.bf16.msra.mxu0 %v2148
  %2164 = vmatpush.bf16.msra.mxu0 %v2147
  %2165 = vmatpush.bf16.msra.mxu0 %v2146
  %2166 = vmatpush.bf16.msra.mxu0 %v2145
  %2167 = vmatpush.bf16.msra.mxu0 %v2144
  %2168 = vmatmul.bf16.gmra.mxu0 %v2110
  %v2169 = vpop.f32.mrf.mxu0
  %v2170 = vadd.f32 0.0, %v2169
  %v2171 = vpop.f32.mrf.mxu0
  %v2172 = vadd.f32 0.0, %v2171
  %2173 = vdwg.mxu0
  %v2174 = vadd.f32 %v2087, %v2170
  %v2175 = vadd.f32 %v2088, %v2172
  %s2176 = scalar_lea.vmem %s3, 256
  %v2177 = vld [vmem:[%s2176] sm:$0xf]
  %v2178 = vld [vmem:[%s2176 + $0x4] sm:$0xf]
  %v2179 = vld [vmem:[%s2176 + $0x8] sm:$0xf]
  %v2180 = vld [vmem:[%s2176 + $0xc] sm:$0xf]
  %v2181 = vld [vmem:[%s2176 + $0x10] sm:$0xf]
  %v2182 = vld [vmem:[%s2176 + $0x14] sm:$0xf]
  %v2183 = vld [vmem:[%s2176 + $0x18] sm:$0xf]
  %v2184 = vld [vmem:[%s2176 + $0x1c] sm:$0xf]
  %v2185 = vld [vmem:[%s2176 + $0x20] sm:$0xf]
  %v2186 = vld [vmem:[%s2176 + $0x24] sm:$0xf]
  %v2187 = vld [vmem:[%s2176 + $0x28] sm:$0xf]
  %v2188 = vld [vmem:[%s2176 + $0x2c] sm:$0xf]
  %v2189 = vld [vmem:[%s2176 + $0x30] sm:$0xf]
  %v2190 = vld [vmem:[%s2176 + $0x34] sm:$0xf]
  %v2191 = vld [vmem:[%s2176 + $0x38] sm:$0xf]
  %v2192 = vld [vmem:[%s2176 + $0x3c] sm:$0xf]
  %v2195 = vunpack.c.l.b16 %v1809
  %v2196 = vunpack.c.l.b16 %v1810
  %v2197 = vpack.c.b16 %v2196, %v2195
  %v2215 = vunpack.c.l.b16 %v2177
  %v2216 = vunpack.c.l.b16 %v2178
  %v2217 = vunpack.c.l.b16 %v2179
  %v2218 = vunpack.c.l.b16 %v2180
  %v2219 = vunpack.c.l.b16 %v2181
  %v2220 = vunpack.c.l.b16 %v2182
  %v2221 = vunpack.c.l.b16 %v2183
  %v2222 = vunpack.c.l.b16 %v2184
  %v2223 = vunpack.c.l.b16 %v2185
  %v2224 = vunpack.c.l.b16 %v2186
  %v2225 = vunpack.c.l.b16 %v2187
  %v2226 = vunpack.c.l.b16 %v2188
  %v2227 = vunpack.c.l.b16 %v2189
  %v2228 = vunpack.c.l.b16 %v2190
  %v2229 = vunpack.c.l.b16 %v2191
  %v2230 = vunpack.c.l.b16 %v2192
  %v2231 = vpack.c.b16 %v2216, %v2215
  %v2232 = vpack.c.b16 %v2218, %v2217
  %v2233 = vpack.c.b16 %v2220, %v2219
  %v2234 = vpack.c.b16 %v2222, %v2221
  %v2235 = vpack.c.b16 %v2224, %v2223
  %v2236 = vpack.c.b16 %v2226, %v2225
  %v2237 = vpack.c.b16 %v2228, %v2227
  %v2238 = vpack.c.b16 %v2230, %v2229
  %2247 = vmatpush.bf16.msra.mxu0 %v2238
  %2248 = vmatpush.bf16.msra.mxu0 %v2237
  %2249 = vmatpush.bf16.msra.mxu0 %v2236
  %2250 = vmatpush.bf16.msra.mxu0 %v2235
  %2251 = vmatpush.bf16.msra.mxu0 %v2234
  %2252 = vmatpush.bf16.msra.mxu0 %v2233
  %2253 = vmatpush.bf16.msra.mxu0 %v2232
  %2254 = vmatpush.bf16.msra.mxu0 %v2231
  %2255 = vmatmul.bf16.gmra.mxu0 %v2197
  %v2256 = vpop.f32.mrf.mxu0
  %v2257 = vadd.f32 0.0, %v2256
  %v2258 = vpop.f32.mrf.mxu0
  %v2259 = vadd.f32 0.0, %v2258
  %2260 = vdwg.mxu0
  %v2261 = vadd.f32 %v2174, %v2257
  %v2262 = vadd.f32 %v2175, %v2259
  %s2263 = scalar_lea.vmem %s3, 320
  %v2264 = vld [vmem:[%s2263] sm:$0xf]
  %v2265 = vld [vmem:[%s2263 + $0x4] sm:$0xf]
  %v2266 = vld [vmem:[%s2263 + $0x8] sm:$0xf]
  %v2267 = vld [vmem:[%s2263 + $0xc] sm:$0xf]
  %v2268 = vld [vmem:[%s2263 + $0x10] sm:$0xf]
  %v2269 = vld [vmem:[%s2263 + $0x14] sm:$0xf]
  %v2270 = vld [vmem:[%s2263 + $0x18] sm:$0xf]
  %v2271 = vld [vmem:[%s2263 + $0x1c] sm:$0xf]
  %v2272 = vld [vmem:[%s2263 + $0x20] sm:$0xf]
  %v2273 = vld [vmem:[%s2263 + $0x24] sm:$0xf]
  %v2274 = vld [vmem:[%s2263 + $0x28] sm:$0xf]
  %v2275 = vld [vmem:[%s2263 + $0x2c] sm:$0xf]
  %v2276 = vld [vmem:[%s2263 + $0x30] sm:$0xf]
  %v2277 = vld [vmem:[%s2263 + $0x34] sm:$0xf]
  %v2278 = vld [vmem:[%s2263 + $0x38] sm:$0xf]
  %v2279 = vld [vmem:[%s2263 + $0x3c] sm:$0xf]
  %v2282 = vunpack.c.l.b16 %v1811
  %v2283 = vunpack.c.l.b16 %v1812
  %v2284 = vpack.c.b16 %v2283, %v2282
  %v2302 = vunpack.c.l.b16 %v2264
  %v2303 = vunpack.c.l.b16 %v2265
  %v2304 = vunpack.c.l.b16 %v2266
  %v2305 = vunpack.c.l.b16 %v2267
  %v2306 = vunpack.c.l.b16 %v2268
  %v2307 = vunpack.c.l.b16 %v2269
  %v2308 = vunpack.c.l.b16 %v2270
  %v2309 = vunpack.c.l.b16 %v2271
  %v2310 = vunpack.c.l.b16 %v2272
  %v2311 = vunpack.c.l.b16 %v2273
  %v2312 = vunpack.c.l.b16 %v2274
  %v2313 = vunpack.c.l.b16 %v2275
  %v2314 = vunpack.c.l.b16 %v2276
  %v2315 = vunpack.c.l.b16 %v2277
  %v2316 = vunpack.c.l.b16 %v2278
  %v2317 = vunpack.c.l.b16 %v2279
  %v2318 = vpack.c.b16 %v2303, %v2302
  %v2319 = vpack.c.b16 %v2305, %v2304
  %v2320 = vpack.c.b16 %v2307, %v2306
  %v2321 = vpack.c.b16 %v2309, %v2308
  %v2322 = vpack.c.b16 %v2311, %v2310
  %v2323 = vpack.c.b16 %v2313, %v2312
  %v2324 = vpack.c.b16 %v2315, %v2314
  %v2325 = vpack.c.b16 %v2317, %v2316
  %2334 = vmatpush.bf16.msra.mxu0 %v2325
  %2335 = vmatpush.bf16.msra.mxu0 %v2324
  %2336 = vmatpush.bf16.msra.mxu0 %v2323
  %2337 = vmatpush.bf16.msra.mxu0 %v2322
  %2338 = vmatpush.bf16.msra.mxu0 %v2321
  %2339 = vmatpush.bf16.msra.mxu0 %v2320
  %2340 = vmatpush.bf16.msra.mxu0 %v2319
  %2341 = vmatpush.bf16.msra.mxu0 %v2318
  %2342 = vmatmul.bf16.gmra.mxu0 %v2284
  %v2343 = vpop.f32.mrf.mxu0
  %v2344 = vadd.f32 0.0, %v2343
  %v2345 = vpop.f32.mrf.mxu0
  %v2346 = vadd.f32 0.0, %v2345
  %2347 = vdwg.mxu0
  %v2348 = vadd.f32 %v2261, %v2344
  %v2349 = vadd.f32 %v2262, %v2346
  %s2350 = scalar_lea.vmem %s3, 384
  %v2351 = vld [vmem:[%s2350] sm:$0xf]
  %v2352 = vld [vmem:[%s2350 + $0x4] sm:$0xf]
  %v2353 = vld [vmem:[%s2350 + $0x8] sm:$0xf]
  %v2354 = vld [vmem:[%s2350 + $0xc] sm:$0xf]
  %v2355 = vld [vmem:[%s2350 + $0x10] sm:$0xf]
  %v2356 = vld [vmem:[%s2350 + $0x14] sm:$0xf]
  %v2357 = vld [vmem:[%s2350 + $0x18] sm:$0xf]
  %v2358 = vld [vmem:[%s2350 + $0x1c] sm:$0xf]
  %v2359 = vld [vmem:[%s2350 + $0x20] sm:$0xf]
  %v2360 = vld [vmem:[%s2350 + $0x24] sm:$0xf]
  %v2361 = vld [vmem:[%s2350 + $0x28] sm:$0xf]
  %v2362 = vld [vmem:[%s2350 + $0x2c] sm:$0xf]
  %v2363 = vld [vmem:[%s2350 + $0x30] sm:$0xf]
  %v2364 = vld [vmem:[%s2350 + $0x34] sm:$0xf]
  %v2365 = vld [vmem:[%s2350 + $0x38] sm:$0xf]
  %v2366 = vld [vmem:[%s2350 + $0x3c] sm:$0xf]
  %v2369 = vunpack.c.l.b16 %v1813
  %v2370 = vunpack.c.l.b16 %v1814
  %v2371 = vpack.c.b16 %v2370, %v2369
  %v2389 = vunpack.c.l.b16 %v2351
  %v2390 = vunpack.c.l.b16 %v2352
  %v2391 = vunpack.c.l.b16 %v2353
  %v2392 = vunpack.c.l.b16 %v2354
  %v2393 = vunpack.c.l.b16 %v2355
  %v2394 = vunpack.c.l.b16 %v2356
  %v2395 = vunpack.c.l.b16 %v2357
  %v2396 = vunpack.c.l.b16 %v2358
  %v2397 = vunpack.c.l.b16 %v2359
  %v2398 = vunpack.c.l.b16 %v2360
  %v2399 = vunpack.c.l.b16 %v2361
  %v2400 = vunpack.c.l.b16 %v2362
  %v2401 = vunpack.c.l.b16 %v2363
  %v2402 = vunpack.c.l.b16 %v2364
  %v2403 = vunpack.c.l.b16 %v2365
  %v2404 = vunpack.c.l.b16 %v2366
  %v2405 = vpack.c.b16 %v2390, %v2389
  %v2406 = vpack.c.b16 %v2392, %v2391
  %v2407 = vpack.c.b16 %v2394, %v2393
  %v2408 = vpack.c.b16 %v2396, %v2395
  %v2409 = vpack.c.b16 %v2398, %v2397
  %v2410 = vpack.c.b16 %v2400, %v2399
  %v2411 = vpack.c.b16 %v2402, %v2401
  %v2412 = vpack.c.b16 %v2404, %v2403
  %2421 = vmatpush.bf16.msra.mxu0 %v2412
  %2422 = vmatpush.bf16.msra.mxu0 %v2411
  %2423 = vmatpush.bf16.msra.mxu0 %v2410
  %2424 = vmatpush.bf16.msra.mxu0 %v2409
  %2425 = vmatpush.bf16.msra.mxu0 %v2408
  %2426 = vmatpush.bf16.msra.mxu0 %v2407
  %2427 = vmatpush.bf16.msra.mxu0 %v2406
  %2428 = vmatpush.bf16.msra.mxu0 %v2405
  %2429 = vmatmul.bf16.gmra.mxu0 %v2371
  %v2430 = vpop.f32.mrf.mxu0
  %v2431 = vadd.f32 0.0, %v2430
  %v2432 = vpop.f32.mrf.mxu0
  %v2433 = vadd.f32 0.0, %v2432
  %2434 = vdwg.mxu0
  %v2435 = vadd.f32 %v2348, %v2431
  %v2436 = vadd.f32 %v2349, %v2433
  %s2437 = scalar_lea.vmem %s3, 448
  %v2438 = vld [vmem:[%s2437] sm:$0xf]
  %v2439 = vld [vmem:[%s2437 + $0x4] sm:$0xf]
  %v2440 = vld [vmem:[%s2437 + $0x8] sm:$0xf]
  %v2441 = vld [vmem:[%s2437 + $0xc] sm:$0xf]
  %v2442 = vld [vmem:[%s2437 + $0x10] sm:$0xf]
  %v2443 = vld [vmem:[%s2437 + $0x14] sm:$0xf]
  %v2444 = vld [vmem:[%s2437 + $0x18] sm:$0xf]
  %v2445 = vld [vmem:[%s2437 + $0x1c] sm:$0xf]
  %v2446 = vld [vmem:[%s2437 + $0x20] sm:$0xf]
  %v2447 = vld [vmem:[%s2437 + $0x24] sm:$0xf]
  %v2448 = vld [vmem:[%s2437 + $0x28] sm:$0xf]
  %v2449 = vld [vmem:[%s2437 + $0x2c] sm:$0xf]
  %v2450 = vld [vmem:[%s2437 + $0x30] sm:$0xf]
  %v2451 = vld [vmem:[%s2437 + $0x34] sm:$0xf]
  %v2452 = vld [vmem:[%s2437 + $0x38] sm:$0xf]
  %v2453 = vld [vmem:[%s2437 + $0x3c] sm:$0xf]
  %v2456 = vunpack.c.l.b16 %v1815
  %v2457 = vunpack.c.l.b16 %v1816
  %v2458 = vpack.c.b16 %v2457, %v2456
  %v2476 = vunpack.c.l.b16 %v2438
  %v2477 = vunpack.c.l.b16 %v2439
  %v2478 = vunpack.c.l.b16 %v2440
  %v2479 = vunpack.c.l.b16 %v2441
  %v2480 = vunpack.c.l.b16 %v2442
  %v2481 = vunpack.c.l.b16 %v2443
  %v2482 = vunpack.c.l.b16 %v2444
  %v2483 = vunpack.c.l.b16 %v2445
  %v2484 = vunpack.c.l.b16 %v2446
  %v2485 = vunpack.c.l.b16 %v2447
  %v2486 = vunpack.c.l.b16 %v2448
  %v2487 = vunpack.c.l.b16 %v2449
  %v2488 = vunpack.c.l.b16 %v2450
  %v2489 = vunpack.c.l.b16 %v2451
  %v2490 = vunpack.c.l.b16 %v2452
  %v2491 = vunpack.c.l.b16 %v2453
  %v2492 = vpack.c.b16 %v2477, %v2476
  %v2493 = vpack.c.b16 %v2479, %v2478
  %v2494 = vpack.c.b16 %v2481, %v2480
  %v2495 = vpack.c.b16 %v2483, %v2482
  %v2496 = vpack.c.b16 %v2485, %v2484
  %v2497 = vpack.c.b16 %v2487, %v2486
  %v2498 = vpack.c.b16 %v2489, %v2488
  %v2499 = vpack.c.b16 %v2491, %v2490
  %2508 = vmatpush.bf16.msra.mxu0 %v2499
  %2509 = vmatpush.bf16.msra.mxu0 %v2498
  %2510 = vmatpush.bf16.msra.mxu0 %v2497
  %2511 = vmatpush.bf16.msra.mxu0 %v2496
  %2512 = vmatpush.bf16.msra.mxu0 %v2495
  %2513 = vmatpush.bf16.msra.mxu0 %v2494
  %2514 = vmatpush.bf16.msra.mxu0 %v2493
  %2515 = vmatpush.bf16.msra.mxu0 %v2492
  %2516 = vmatmul.bf16.gmra.mxu0 %v2458
  %v2517 = vpop.f32.mrf.mxu0
  %v2518 = vadd.f32 0.0, %v2517
  %v2519 = vpop.f32.mrf.mxu0
  %v2520 = vadd.f32 0.0, %v2519
  %2521 = vdwg.mxu0
  %v2522 = vadd.f32 %v2435, %v2518
  %v2523 = vadd.f32 %v2436, %v2520
  %s2524 = scalar_lea.vmem %s3, 512
  %v2525 = vld [vmem:[%s2524] sm:$0xf]
  %v2526 = vld [vmem:[%s2524 + $0x4] sm:$0xf]
  %v2527 = vld [vmem:[%s2524 + $0x8] sm:$0xf]
  %v2528 = vld [vmem:[%s2524 + $0xc] sm:$0xf]
  %v2529 = vld [vmem:[%s2524 + $0x10] sm:$0xf]
  %v2530 = vld [vmem:[%s2524 + $0x14] sm:$0xf]
  %v2531 = vld [vmem:[%s2524 + $0x18] sm:$0xf]
  %v2532 = vld [vmem:[%s2524 + $0x1c] sm:$0xf]
  %v2533 = vld [vmem:[%s2524 + $0x20] sm:$0xf]
  %v2534 = vld [vmem:[%s2524 + $0x24] sm:$0xf]
  %v2535 = vld [vmem:[%s2524 + $0x28] sm:$0xf]
  %v2536 = vld [vmem:[%s2524 + $0x2c] sm:$0xf]
  %v2537 = vld [vmem:[%s2524 + $0x30] sm:$0xf]
  %v2538 = vld [vmem:[%s2524 + $0x34] sm:$0xf]
  %v2539 = vld [vmem:[%s2524 + $0x38] sm:$0xf]
  %v2540 = vld [vmem:[%s2524 + $0x3c] sm:$0xf]
  %v2543 = vunpack.c.l.b16 %v1817
  %v2544 = vunpack.c.l.b16 %v1818
  %v2545 = vpack.c.b16 %v2544, %v2543
  %v2563 = vunpack.c.l.b16 %v2525
  %v2564 = vunpack.c.l.b16 %v2526
  %v2565 = vunpack.c.l.b16 %v2527
  %v2566 = vunpack.c.l.b16 %v2528
  %v2567 = vunpack.c.l.b16 %v2529
  %v2568 = vunpack.c.l.b16 %v2530
  %v2569 = vunpack.c.l.b16 %v2531
  %v2570 = vunpack.c.l.b16 %v2532
  %v2571 = vunpack.c.l.b16 %v2533
  %v2572 = vunpack.c.l.b16 %v2534
  %v2573 = vunpack.c.l.b16 %v2535
  %v2574 = vunpack.c.l.b16 %v2536
  %v2575 = vunpack.c.l.b16 %v2537
  %v2576 = vunpack.c.l.b16 %v2538
  %v2577 = vunpack.c.l.b16 %v2539
  %v2578 = vunpack.c.l.b16 %v2540
  %v2579 = vpack.c.b16 %v2564, %v2563
  %v2580 = vpack.c.b16 %v2566, %v2565
  %v2581 = vpack.c.b16 %v2568, %v2567
  %v2582 = vpack.c.b16 %v2570, %v2569
  %v2583 = vpack.c.b16 %v2572, %v2571
  %v2584 = vpack.c.b16 %v2574, %v2573
  %v2585 = vpack.c.b16 %v2576, %v2575
  %v2586 = vpack.c.b16 %v2578, %v2577
  %2595 = vmatpush.bf16.msra.mxu0 %v2586
  %2596 = vmatpush.bf16.msra.mxu0 %v2585
  %2597 = vmatpush.bf16.msra.mxu0 %v2584
  %2598 = vmatpush.bf16.msra.mxu0 %v2583
  %2599 = vmatpush.bf16.msra.mxu0 %v2582
  %2600 = vmatpush.bf16.msra.mxu0 %v2581
  %2601 = vmatpush.bf16.msra.mxu0 %v2580
  %2602 = vmatpush.bf16.msra.mxu0 %v2579
  %2603 = vmatmul.bf16.gmra.mxu0 %v2545
  %v2604 = vpop.f32.mrf.mxu0
  %v2605 = vadd.f32 0.0, %v2604
  %v2606 = vpop.f32.mrf.mxu0
  %v2607 = vadd.f32 0.0, %v2606
  %2608 = vdwg.mxu0
  %v2609 = vadd.f32 %v2522, %v2605
  %v2610 = vadd.f32 %v2523, %v2607
  %s2611 = scalar_lea.vmem %s3, 576
  %v2612 = vld [vmem:[%s2611] sm:$0xf]
  %v2613 = vld [vmem:[%s2611 + $0x4] sm:$0xf]
  %v2614 = vld [vmem:[%s2611 + $0x8] sm:$0xf]
  %v2615 = vld [vmem:[%s2611 + $0xc] sm:$0xf]
  %v2616 = vld [vmem:[%s2611 + $0x10] sm:$0xf]
  %v2617 = vld [vmem:[%s2611 + $0x14] sm:$0xf]
  %v2618 = vld [vmem:[%s2611 + $0x18] sm:$0xf]
  %v2619 = vld [vmem:[%s2611 + $0x1c] sm:$0xf]
  %v2620 = vld [vmem:[%s2611 + $0x20] sm:$0xf]
  %v2621 = vld [vmem:[%s2611 + $0x24] sm:$0xf]
  %v2622 = vld [vmem:[%s2611 + $0x28] sm:$0xf]
  %v2623 = vld [vmem:[%s2611 + $0x2c] sm:$0xf]
  %v2624 = vld [vmem:[%s2611 + $0x30] sm:$0xf]
  %v2625 = vld [vmem:[%s2611 + $0x34] sm:$0xf]
  %v2626 = vld [vmem:[%s2611 + $0x38] sm:$0xf]
  %v2627 = vld [vmem:[%s2611 + $0x3c] sm:$0xf]
  %v2630 = vunpack.c.l.b16 %v1819
  %v2631 = vunpack.c.l.b16 %v1820
  %v2632 = vpack.c.b16 %v2631, %v2630
  %v2650 = vunpack.c.l.b16 %v2612
  %v2651 = vunpack.c.l.b16 %v2613
  %v2652 = vunpack.c.l.b16 %v2614
  %v2653 = vunpack.c.l.b16 %v2615
  %v2654 = vunpack.c.l.b16 %v2616
  %v2655 = vunpack.c.l.b16 %v2617
  %v2656 = vunpack.c.l.b16 %v2618
  %v2657 = vunpack.c.l.b16 %v2619
  %v2658 = vunpack.c.l.b16 %v2620
  %v2659 = vunpack.c.l.b16 %v2621
  %v2660 = vunpack.c.l.b16 %v2622
  %v2661 = vunpack.c.l.b16 %v2623
  %v2662 = vunpack.c.l.b16 %v2624
  %v2663 = vunpack.c.l.b16 %v2625
  %v2664 = vunpack.c.l.b16 %v2626
  %v2665 = vunpack.c.l.b16 %v2627
  %v2666 = vpack.c.b16 %v2651, %v2650
  %v2667 = vpack.c.b16 %v2653, %v2652
  %v2668 = vpack.c.b16 %v2655, %v2654
  %v2669 = vpack.c.b16 %v2657, %v2656
  %v2670 = vpack.c.b16 %v2659, %v2658
  %v2671 = vpack.c.b16 %v2661, %v2660
  %v2672 = vpack.c.b16 %v2663, %v2662
  %v2673 = vpack.c.b16 %v2665, %v2664
  %2682 = vmatpush.bf16.msra.mxu0 %v2673
  %2683 = vmatpush.bf16.msra.mxu0 %v2672
  %2684 = vmatpush.bf16.msra.mxu0 %v2671
  %2685 = vmatpush.bf16.msra.mxu0 %v2670
  %2686 = vmatpush.bf16.msra.mxu0 %v2669
  %2687 = vmatpush.bf16.msra.mxu0 %v2668
  %2688 = vmatpush.bf16.msra.mxu0 %v2667
  %2689 = vmatpush.bf16.msra.mxu0 %v2666
  %2690 = vmatmul.bf16.gmra.mxu0 %v2632
  %v2691 = vpop.f32.mrf.mxu0
  %v2692 = vadd.f32 0.0, %v2691
  %v2693 = vpop.f32.mrf.mxu0
  %v2694 = vadd.f32 0.0, %v2693
  %2695 = vdwg.mxu0
  %v2696 = vadd.f32 %v2609, %v2692
  %v2697 = vadd.f32 %v2610, %v2694
  %s2698 = scalar_lea.vmem %s3, 640
  %v2699 = vld [vmem:[%s2698] sm:$0xf]
  %v2700 = vld [vmem:[%s2698 + $0x4] sm:$0xf]
  %v2701 = vld [vmem:[%s2698 + $0x8] sm:$0xf]
  %v2702 = vld [vmem:[%s2698 + $0xc] sm:$0xf]
  %v2703 = vld [vmem:[%s2698 + $0x10] sm:$0xf]
  %v2704 = vld [vmem:[%s2698 + $0x14] sm:$0xf]
  %v2705 = vld [vmem:[%s2698 + $0x18] sm:$0xf]
  %v2706 = vld [vmem:[%s2698 + $0x1c] sm:$0xf]
  %v2707 = vld [vmem:[%s2698 + $0x20] sm:$0xf]
  %v2708 = vld [vmem:[%s2698 + $0x24] sm:$0xf]
  %v2709 = vld [vmem:[%s2698 + $0x28] sm:$0xf]
  %v2710 = vld [vmem:[%s2698 + $0x2c] sm:$0xf]
  %v2711 = vld [vmem:[%s2698 + $0x30] sm:$0xf]
  %v2712 = vld [vmem:[%s2698 + $0x34] sm:$0xf]
  %v2713 = vld [vmem:[%s2698 + $0x38] sm:$0xf]
  %v2714 = vld [vmem:[%s2698 + $0x3c] sm:$0xf]
  %v2717 = vunpack.c.l.b16 %v1821
  %v2718 = vunpack.c.l.b16 %v1822
  %v2719 = vpack.c.b16 %v2718, %v2717
  %v2737 = vunpack.c.l.b16 %v2699
  %v2738 = vunpack.c.l.b16 %v2700
  %v2739 = vunpack.c.l.b16 %v2701
  %v2740 = vunpack.c.l.b16 %v2702
  %v2741 = vunpack.c.l.b16 %v2703
  %v2742 = vunpack.c.l.b16 %v2704
  %v2743 = vunpack.c.l.b16 %v2705
  %v2744 = vunpack.c.l.b16 %v2706
  %v2745 = vunpack.c.l.b16 %v2707
  %v2746 = vunpack.c.l.b16 %v2708
  %v2747 = vunpack.c.l.b16 %v2709
  %v2748 = vunpack.c.l.b16 %v2710
  %v2749 = vunpack.c.l.b16 %v2711
  %v2750 = vunpack.c.l.b16 %v2712
  %v2751 = vunpack.c.l.b16 %v2713
  %v2752 = vunpack.c.l.b16 %v2714
  %v2753 = vpack.c.b16 %v2738, %v2737
  %v2754 = vpack.c.b16 %v2740, %v2739
  %v2755 = vpack.c.b16 %v2742, %v2741
  %v2756 = vpack.c.b16 %v2744, %v2743
  %v2757 = vpack.c.b16 %v2746, %v2745
  %v2758 = vpack.c.b16 %v2748, %v2747
  %v2759 = vpack.c.b16 %v2750, %v2749
  %v2760 = vpack.c.b16 %v2752, %v2751
  %2769 = vmatpush.bf16.msra.mxu0 %v2760
  %2770 = vmatpush.bf16.msra.mxu0 %v2759
  %2771 = vmatpush.bf16.msra.mxu0 %v2758
  %2772 = vmatpush.bf16.msra.mxu0 %v2757
  %2773 = vmatpush.bf16.msra.mxu0 %v2756
  %2774 = vmatpush.bf16.msra.mxu0 %v2755
  %2775 = vmatpush.bf16.msra.mxu0 %v2754
  %2776 = vmatpush.bf16.msra.mxu0 %v2753
  %2777 = vmatmul.bf16.gmra.mxu0 %v2719
  %v2778 = vpop.f32.mrf.mxu0
  %v2779 = vadd.f32 0.0, %v2778
  %v2780 = vpop.f32.mrf.mxu0
  %v2781 = vadd.f32 0.0, %v2780
  %2782 = vdwg.mxu0
  %v2783 = vadd.f32 %v2696, %v2779
  %v2784 = vadd.f32 %v2697, %v2781
  %s2785 = scalar_lea.vmem %s3, 704
  %v2786 = vld [vmem:[%s2785] sm:$0xf]
  %v2787 = vld [vmem:[%s2785 + $0x4] sm:$0xf]
  %v2788 = vld [vmem:[%s2785 + $0x8] sm:$0xf]
  %v2789 = vld [vmem:[%s2785 + $0xc] sm:$0xf]
  %v2790 = vld [vmem:[%s2785 + $0x10] sm:$0xf]
  %v2791 = vld [vmem:[%s2785 + $0x14] sm:$0xf]
  %v2792 = vld [vmem:[%s2785 + $0x18] sm:$0xf]
  %v2793 = vld [vmem:[%s2785 + $0x1c] sm:$0xf]
  %v2794 = vld [vmem:[%s2785 + $0x20] sm:$0xf]
  %v2795 = vld [vmem:[%s2785 + $0x24] sm:$0xf]
  %v2796 = vld [vmem:[%s2785 + $0x28] sm:$0xf]
  %v2797 = vld [vmem:[%s2785 + $0x2c] sm:$0xf]
  %v2798 = vld [vmem:[%s2785 + $0x30] sm:$0xf]
  %v2799 = vld [vmem:[%s2785 + $0x34] sm:$0xf]
  %v2800 = vld [vmem:[%s2785 + $0x38] sm:$0xf]
  %v2801 = vld [vmem:[%s2785 + $0x3c] sm:$0xf]
  %v2804 = vunpack.c.l.b16 %v1823
  %v2805 = vunpack.c.l.b16 %v1824
  %v2806 = vpack.c.b16 %v2805, %v2804
  %v2824 = vunpack.c.l.b16 %v2786
  %v2825 = vunpack.c.l.b16 %v2787
  %v2826 = vunpack.c.l.b16 %v2788
  %v2827 = vunpack.c.l.b16 %v2789
  %v2828 = vunpack.c.l.b16 %v2790
  %v2829 = vunpack.c.l.b16 %v2791
  %v2830 = vunpack.c.l.b16 %v2792
  %v2831 = vunpack.c.l.b16 %v2793
  %v2832 = vunpack.c.l.b16 %v2794
  %v2833 = vunpack.c.l.b16 %v2795
  %v2834 = vunpack.c.l.b16 %v2796
  %v2835 = vunpack.c.l.b16 %v2797
  %v2836 = vunpack.c.l.b16 %v2798
  %v2837 = vunpack.c.l.b16 %v2799
  %v2838 = vunpack.c.l.b16 %v2800
  %v2839 = vunpack.c.l.b16 %v2801
  %v2840 = vpack.c.b16 %v2825, %v2824
  %v2841 = vpack.c.b16 %v2827, %v2826
  %v2842 = vpack.c.b16 %v2829, %v2828
  %v2843 = vpack.c.b16 %v2831, %v2830
  %v2844 = vpack.c.b16 %v2833, %v2832
  %v2845 = vpack.c.b16 %v2835, %v2834
  %v2846 = vpack.c.b16 %v2837, %v2836
  %v2847 = vpack.c.b16 %v2839, %v2838
  %2856 = vmatpush.bf16.msra.mxu0 %v2847
  %2857 = vmatpush.bf16.msra.mxu0 %v2846
  %2858 = vmatpush.bf16.msra.mxu0 %v2845
  %2859 = vmatpush.bf16.msra.mxu0 %v2844
  %2860 = vmatpush.bf16.msra.mxu0 %v2843
  %2861 = vmatpush.bf16.msra.mxu0 %v2842
  %2862 = vmatpush.bf16.msra.mxu0 %v2841
  %2863 = vmatpush.bf16.msra.mxu0 %v2840
  %2864 = vmatmul.bf16.gmra.mxu0 %v2806
  %v2865 = vpop.f32.mrf.mxu0
  %v2866 = vadd.f32 0.0, %v2865
  %v2867 = vpop.f32.mrf.mxu0
  %v2868 = vadd.f32 0.0, %v2867
  %2869 = vdwg.mxu0
  %v2870 = vadd.f32 %v2783, %v2866
  %v2871 = vadd.f32 %v2784, %v2868
  %s2872 = scalar_lea.vmem %s3, 768
  %v2873 = vld [vmem:[%s2872] sm:$0xf]
  %v2874 = vld [vmem:[%s2872 + $0x4] sm:$0xf]
  %v2875 = vld [vmem:[%s2872 + $0x8] sm:$0xf]
  %v2876 = vld [vmem:[%s2872 + $0xc] sm:$0xf]
  %v2877 = vld [vmem:[%s2872 + $0x10] sm:$0xf]
  %v2878 = vld [vmem:[%s2872 + $0x14] sm:$0xf]
  %v2879 = vld [vmem:[%s2872 + $0x18] sm:$0xf]
  %v2880 = vld [vmem:[%s2872 + $0x1c] sm:$0xf]
  %v2881 = vld [vmem:[%s2872 + $0x20] sm:$0xf]
  %v2882 = vld [vmem:[%s2872 + $0x24] sm:$0xf]
  %v2883 = vld [vmem:[%s2872 + $0x28] sm:$0xf]
  %v2884 = vld [vmem:[%s2872 + $0x2c] sm:$0xf]
  %v2885 = vld [vmem:[%s2872 + $0x30] sm:$0xf]
  %v2886 = vld [vmem:[%s2872 + $0x34] sm:$0xf]
  %v2887 = vld [vmem:[%s2872 + $0x38] sm:$0xf]
  %v2888 = vld [vmem:[%s2872 + $0x3c] sm:$0xf]
  %v2891 = vunpack.c.l.b16 %v1825
  %v2892 = vunpack.c.l.b16 %v1826
  %v2893 = vpack.c.b16 %v2892, %v2891
  %v2911 = vunpack.c.l.b16 %v2873
  %v2912 = vunpack.c.l.b16 %v2874
  %v2913 = vunpack.c.l.b16 %v2875
  %v2914 = vunpack.c.l.b16 %v2876
  %v2915 = vunpack.c.l.b16 %v2877
  %v2916 = vunpack.c.l.b16 %v2878
  %v2917 = vunpack.c.l.b16 %v2879
  %v2918 = vunpack.c.l.b16 %v2880
  %v2919 = vunpack.c.l.b16 %v2881
  %v2920 = vunpack.c.l.b16 %v2882
  %v2921 = vunpack.c.l.b16 %v2883
  %v2922 = vunpack.c.l.b16 %v2884
  %v2923 = vunpack.c.l.b16 %v2885
  %v2924 = vunpack.c.l.b16 %v2886
  %v2925 = vunpack.c.l.b16 %v2887
  %v2926 = vunpack.c.l.b16 %v2888
  %v2927 = vpack.c.b16 %v2912, %v2911
  %v2928 = vpack.c.b16 %v2914, %v2913
  %v2929 = vpack.c.b16 %v2916, %v2915
  %v2930 = vpack.c.b16 %v2918, %v2917
  %v2931 = vpack.c.b16 %v2920, %v2919
  %v2932 = vpack.c.b16 %v2922, %v2921
  %v2933 = vpack.c.b16 %v2924, %v2923
  %v2934 = vpack.c.b16 %v2926, %v2925
  %2943 = vmatpush.bf16.msra.mxu0 %v2934
  %2944 = vmatpush.bf16.msra.mxu0 %v2933
  %2945 = vmatpush.bf16.msra.mxu0 %v2932
  %2946 = vmatpush.bf16.msra.mxu0 %v2931
  %2947 = vmatpush.bf16.msra.mxu0 %v2930
  %2948 = vmatpush.bf16.msra.mxu0 %v2929
  %2949 = vmatpush.bf16.msra.mxu0 %v2928
  %2950 = vmatpush.bf16.msra.mxu0 %v2927
  %2951 = vmatmul.bf16.gmra.mxu0 %v2893
  %v2952 = vpop.f32.mrf.mxu0
  %v2953 = vadd.f32 0.0, %v2952
  %v2954 = vpop.f32.mrf.mxu0
  %v2955 = vadd.f32 0.0, %v2954
  %2956 = vdwg.mxu0
  %v2957 = vadd.f32 %v2870, %v2953
  %v2958 = vadd.f32 %v2871, %v2955
  %s2959 = scalar_lea.vmem %s3, 832
  %v2960 = vld [vmem:[%s2959] sm:$0xf]
  %v2961 = vld [vmem:[%s2959 + $0x4] sm:$0xf]
  %v2962 = vld [vmem:[%s2959 + $0x8] sm:$0xf]
  %v2963 = vld [vmem:[%s2959 + $0xc] sm:$0xf]
  %v2964 = vld [vmem:[%s2959 + $0x10] sm:$0xf]
  %v2965 = vld [vmem:[%s2959 + $0x14] sm:$0xf]
  %v2966 = vld [vmem:[%s2959 + $0x18] sm:$0xf]
  %v2967 = vld [vmem:[%s2959 + $0x1c] sm:$0xf]
  %v2968 = vld [vmem:[%s2959 + $0x20] sm:$0xf]
  %v2969 = vld [vmem:[%s2959 + $0x24] sm:$0xf]
  %v2970 = vld [vmem:[%s2959 + $0x28] sm:$0xf]
  %v2971 = vld [vmem:[%s2959 + $0x2c] sm:$0xf]
  %v2972 = vld [vmem:[%s2959 + $0x30] sm:$0xf]
  %v2973 = vld [vmem:[%s2959 + $0x34] sm:$0xf]
  %v2974 = vld [vmem:[%s2959 + $0x38] sm:$0xf]
  %v2975 = vld [vmem:[%s2959 + $0x3c] sm:$0xf]
  %v2978 = vunpack.c.l.b16 %v1827
  %v2979 = vunpack.c.l.b16 %v1828
  %v2980 = vpack.c.b16 %v2979, %v2978
  %v2998 = vunpack.c.l.b16 %v2960
  %v2999 = vunpack.c.l.b16 %v2961
  %v3000 = vunpack.c.l.b16 %v2962
  %v3001 = vunpack.c.l.b16 %v2963
  %v3002 = vunpack.c.l.b16 %v2964
  %v3003 = vunpack.c.l.b16 %v2965
  %v3004 = vunpack.c.l.b16 %v2966
  %v3005 = vunpack.c.l.b16 %v2967
  %v3006 = vunpack.c.l.b16 %v2968
  %v3007 = vunpack.c.l.b16 %v2969
  %v3008 = vunpack.c.l.b16 %v2970
  %v3009 = vunpack.c.l.b16 %v2971
  %v3010 = vunpack.c.l.b16 %v2972
  %v3011 = vunpack.c.l.b16 %v2973
  %v3012 = vunpack.c.l.b16 %v2974
  %v3013 = vunpack.c.l.b16 %v2975
  %v3014 = vpack.c.b16 %v2999, %v2998
  %v3015 = vpack.c.b16 %v3001, %v3000
  %v3016 = vpack.c.b16 %v3003, %v3002
  %v3017 = vpack.c.b16 %v3005, %v3004
  %v3018 = vpack.c.b16 %v3007, %v3006
  %v3019 = vpack.c.b16 %v3009, %v3008
  %v3020 = vpack.c.b16 %v3011, %v3010
  %v3021 = vpack.c.b16 %v3013, %v3012
  %3030 = vmatpush.bf16.msra.mxu0 %v3021
  %3031 = vmatpush.bf16.msra.mxu0 %v3020
  %3032 = vmatpush.bf16.msra.mxu0 %v3019
  %3033 = vmatpush.bf16.msra.mxu0 %v3018
  %3034 = vmatpush.bf16.msra.mxu0 %v3017
  %3035 = vmatpush.bf16.msra.mxu0 %v3016
  %3036 = vmatpush.bf16.msra.mxu0 %v3015
  %3037 = vmatpush.bf16.msra.mxu0 %v3014
  %3038 = vmatmul.bf16.gmra.mxu0 %v2980
  %v3039 = vpop.f32.mrf.mxu0
  %v3040 = vadd.f32 0.0, %v3039
  %v3041 = vpop.f32.mrf.mxu0
  %v3042 = vadd.f32 0.0, %v3041
  %3043 = vdwg.mxu0
  %v3044 = vadd.f32 %v2957, %v3040
  %v3045 = vadd.f32 %v2958, %v3042
  %s3046 = scalar_lea.vmem %s3, 896
  %v3047 = vld [vmem:[%s3046] sm:$0xf]
  %v3048 = vld [vmem:[%s3046 + $0x4] sm:$0xf]
  %v3049 = vld [vmem:[%s3046 + $0x8] sm:$0xf]
  %v3050 = vld [vmem:[%s3046 + $0xc] sm:$0xf]
  %v3051 = vld [vmem:[%s3046 + $0x10] sm:$0xf]
  %v3052 = vld [vmem:[%s3046 + $0x14] sm:$0xf]
  %v3053 = vld [vmem:[%s3046 + $0x18] sm:$0xf]
  %v3054 = vld [vmem:[%s3046 + $0x1c] sm:$0xf]
  %v3055 = vld [vmem:[%s3046 + $0x20] sm:$0xf]
  %v3056 = vld [vmem:[%s3046 + $0x24] sm:$0xf]
  %v3057 = vld [vmem:[%s3046 + $0x28] sm:$0xf]
  %v3058 = vld [vmem:[%s3046 + $0x2c] sm:$0xf]
  %v3059 = vld [vmem:[%s3046 + $0x30] sm:$0xf]
  %v3060 = vld [vmem:[%s3046 + $0x34] sm:$0xf]
  %v3061 = vld [vmem:[%s3046 + $0x38] sm:$0xf]
  %v3062 = vld [vmem:[%s3046 + $0x3c] sm:$0xf]
  %v3065 = vunpack.c.l.b16 %v1829
  %v3066 = vunpack.c.l.b16 %v1830
  %v3067 = vpack.c.b16 %v3066, %v3065
  %v3085 = vunpack.c.l.b16 %v3047
  %v3086 = vunpack.c.l.b16 %v3048
  %v3087 = vunpack.c.l.b16 %v3049
  %v3088 = vunpack.c.l.b16 %v3050
  %v3089 = vunpack.c.l.b16 %v3051
  %v3090 = vunpack.c.l.b16 %v3052
  %v3091 = vunpack.c.l.b16 %v3053
  %v3092 = vunpack.c.l.b16 %v3054
  %v3093 = vunpack.c.l.b16 %v3055
  %v3094 = vunpack.c.l.b16 %v3056
  %v3095 = vunpack.c.l.b16 %v3057
  %v3096 = vunpack.c.l.b16 %v3058
  %v3097 = vunpack.c.l.b16 %v3059
  %v3098 = vunpack.c.l.b16 %v3060
  %v3099 = vunpack.c.l.b16 %v3061
  %v3100 = vunpack.c.l.b16 %v3062
  %v3101 = vpack.c.b16 %v3086, %v3085
  %v3102 = vpack.c.b16 %v3088, %v3087
  %v3103 = vpack.c.b16 %v3090, %v3089
  %v3104 = vpack.c.b16 %v3092, %v3091
  %v3105 = vpack.c.b16 %v3094, %v3093
  %v3106 = vpack.c.b16 %v3096, %v3095
  %v3107 = vpack.c.b16 %v3098, %v3097
  %v3108 = vpack.c.b16 %v3100, %v3099
  %3117 = vmatpush.bf16.msra.mxu0 %v3108
  %3118 = vmatpush.bf16.msra.mxu0 %v3107
  %3119 = vmatpush.bf16.msra.mxu0 %v3106
  %3120 = vmatpush.bf16.msra.mxu0 %v3105
  %3121 = vmatpush.bf16.msra.mxu0 %v3104
  %3122 = vmatpush.bf16.msra.mxu0 %v3103
  %3123 = vmatpush.bf16.msra.mxu0 %v3102
  %3124 = vmatpush.bf16.msra.mxu0 %v3101
  %3125 = vmatmul.bf16.gmra.mxu0 %v3067
  %v3126 = vpop.f32.mrf.mxu0
  %v3127 = vadd.f32 0.0, %v3126
  %v3128 = vpop.f32.mrf.mxu0
  %v3129 = vadd.f32 0.0, %v3128
  %3130 = vdwg.mxu0
  %v3131 = vadd.f32 %v3044, %v3127
  %v3132 = vadd.f32 %v3045, %v3129
  %s3133 = scalar_lea.vmem %s3, 960
  %v3134 = vld [vmem:[%s3133] sm:$0xf]
  %v3135 = vld [vmem:[%s3133 + $0x4] sm:$0xf]
  %v3136 = vld [vmem:[%s3133 + $0x8] sm:$0xf]
  %v3137 = vld [vmem:[%s3133 + $0xc] sm:$0xf]
  %v3138 = vld [vmem:[%s3133 + $0x10] sm:$0xf]
  %v3139 = vld [vmem:[%s3133 + $0x14] sm:$0xf]
  %v3140 = vld [vmem:[%s3133 + $0x18] sm:$0xf]
  %v3141 = vld [vmem:[%s3133 + $0x1c] sm:$0xf]
  %v3142 = vld [vmem:[%s3133 + $0x20] sm:$0xf]
  %v3143 = vld [vmem:[%s3133 + $0x24] sm:$0xf]
  %v3144 = vld [vmem:[%s3133 + $0x28] sm:$0xf]
  %v3145 = vld [vmem:[%s3133 + $0x2c] sm:$0xf]
  %v3146 = vld [vmem:[%s3133 + $0x30] sm:$0xf]
  %v3147 = vld [vmem:[%s3133 + $0x34] sm:$0xf]
  %v3148 = vld [vmem:[%s3133 + $0x38] sm:$0xf]
  %v3149 = vld [vmem:[%s3133 + $0x3c] sm:$0xf]
  %v3152 = vunpack.c.l.b16 %v1831
  %v3153 = vunpack.c.l.b16 %v1832
  %v3154 = vpack.c.b16 %v3153, %v3152
  %v3172 = vunpack.c.l.b16 %v3134
  %v3173 = vunpack.c.l.b16 %v3135
  %v3174 = vunpack.c.l.b16 %v3136
  %v3175 = vunpack.c.l.b16 %v3137
  %v3176 = vunpack.c.l.b16 %v3138
  %v3177 = vunpack.c.l.b16 %v3139
  %v3178 = vunpack.c.l.b16 %v3140
  %v3179 = vunpack.c.l.b16 %v3141
  %v3180 = vunpack.c.l.b16 %v3142
  %v3181 = vunpack.c.l.b16 %v3143
  %v3182 = vunpack.c.l.b16 %v3144
  %v3183 = vunpack.c.l.b16 %v3145
  %v3184 = vunpack.c.l.b16 %v3146
  %v3185 = vunpack.c.l.b16 %v3147
  %v3186 = vunpack.c.l.b16 %v3148
  %v3187 = vunpack.c.l.b16 %v3149
  %v3188 = vpack.c.b16 %v3173, %v3172
  %v3189 = vpack.c.b16 %v3175, %v3174
  %v3190 = vpack.c.b16 %v3177, %v3176
  %v3191 = vpack.c.b16 %v3179, %v3178
  %v3192 = vpack.c.b16 %v3181, %v3180
  %v3193 = vpack.c.b16 %v3183, %v3182
  %v3194 = vpack.c.b16 %v3185, %v3184
  %v3195 = vpack.c.b16 %v3187, %v3186
  %3204 = vmatpush.bf16.msra.mxu0 %v3195
  %3205 = vmatpush.bf16.msra.mxu0 %v3194
  %3206 = vmatpush.bf16.msra.mxu0 %v3193
  %3207 = vmatpush.bf16.msra.mxu0 %v3192
  %3208 = vmatpush.bf16.msra.mxu0 %v3191
  %3209 = vmatpush.bf16.msra.mxu0 %v3190
  %3210 = vmatpush.bf16.msra.mxu0 %v3189
  %3211 = vmatpush.bf16.msra.mxu0 %v3188
  %3212 = vmatmul.bf16.gmra.mxu0 %v3154
  %v3213 = vpop.f32.mrf.mxu0
  %v3214 = vadd.f32 0.0, %v3213
  %v3215 = vpop.f32.mrf.mxu0
  %v3216 = vadd.f32 0.0, %v3215
  %3217 = vdwg.mxu0
  %v3218 = vadd.f32 %v3131, %v3214
  %v3219 = vadd.f32 %v3132, %v3216
  %v3220 = vld [vmem:[%s4] sm:$0x1]
  %v3222 = vperm.slane %v3220, 0
  %v3224 = vadd.f32 %v3218, %v3222
  %v3225 = vadd.f32 %v3219, %v3222
  %v3226 = vmax.f32 %v3224, 0.0
  %v3227 = vmax.f32 %v3225, 0.0
  %v3228 = vpack.c.bf16 %v3227, %v3226
  %v3229 = vld [vmem:[%s5] sm:$0xf]
  %v3230 = vld [vmem:[%s5 + $0x4] sm:$0xf]
  %v3231 = vld [vmem:[%s5 + $0x8] sm:$0xf]
  %v3232 = vld [vmem:[%s5 + $0xc] sm:$0xf]
  %v3233 = vld [vmem:[%s5 + $0x10] sm:$0xf]
  %v3234 = vld [vmem:[%s5 + $0x14] sm:$0xf]
  %v3235 = vld [vmem:[%s5 + $0x18] sm:$0xf]
  %v3236 = vld [vmem:[%s5 + $0x1c] sm:$0xf]
  %v3237 = vld [vmem:[%s5 + $0x20] sm:$0xf]
  %v3238 = vld [vmem:[%s5 + $0x24] sm:$0xf]
  %v3239 = vld [vmem:[%s5 + $0x28] sm:$0xf]
  %v3240 = vld [vmem:[%s5 + $0x2c] sm:$0xf]
  %v3241 = vld [vmem:[%s5 + $0x30] sm:$0xf]
  %v3242 = vld [vmem:[%s5 + $0x34] sm:$0xf]
  %v3243 = vld [vmem:[%s5 + $0x38] sm:$0xf]
  %v3244 = vld [vmem:[%s5 + $0x3c] sm:$0xf]
  %v3245 = vld [vmem:[%s6] sm:$0x1]
  %v3247 = vperm.slane %v3245, 0
  %v3265 = vunpack.c.l.b16 %v3229
  %v3266 = vunpack.c.l.b16 %v3230
  %v3267 = vunpack.c.l.b16 %v3231
  %v3268 = vunpack.c.l.b16 %v3232
  %v3269 = vunpack.c.l.b16 %v3233
  %v3270 = vunpack.c.l.b16 %v3234
  %v3271 = vunpack.c.l.b16 %v3235
  %v3272 = vunpack.c.l.b16 %v3236
  %v3273 = vunpack.c.l.b16 %v3237
  %v3274 = vunpack.c.l.b16 %v3238
  %v3275 = vunpack.c.l.b16 %v3239
  %v3276 = vunpack.c.l.b16 %v3240
  %v3277 = vunpack.c.l.b16 %v3241
  %v3278 = vunpack.c.l.b16 %v3242
  %v3279 = vunpack.c.l.b16 %v3243
  %v3280 = vunpack.c.l.b16 %v3244
  %v3281 = vpack.c.b16 %v3266, %v3265
  %v3282 = vpack.c.b16 %v3268, %v3267
  %v3283 = vpack.c.b16 %v3270, %v3269
  %v3284 = vpack.c.b16 %v3272, %v3271
  %v3285 = vpack.c.b16 %v3274, %v3273
  %v3286 = vpack.c.b16 %v3276, %v3275
  %v3287 = vpack.c.b16 %v3278, %v3277
  %v3288 = vpack.c.b16 %v3280, %v3279
  %3297 = vmatpush.bf16.msra.mxu0 %v3288
  %3298 = vmatpush.bf16.msra.mxu0 %v3287
  %3299 = vmatpush.bf16.msra.mxu0 %v3286
  %3300 = vmatpush.bf16.msra.mxu0 %v3285
  %3301 = vmatpush.bf16.msra.mxu0 %v3284
  %3302 = vmatpush.bf16.msra.mxu0 %v3283
  %3303 = vmatpush.bf16.msra.mxu0 %v3282
  %3304 = vmatpush.bf16.msra.mxu0 %v3281
  %3305 = vmatmul.bf16.gmra.mxu0 %v3228
  %v3306 = vpop.f32.mrf.mxu0
  %v3307 = vadd.f32 %v3247, %v3306
  %v3308 = vpop.f32.mrf.mxu0
  %v3309 = vadd.f32 %v3247, %v3308
  %3310 = vdwg.mxu0
  %v3311 = vmax.f32 %v3307, 0.0
  %v3312 = vmax.f32 %v3309, 0.0
  %v3313 = vlaneseq
  %v3314 = vand.u32 %v3313, 127
  %vm3315 = vcmp.lt.s32.totalorder %v3314, 10
  %v3316 = vsel %vm3315, %v3311, -1e+30
  %v3317 = vsel %vm3315, %v3312, -1e+30
  %3318 = vmax.xlane.f32.xlu0 %v3316
  %v3319 = vpop.xlane.xlu0 %3318
  %3320 = vmax.xlane.f32.xlu0 %v3317
  %v3321 = vpop.xlane.xlu0 %3320
  %v3322 = vsub.f32 %v3316, %v3319
  %v3323 = vsub.f32 %v3317, %v3321
  %v3324 = vmul.f32 %v3322, 1.442695
  %v3325 = vpow.pop %v3324
  %v3326 = vmul.f32 %v3323, 1.442695
  %v3327 = vpow.pop %v3326
  %3328 = vadd.xlane.f32.xlu0 %v3325
  %v3329 = vpop.xlane.xlu0 %3328
  %3330 = vadd.xlane.f32.xlu0 %v3327
  %v3331 = vpop.xlane.xlu0 %3330
  %v3332 = vlog2.pop %v3329
  %v3333 = vmul.f32 %v3332, 0.6931472
  %v3334 = vlog2.pop %v3331
  %v3335 = vmul.f32 %v3334, 0.6931472
  %v3336 = vsub.f32 %v3322, %v3333
  %v3337 = vsub.f32 %v3323, %v3335
  %3338 = vst [vmem:[%s7] sm:$0xff] %v3336
  %3339 = vst [vmem:[%s7 + $0x8] sm:$0xff] %v3337
  // Predicated region
  $region30: #{net_forward.3} parent=0 // pred_check
    _
  $region31: #{net_forward.3} parent=0 // pred_check_branch
    %3341 = sbr.rel (0) target = $region33
  $region32: #{net_forward.3} parent=0 // pred_region
    _
  $region33: #{net_forward.3} parent=0 // pred_fallthru
    _
  // Predicated region
  $region34: #{net_forward.3} parent=0 // pred_check
    _
  $region35: #{net_forward.3} parent=0 // pred_check_branch
    %3343 = sbr.rel (0) target = $region37
  $region36: #{net_forward.3} parent=0 // pred_region
    _
  $region37: #{net_forward.3} parent=0 // pred_fallthru
    _

</llo_original>
